<compile_context>
chip_gen: v7x
topology: tpu7x:2x2x1
jax: 0.10.0
libtpu: 0.0.40
codegen_flags: <defaults>
</compile_context>

<pallas_src>
import jax
import jax.numpy as jnp
from jax.experimental import pallas as pl
from jax.experimental.pallas import tpu as pltpu

# Layer widths of the original autoencoder (encoder then decoder).
LAYER_DIMS = [28 * 28, 128, 64, 12, 2, 12, 64, 128, 28 * 28]
# Activation after each original Linear: ReLU for hidden layers, none after
# the encoder bottleneck (layer 3), Tanh after the final decoder layer.
ACTS = ["relu", "relu", "relu", None, "relu", "relu", "relu", "tanh"]

LANE = 128
PADDED_IO = ((28 * 28 + LANE - 1) // LANE) * LANE  # 896 = 7 * 128
# Activations of the fused 7-layer kernel network (layers 3 & 4 merged; the
# merged layer keeps layer 4's ReLU since there is no activation in between).
FUSED_ACTS = ("relu", "relu", "relu", "relu", "relu", "relu", "tanh")
# Default batch tile: multiple of the MXU row dim (256 on v6e/v7x, 2x128 on
# v5e). Double-buffered 896-wide tiles at this size use < 4 MiB of VMEM.
DEFAULT_TILE_M = 256


def _round_up(x, m):
    return ((x + m - 1) // m) * m


def autoencoder_kernel(x_ref, *refs):
    """Fused 7-layer MLP. refs = (w0, b0, ..., w6, b6, out_ref)."""
    out_ref = refs[-1]
    param_refs = refs[:-1]

    h = x_ref[...]  # (tile_m, 896) bf16
    for li, act in enumerate(FUSED_ACTS):
        w = param_refs[2 * li][...]
        b = param_refs[2 * li + 1][...]
        # bf16 x bf16 -> f32 on the big layers, f32 x f32 on the tiny ones.
        h = jnp.dot(h.astype(w.dtype), w, preferred_element_type=jnp.float32)
        h = h + b
        if act == "relu":
            h = jnp.maximum(h, 0.0)
        else:  # tanh on the final layer (EUP)
            h = jnp.tanh(h)
    out_ref[...] = h.astype(out_ref.dtype)


def init_params(key):
    """Deterministic init matching PyTorch Linear default bounds
    (uniform(-1/sqrt(fan_in), 1/sqrt(fan_in)) for weight and bias).
    Weights are stored pre-transposed as (in_features, out_features)."""
    params = []
    for li in range(len(LAYER_DIMS) - 1):
        fan_in, fan_out = LAYER_DIMS[li], LAYER_DIMS[li + 1]
        key, kw, kb = jax.random.split(key, 3)
        bound = 1.0 / jnp.sqrt(jnp.float32(fan_in))
        w = jax.random.uniform(kw, (fan_in, fan_out), jnp.float32, -bound, bound)
        b = jax.random.uniform(kb, (1, fan_out), jnp.float32, -bound, bound)
        params.append((w, b))
    return params


def prepare_kernel_params(params):
    """Fuse layers 3&4, pad the 784-wide dims to 896, cast big weights to
    bf16. Returns a list of (w, b) for the 7-layer fused kernel network."""
    ws = [w for w, _ in params]
    bs = [b for _, b in params]

    # Fuse 12->2 and 2->12 (no nonlinearity in between):
    #   h @ W3 + b3) @ W4 + b4 == h @ (W3 @ W4) + (b3 @ W4 + b4)
    w34 = ws[3] @ ws[4]
    b34 = bs[3] @ ws[4] + bs[4]
    ws = ws[:3] + [w34] + ws[5:]
    bs = bs[:3] + [b34] + bs[5:]

    pad = PADDED_IO - LAYER_DIMS[0]  # 112
    # Layer 0: pad the input-feature (K) dim with zero rows -> lane-dense x.
    ws[0] = jnp.pad(ws[0], ((0, pad), (0, 0)))
    # Last layer: pad output features with zero cols -> lane-dense store.
    ws[-1] = jnp.pad(ws[-1], ((0, 0), (0, pad)))
    bs[-1] = jnp.pad(bs[-1], ((0, 0), (0, pad)))

    # bf16 for the two 784-wide matmuls (dominate FLOPs and DMA bytes).
    ws[0] = ws[0].astype(jnp.bfloat16)
    ws[-1] = ws[-1].astype(jnp.bfloat16)
    return list(zip(ws, bs))


def autoencoder_forward(x, params, tile_m=DEFAULT_TILE_M):
    batch, in_dim = x.shape
    assert in_dim == LAYER_DIMS[0]

    kparams = prepare_kernel_params(params)

    # Batch tiling: pad the batch to a multiple of tile_m (no ragged tiles).
    tile_m = min(tile_m, _round_up(batch, 8))
    padded_batch = _round_up(batch, tile_m)
    grid = (padded_batch // tile_m,)

    # Lane-dense bf16 input: pad batch rows and feature dim with zeros.
    xp = jnp.pad(x, ((0, padded_batch - batch), (0, PADDED_IO - in_dim)))
    xp = xp.astype(jnp.bfloat16)

    flat_params = []
    in_specs = [pl.BlockSpec((tile_m, PADDED_IO), lambda i: (i, 0))]
    for w, b in kparams:
        flat_params.append(w)
        flat_params.append(b)
        # Constant index_map -> params stay resident in VMEM across the grid.
        in_specs.append(pl.BlockSpec(w.shape, lambda i: (0, 0)))
        in_specs.append(pl.BlockSpec(b.shape, lambda i: (0, 0)))

    flops = 2 * padded_batch * sum(int(w.shape[0]) * int(w.shape[1])
                                   for w, _ in kparams)
    bytes_accessed = (
        int(xp.size) * xp.dtype.itemsize
        + padded_batch * PADDED_IO * 4
        + sum(int(w.size) * w.dtype.itemsize + int(b.size) * b.dtype.itemsize
              for w, b in kparams))
    cost = pl.CostEstimate(
        flops=flops,
        transcendentals=padded_batch * PADDED_IO,  # final tanh
        bytes_accessed=bytes_accessed)

    out = pl.pallas_call(
        autoencoder_kernel,
        out_shape=jax.ShapeDtypeStruct((padded_batch, PADDED_IO), jnp.float32),
        grid=grid,
        in_specs=in_specs,
        out_specs=pl.BlockSpec((tile_m, PADDED_IO), lambda i: (i, 0)),
        compiler_params=pltpu.CompilerParams(
            # Independent batch tiles -> shard across both TCs on v7x.
            dimension_semantics=("parallel",),
        ),
        cost_estimate=cost,
    )(xp, *flat_params)

    # Strip the batch / lane padding.
    return out[:batch, :LAYER_DIMS[-1]]


def reference_forward(x, params, mixed=False):
    """Plain-JAX reference of the PyTorch forward. mixed=True mirrors the
    kernel's bf16 casts on layers 0 and 7; mixed=False is pure float32."""
    h = x
    n = len(params)
    for li, (w, b) in enumerate(params):
        if mixed and li in (0, n - 1):
            h = jnp.dot(h.astype(jnp.bfloat16), w.astype(jnp.bfloat16),
                        preferred_element_type=jnp.float32) + b
        else:
            h = jnp.dot(h, w) + b
        if ACTS[li] == "relu":
            h = jnp.maximum(h, 0.0)
        elif ACTS[li] == "tanh":
            h = jnp.tanh(h)
    return h


if __name__ == "__main__":
    key = jax.random.PRNGKey(0)
    key, kx = jax.random.split(key)

    # Batch is a multiple of the 256-row MXU tile and exercises a 2-step grid.
    batch = 512
    x = jax.random.normal(kx, (batch, 28 * 28), dtype=jnp.float32)
    params = init_params(key)

    out = jax.block_until_ready(autoencoder_forward(x, params))
    assert out.shape == (batch, 28 * 28)

    # Tight check against a reference using the same bf16 mixed precision.
    ref_mixed = reference_forward(x, params, mixed=True)
    assert jnp.allclose(out, ref_mixed, atol=1e-3, rtol=1e-3), (
        float(jnp.max(jnp.abs(out - ref_mixed))))
    # Looser check against the exact float32 (PyTorch-semantics) forward.
    ref_f32 = reference_forward(x, params, mixed=False)
    assert jnp.allclose(out, ref_f32, atol=2e-2, rtol=0.0), (
        float(jnp.max(jnp.abs(out - ref_f32))))

    print("KERNEL_OK")
</pallas_src>

<mosaic_0001>
module attributes {stable_mosaic.version = 11 : i64} {
  func.func @autoencoder_kernel(%arg0: i32, %arg1: memref<256x896xbf16, #tpu.memory_space<vmem>>, %arg2: memref<896x128xbf16, #tpu.memory_space<vmem>>, %arg3: memref<1x128xf32, #tpu.memory_space<vmem>>, %arg4: memref<128x64xf32, #tpu.memory_space<vmem>>, %arg5: memref<1x64xf32, #tpu.memory_space<vmem>>, %arg6: memref<64x12xf32, #tpu.memory_space<vmem>>, %arg7: memref<1x12xf32, #tpu.memory_space<vmem>>, %arg8: memref<12x12xf32, #tpu.memory_space<vmem>>, %arg9: memref<1x12xf32, #tpu.memory_space<vmem>>, %arg10: memref<12x64xf32, #tpu.memory_space<vmem>>, %arg11: memref<1x64xf32, #tpu.memory_space<vmem>>, %arg12: memref<64x128xf32, #tpu.memory_space<vmem>>, %arg13: memref<1x128xf32, #tpu.memory_space<vmem>>, %arg14: memref<128x896xbf16, #tpu.memory_space<vmem>>, %arg15: memref<1x896xf32, #tpu.memory_space<vmem>>, %arg16: memref<256x896xf32, #tpu.memory_space<vmem>>) attributes {dimension_semantics = [#tpu.dimension_semantics<parallel>], iteration_bounds = array<i64: 2>, scalar_prefetch = 0 : i64, scratch_operands = 0 : i64, tpu.core_type = #tpu.core_type<tc>, window_params = [{transform_indices = @transform_0, window_bounds = array<i64: 256, 896>}, {pipeline_mode = #tpu.pipeline_mode<synchronous>, transform_indices = @transform_1, window_bounds = array<i64: 896, 128>}, {pipeline_mode = #tpu.pipeline_mode<synchronous>, transform_indices = @transform_2, window_bounds = array<i64: 1, 128>}, {pipeline_mode = #tpu.pipeline_mode<synchronous>, transform_indices = @transform_3, window_bounds = array<i64: 128, 64>}, {pipeline_mode = #tpu.pipeline_mode<synchronous>, transform_indices = @transform_4, window_bounds = array<i64: 1, 64>}, {pipeline_mode = #tpu.pipeline_mode<synchronous>, transform_indices = @transform_5, window_bounds = array<i64: 64, 12>}, {pipeline_mode = #tpu.pipeline_mode<synchronous>, transform_indices = @transform_6, window_bounds = array<i64: 1, 12>}, {pipeline_mode = #tpu.pipeline_mode<synchronous>, transform_indices = @transform_7, window_bounds = array<i64: 12, 12>}, {pipeline_mode = #tpu.pipeline_mode<synchronous>, transform_indices = @transform_8, window_bounds = array<i64: 1, 12>}, {pipeline_mode = #tpu.pipeline_mode<synchronous>, transform_indices = @transform_9, window_bounds = array<i64: 12, 64>}, {pipeline_mode = #tpu.pipeline_mode<synchronous>, transform_indices = @transform_10, window_bounds = array<i64: 1, 64>}, {pipeline_mode = #tpu.pipeline_mode<synchronous>, transform_indices = @transform_11, window_bounds = array<i64: 64, 128>}, {pipeline_mode = #tpu.pipeline_mode<synchronous>, transform_indices = @transform_12, window_bounds = array<i64: 1, 128>}, {pipeline_mode = #tpu.pipeline_mode<synchronous>, transform_indices = @transform_13, window_bounds = array<i64: 128, 896>}, {pipeline_mode = #tpu.pipeline_mode<synchronous>, transform_indices = @transform_14, window_bounds = array<i64: 1, 896>}, {transform_indices = @transform_15, window_bounds = array<i64: 256, 896>}]} {
    %c0 = arith.constant 0 : index
    %c0_0 = arith.constant 0 : index
    %0 = vector.load %arg1[%c0, %c0_0] : memref<256x896xbf16, #tpu.memory_space<vmem>>, vector<256x896xbf16>
    %c0_1 = arith.constant 0 : index
    %c0_2 = arith.constant 0 : index
    %1 = vector.load %arg2[%c0_1, %c0_2] : memref<896x128xbf16, #tpu.memory_space<vmem>>, vector<896x128xbf16>
    %c0_3 = arith.constant 0 : index
    %c0_4 = arith.constant 0 : index
    %2 = vector.load %arg3[%c0_3, %c0_4] : memref<1x128xf32, #tpu.memory_space<vmem>>, vector<1x128xf32>
    %cst = arith.constant dense<0.000000e+00> : vector<256x128xf32>
    %3 = tpu.matmul %0, %1, %cst {dimension_numbers = #tpu.dot_dimension_numbers<[1], [0], [0], [1], [0, 0, 1, 1], [], []>} : vector<256x896xbf16>, vector<896x128xbf16>, vector<256x128xf32> -> vector<256x128xf32>
    %4 = vector.broadcast %2 : vector<1x128xf32> to vector<256x128xf32>
    %5 = arith.addf %3, %4 : vector<256x128xf32>
    %cst_5 = arith.constant 0.000000e+00 : f32
    %6 = vector.broadcast %cst_5 : f32 to vector<256x128xf32>
    %7 = arith.maximumf %5, %6 : vector<256x128xf32>
    %c0_6 = arith.constant 0 : index
    %c0_7 = arith.constant 0 : index
    %8 = vector.load %arg4[%c0_6, %c0_7] : memref<128x64xf32, #tpu.memory_space<vmem>>, vector<128x64xf32>
    %c0_8 = arith.constant 0 : index
    %c0_9 = arith.constant 0 : index
    %9 = vector.load %arg5[%c0_8, %c0_9] : memref<1x64xf32, #tpu.memory_space<vmem>>, vector<1x64xf32>
    %cst_10 = arith.constant dense<0.000000e+00> : vector<256x64xf32>
    %10 = tpu.matmul %7, %8, %cst_10 {dimension_numbers = #tpu.dot_dimension_numbers<[1], [0], [0], [1], [0, 0, 1, 1], [], []>} : vector<256x128xf32>, vector<128x64xf32>, vector<256x64xf32> -> vector<256x64xf32>
    %11 = vector.broadcast %9 : vector<1x64xf32> to vector<256x64xf32>
    %12 = arith.addf %10, %11 : vector<256x64xf32>
    %cst_11 = arith.constant 0.000000e+00 : f32
    %13 = vector.broadcast %cst_11 : f32 to vector<256x64xf32>
    %14 = arith.maximumf %12, %13 : vector<256x64xf32>
    %c0_12 = arith.constant 0 : index
    %c0_13 = arith.constant 0 : index
    %15 = vector.load %arg6[%c0_12, %c0_13] : memref<64x12xf32, #tpu.memory_space<vmem>>, vector<64x12xf32>
    %c0_14 = arith.constant 0 : index
    %c0_15 = arith.constant 0 : index
    %16 = vector.load %arg7[%c0_14, %c0_15] : memref<1x12xf32, #tpu.memory_space<vmem>>, vector<1x12xf32>
    %cst_16 = arith.constant dense<0.000000e+00> : vector<256x12xf32>
    %17 = tpu.matmul %14, %15, %cst_16 {dimension_numbers = #tpu.dot_dimension_numbers<[1], [0], [0], [1], [0, 0, 1, 1], [], []>} : vector<256x64xf32>, vector<64x12xf32>, vector<256x12xf32> -> vector<256x12xf32>
    %18 = vector.broadcast %16 : vector<1x12xf32> to vector<256x12xf32>
    %19 = arith.addf %17, %18 : vector<256x12xf32>
    %cst_17 = arith.constant 0.000000e+00 : f32
    %20 = vector.broadcast %cst_17 : f32 to vector<256x12xf32>
    %21 = arith.maximumf %19, %20 : vector<256x12xf32>
    %c0_18 = arith.constant 0 : index
    %c0_19 = arith.constant 0 : index
    %22 = vector.load %arg8[%c0_18, %c0_19] : memref<12x12xf32, #tpu.memory_space<vmem>>, vector<12x12xf32>
    %c0_20 = arith.constant 0 : index
    %c0_21 = arith.constant 0 : index
    %23 = vector.load %arg9[%c0_20, %c0_21] : memref<1x12xf32, #tpu.memory_space<vmem>>, vector<1x12xf32>
    %cst_22 = arith.constant dense<0.000000e+00> : vector<256x12xf32>
    %24 = tpu.matmul %21, %22, %cst_22 {dimension_numbers = #tpu.dot_dimension_numbers<[1], [0], [0], [1], [0, 0, 1, 1], [], []>} : vector<256x12xf32>, vector<12x12xf32>, vector<256x12xf32> -> vector<256x12xf32>
    %25 = vector.broadcast %23 : vector<1x12xf32> to vector<256x12xf32>
    %26 = arith.addf %24, %25 : vector<256x12xf32>
    %cst_23 = arith.constant 0.000000e+00 : f32
    %27 = vector.broadcast %cst_23 : f32 to vector<256x12xf32>
    %28 = arith.maximumf %26, %27 : vector<256x12xf32>
    %c0_24 = arith.constant 0 : index
    %c0_25 = arith.constant 0 : index
    %29 = vector.load %arg10[%c0_24, %c0_25] : memref<12x64xf32, #tpu.memory_space<vmem>>, vector<12x64xf32>
    %c0_26 = arith.constant 0 : index
    %c0_27 = arith.constant 0 : index
    %30 = vector.load %arg11[%c0_26, %c0_27] : memref<1x64xf32, #tpu.memory_space<vmem>>, vector<1x64xf32>
    %cst_28 = arith.constant dense<0.000000e+00> : vector<256x64xf32>
    %31 = tpu.matmul %28, %29, %cst_28 {dimension_numbers = #tpu.dot_dimension_numbers<[1], [0], [0], [1], [0, 0, 1, 1], [], []>} : vector<256x12xf32>, vector<12x64xf32>, vector<256x64xf32> -> vector<256x64xf32>
    %32 = vector.broadcast %30 : vector<1x64xf32> to vector<256x64xf32>
    %33 = arith.addf %31, %32 : vector<256x64xf32>
    %cst_29 = arith.constant 0.000000e+00 : f32
    %34 = vector.broadcast %cst_29 : f32 to vector<256x64xf32>
    %35 = arith.maximumf %33, %34 : vector<256x64xf32>
    %c0_30 = arith.constant 0 : index
    %c0_31 = arith.constant 0 : index
    %36 = vector.load %arg12[%c0_30, %c0_31] : memref<64x128xf32, #tpu.memory_space<vmem>>, vector<64x128xf32>
    %c0_32 = arith.constant 0 : index
    %c0_33 = arith.constant 0 : index
    %37 = vector.load %arg13[%c0_32, %c0_33] : memref<1x128xf32, #tpu.memory_space<vmem>>, vector<1x128xf32>
    %cst_34 = arith.constant dense<0.000000e+00> : vector<256x128xf32>
    %38 = tpu.matmul %35, %36, %cst_34 {dimension_numbers = #tpu.dot_dimension_numbers<[1], [0], [0], [1], [0, 0, 1, 1], [], []>} : vector<256x64xf32>, vector<64x128xf32>, vector<256x128xf32> -> vector<256x128xf32>
    %39 = vector.broadcast %37 : vector<1x128xf32> to vector<256x128xf32>
    %40 = arith.addf %38, %39 : vector<256x128xf32>
    %cst_35 = arith.constant 0.000000e+00 : f32
    %41 = vector.broadcast %cst_35 : f32 to vector<256x128xf32>
    %42 = arith.maximumf %40, %41 : vector<256x128xf32>
    %c0_36 = arith.constant 0 : index
    %c0_37 = arith.constant 0 : index
    %43 = vector.load %arg14[%c0_36, %c0_37] : memref<128x896xbf16, #tpu.memory_space<vmem>>, vector<128x896xbf16>
    %c0_38 = arith.constant 0 : index
    %c0_39 = arith.constant 0 : index
    %44 = vector.load %arg15[%c0_38, %c0_39] : memref<1x896xf32, #tpu.memory_space<vmem>>, vector<1x896xf32>
    %45 = arith.truncf %42 : vector<256x128xf32> to vector<256x128xbf16>
    %cst_40 = arith.constant dense<0.000000e+00> : vector<256x896xf32>
    %46 = tpu.matmul %45, %43, %cst_40 {dimension_numbers = #tpu.dot_dimension_numbers<[1], [0], [0], [1], [0, 0, 1, 1], [], []>} : vector<256x128xbf16>, vector<128x896xbf16>, vector<256x896xf32> -> vector<256x896xf32>
    %47 = vector.broadcast %44 : vector<1x896xf32> to vector<256x896xf32>
    %48 = arith.addf %46, %47 : vector<256x896xf32>
    %49 = math.tanh %48 : vector<256x896xf32>
    %c0_41 = arith.constant 0 : index
    %c0_42 = arith.constant 0 : index
    %50 = vector.load %arg16[%c0_41, %c0_42] : memref<256x896xf32, #tpu.memory_space<vmem>>, vector<256x896xf32>
    tpu.vector_store %arg16[%c0_41, %c0_42], %49 {strides = array<i32>} : memref<256x896xf32, #tpu.memory_space<vmem>>, vector<256x896xf32>,
    return
  }
  func.func @transform_0(%arg0: i32) -> (i32, i32) {
    %c0_i32 = arith.constant 0 : i32
    %c0_i32_0 = arith.constant 0 : i32
    return %arg0, %c0_i32 : i32, i32
  }
  func.func @transform_1(%arg0: i32) -> (i32, i32) {
    %c0_i32 = arith.constant 0 : i32
    %c0_i32_0 = arith.constant 0 : i32
    %c0_i32_1 = arith.constant 0 : i32
    return %c0_i32, %c0_i32_0 : i32, i32
  }
  func.func @transform_2(%arg0: i32) -> (i32, i32) {
    %c0_i32 = arith.constant 0 : i32
    %c0_i32_0 = arith.constant 0 : i32
    %c0_i32_1 = arith.constant 0 : i32
    return %c0_i32, %c0_i32_0 : i32, i32
  }
  func.func @transform_3(%arg0: i32) -> (i32, i32) {
    %c0_i32 = arith.constant 0 : i32
    %c0_i32_0 = arith.constant 0 : i32
    %c0_i32_1 = arith.constant 0 : i32
    return %c0_i32, %c0_i32_0 : i32, i32
  }
  func.func @transform_4(%arg0: i32) -> (i32, i32) {
    %c0_i32 = arith.constant 0 : i32
    %c0_i32_0 = arith.constant 0 : i32
    %c0_i32_1 = arith.constant 0 : i32
    return %c0_i32, %c0_i32_0 : i32, i32
  }
  func.func @transform_5(%arg0: i32) -> (i32, i32) {
    %c0_i32 = arith.constant 0 : i32
    %c0_i32_0 = arith.constant 0 : i32
    %c0_i32_1 = arith.constant 0 : i32
    return %c0_i32, %c0_i32_0 : i32, i32
  }
  func.func @transform_6(%arg0: i32) -> (i32, i32) {
    %c0_i32 = arith.constant 0 : i32
    %c0_i32_0 = arith.constant 0 : i32
    %c0_i32_1 = arith.constant 0 : i32
    return %c0_i32, %c0_i32_0 : i32, i32
  }
  func.func @transform_7(%arg0: i32) -> (i32, i32) {
    %c0_i32 = arith.constant 0 : i32
    %c0_i32_0 = arith.constant 0 : i32
    %c0_i32_1 = arith.constant 0 : i32
    return %c0_i32, %c0_i32_0 : i32, i32
  }
  func.func @transform_8(%arg0: i32) -> (i32, i32) {
    %c0_i32 = arith.constant 0 : i32
    %c0_i32_0 = arith.constant 0 : i32
    %c0_i32_1 = arith.constant 0 : i32
    return %c0_i32, %c0_i32_0 : i32, i32
  }
  func.func @transform_9(%arg0: i32) -> (i32, i32) {
    %c0_i32 = arith.constant 0 : i32
    %c0_i32_0 = arith.constant 0 : i32
    %c0_i32_1 = arith.constant 0 : i32
    return %c0_i32, %c0_i32_0 : i32, i32
  }
  func.func @transform_10(%arg0: i32) -> (i32, i32) {
    %c0_i32 = arith.constant 0 : i32
    %c0_i32_0 = arith.constant 0 : i32
    %c0_i32_1 = arith.constant 0 : i32
    return %c0_i32, %c0_i32_0 : i32, i32
  }
  func.func @transform_11(%arg0: i32) -> (i32, i32) {
    %c0_i32 = arith.constant 0 : i32
    %c0_i32_0 = arith.constant 0 : i32
    %c0_i32_1 = arith.constant 0 : i32
    return %c0_i32, %c0_i32_0 : i32, i32
  }
  func.func @transform_12(%arg0: i32) -> (i32, i32) {
    %c0_i32 = arith.constant 0 : i32
    %c0_i32_0 = arith.constant 0 : i32
    %c0_i32_1 = arith.constant 0 : i32
    return %c0_i32, %c0_i32_0 : i32, i32
  }
  func.func @transform_13(%arg0: i32) -> (i32, i32) {
    %c0_i32 = arith.constant 0 : i32
    %c0_i32_0 = arith.constant 0 : i32
    %c0_i32_1 = arith.constant 0 : i32
    return %c0_i32, %c0_i32_0 : i32, i32
  }
  func.func @transform_14(%arg0: i32) -> (i32, i32) {
    %c0_i32 = arith.constant 0 : i32
    %c0_i32_0 = arith.constant 0 : i32
    %c0_i32_1 = arith.constant 0 : i32
    return %c0_i32, %c0_i32_0 : i32, i32
  }
  func.func @transform_15(%arg0: i32) -> (i32, i32) {
    %c0_i32 = arith.constant 0 : i32
    %c0_i32_0 = arith.constant 0 : i32
    return %arg0, %c0_i32 : i32, i32
  }
}

</mosaic_0001>

<llo_original>
// kernel: tpu_custom_call.1
$region0: #{tpu_custom_call.1}
  #allocation0 [shape = 'u32[]', space=smem, size = 0x4, offset = 0x4, fixed_abs, tag = 'smem constant byte address 0x4 - core index']
  #allocation1 [shape = 'u32[144,128]{1,0:T(1,128)}', space=vmem, size = 0x12000, scoped, tag = 'internal scratch']
  %s0 = inlined_call_operand.hbm [shape: bf16[512,896], index: 0, kind: input, shape index: {}]
  %s1 = inlined_call_operand.hbm [shape: bf16[896,128], index: 1, kind: input, shape index: {}]
  %s2 = inlined_call_operand.hbm [shape: f32[1,128], index: 2, kind: input, shape index: {}]
  %s3 = inlined_call_operand.vmem [shape: f32[128,64], index: 3, kind: input, shape index: {}]
  %s4 = inlined_call_operand.hbm [shape: f32[1,64], index: 4, kind: input, shape index: {}]
  %s5 = inlined_call_operand.vmem [shape: f32[64,12], index: 5, kind: input, shape index: {}]
  %s6 = inlined_call_operand.hbm [shape: f32[1,12], index: 6, kind: input, shape index: {}]
  %s7 = inlined_call_operand.hbm [shape: f32[12,12], index: 7, kind: input, shape index: {}]
  %s8 = inlined_call_operand.hbm [shape: f32[1,12], index: 8, kind: input, shape index: {}]
  %s9 = inlined_call_operand.hbm [shape: f32[12,64], index: 9, kind: input, shape index: {}]
  %s10 = inlined_call_operand.hbm [shape: f32[1,64], index: 10, kind: input, shape index: {}]
  %s11 = inlined_call_operand.hbm [shape: f32[64,128], index: 11, kind: input, shape index: {}]
  %s12 = inlined_call_operand.hbm [shape: f32[1,128], index: 12, kind: input, shape index: {}]
  %s13 = inlined_call_operand.hbm [shape: bf16[128,896], index: 13, kind: input, shape index: {}]
  %s14 = inlined_call_operand.hbm [shape: f32[1,896], index: 14, kind: input, shape index: {}]
  %s15 = inlined_call_operand.hbm [shape: f32[512,896], index: 15, kind: output, shape index: {}]
  %s16 = sld [smem:[#allocation0]]
  $region145: #{tpu_custom_call.1} parent=0
    _
  %s18 = ssub.s32 1, %s16
  %s19 = scalar_select 0, %s18, %s16
  $region1: #{tpu_custom_call.1} parent=0
    #allocation2 [shape = 'u8[917504]{0}', space=vmem, size = 0xe0000, scoped, tag = 'input window, operand 0']
    #allocation3 [shape = 's32[2]{0}', space=sflag, size = 0x8, scoped, tag = 'scoped memory for tpu_custom_call.1']
    #allocation4 [shape = 's32[2]{0}', space=sflag, size = 0x8, scoped, tag = 'scoped memory for tpu_custom_call.1']
    #allocation5 [shape = 'u8[229376]{0}', space=vmem, size = 0x38000, scoped, tag = 'input window, operand 1, single buffered']
    #allocation6 [shape = 's32[1]{0}', space=sflag, size = 0x4, scoped, tag = 'scoped memory for tpu_custom_call.1']
    #allocation7 [shape = 'u8[512]{0}', space=vmem, size = 0x400, scoped, tag = 'input window, operand 2, single buffered']
    #allocation8 [shape = 'u8[512]{0}', space=vmem, size = 0x400, scoped, tag = 'input window, operand 4, single buffered']
    #allocation9 [shape = 's32[1]{0}', space=sflag, size = 0x4, scoped, tag = 'scoped memory for tpu_custom_call.1']
    #allocation10 [shape = 'u8[512]{0}', space=vmem, size = 0x400, scoped, tag = 'input window, operand 6, single buffered']
    #allocation11 [shape = 'u8[8192]{0}', space=vmem, size = 0x2000, scoped, tag = 'input window, operand 7, single buffered']
    #allocation12 [shape = 's32[1]{0}', space=sflag, size = 0x4, scoped, tag = 'scoped memory for tpu_custom_call.1']
    #allocation13 [shape = 'u8[512]{0}', space=vmem, size = 0x400, scoped, tag = 'input window, operand 8, single buffered']
    #allocation14 [shape = 'u8[8192]{0}', space=vmem, size = 0x2000, scoped, tag = 'input window, operand 9, single buffered']
    #allocation15 [shape = 's32[1]{0}', space=sflag, size = 0x4, scoped, tag = 'scoped memory for tpu_custom_call.1']
    #allocation16 [shape = 'u8[512]{0}', space=vmem, size = 0x400, scoped, tag = 'input window, operand 10, single buffered']
    #allocation17 [shape = 'u8[32768]{0}', space=vmem, size = 0x8000, scoped, tag = 'input window, operand 11, single buffered']
    #allocation18 [shape = 's32[1]{0}', space=sflag, size = 0x4, scoped, tag = 'scoped memory for tpu_custom_call.1']
    #allocation19 [shape = 'u8[512]{0}', space=vmem, size = 0x400, scoped, tag = 'input window, operand 12, single buffered']
    #allocation20 [shape = 'u8[229376]{0}', space=vmem, size = 0x38000, scoped, tag = 'input window, operand 13, single buffered']
    #allocation21 [shape = 's32[1]{0}', space=sflag, size = 0x4, scoped, tag = 'scoped memory for tpu_custom_call.1']
    #allocation22 [shape = 'u8[3584]{0}', space=vmem, size = 0x1000, scoped, tag = 'input window, operand 14, single buffered']
    #allocation23 [shape = 'u8[1835008]{0}', space=vmem, size = 0x1c0000, scoped, tag = 'output window, operand 0']
    %20 = vsyncpa [#allocation3], 0
    %s21 = scalar_lea.sflag [#allocation3], 1
    %22 = vsyncpa %s21, 0
    %23 = vsyncpa [#allocation6], 0
    %24 = vsyncpa [#allocation9], 0
    %25 = vsyncpa [#allocation12], 0
    %26 = vsyncpa [#allocation15], 0
    %27 = vsyncpa [#allocation18], 0
    %28 = vsyncpa [#allocation21], 0
    %29 = vsyncpa [#allocation4], 0
    %s30 = scalar_lea.sflag [#allocation4], 1
    %31 = vsyncpa %s30, 0
    loop: start=0, step=1, limit=4
    $region2: #{tpu_custom_call.1} parent=1 // loop_pre_header
      _
    $region3: #{tpu_custom_call.1} parent=1 // loop_header
      %s33 = sphi 0, %s37
      %p34 = scmp.ge.s32.totalorder %s33, 4
      %s43 = sphi 0, %s45
      %s46 = sphi 0, %s43
      %s47 = sphi 0, %s46
      %s63 = sphi 0, %s47
      %s67 = sphi 0, %s67
      %s69 = sphi 0, %s67
      %s70 = sphi 0, %s69
      %s84 = sphi 0, %s70
      %s88 = sphi 0, %s88
      %s90 = sphi 0, %s88
      %s91 = sphi 0, %s90
      %s105 = sphi 0, %s91
      %s109 = sphi 0, %s109
      %s111 = sphi 0, %s109
      %s112 = sphi 0, %s111
      %s126 = sphi 0, %s112
      %s130 = sphi 0, %s130
      %s132 = sphi 0, %s130
      %s133 = sphi 0, %s132
      %s147 = sphi 0, %s133
      %s151 = sphi 0, %s151
      %s153 = sphi 0, %s151
      %s154 = sphi 0, %s153
      %s168 = sphi 0, %s154
      %s172 = sphi 0, %s172
      %s174 = sphi 0, %s172
      %s175 = sphi 0, %s174
      %s189 = sphi 0, %s175
      %s193 = sphi 0, %s193
      %s195 = sphi 0, %s193
      %s196 = sphi 0, %s195
      %s210 = sphi 0, %s196
      %s214 = sphi 0, %s214
      %s216 = sphi 0, %s214
      %s217 = sphi 0, %s216
      %s231 = sphi 0, %s217
      %s235 = sphi 0, %s235
      %s237 = sphi 0, %s235
      %s238 = sphi 0, %s237
      %s252 = sphi 0, %s238
      %s256 = sphi 0, %s256
      %s258 = sphi 0, %s256
      %s259 = sphi 0, %s258
      %s273 = sphi 0, %s259
      %s277 = sphi 0, %s277
      %s279 = sphi 0, %s277
      %s280 = sphi 0, %s279
      %s294 = sphi 0, %s280
      %s298 = sphi 0, %s298
      %s300 = sphi 0, %s298
      %s301 = sphi 0, %s300
      %s315 = sphi 0, %s301
      %s319 = sphi 0, %s319
      %s321 = sphi 0, %s319
      %s322 = sphi 0, %s321
      %s336 = sphi 0, %s322
      %s340 = sphi 0, %s340
      %s342 = sphi 0, %s340
      %s343 = sphi 0, %s342
      %s357 = sphi 0, %s343
      %s363 = sphi 0, %s365
      %s366 = sphi 0, %s363
      %s367 = sphi 0, %s366
      %s383 = sphi 0, %s367
    $region4: #{tpu_custom_call.1} parent=1 // loop_header_branch
      %36 = sbr.rel (%p34) target = $region8
    $region5: #{tpu_custom_call.1} parent=1 // loop_body
      %s38 = ssub.s32 %s33, 1
      %s39 = ssub.s32 %s33, 2
      %s40 = sadd.s32 %s33, 1
      %s41 = ssub.s32 %s33, %s40
      %p42 = scmp.eq.s32.totalorder %s41, 0
      %s44 = sadd.s32 %s43, 1
      %s45 = scalar_select %p42, %s43, %s44
      %p48 = pneg %p42
      %p49 = scmp.eq.s32.totalorder %s33, 1
      %p50 = por %p48, %p49
      %p51 = scmp.ne.s32.totalorder %s43, %s46
      %p52 = scmp.eq.s32.totalorder %s33, 0
      %p53 = por %p51, %p52
      %p54 = scmp.ne.s32.totalorder %s43, %s46
      %p55 = scmp.eq.s32.totalorder %s38, 1
      %p56 = por %p54, %p55
      %p57 = scmp.ne.s32.totalorder %s46, %s47
      %p58 = scmp.eq.s32.totalorder %s38, 0
      %p59 = por %p57, %p58
      %p60 = scmp.ne.s32.totalorder %s46, %s47
      %p61 = scmp.eq.s32.totalorder %s39, 1
      %p62 = por %p60, %p61
      %p64 = scmp.ne.s32.totalorder %s47, %s63
      %p65 = scmp.eq.s32.totalorder %s39, 0
      %p66 = por %p64, %p65
      %s68 = sadd.s32 %s67, 1
      %p71 = scmp.eq.s32.totalorder %s33, 1
      %p72 = scmp.ne.s32.totalorder %s67, %s69
      %p73 = scmp.eq.s32.totalorder %s33, 0
      %p74 = por %p72, %p73
      %p75 = scmp.ne.s32.totalorder %s67, %s69
      %p76 = scmp.eq.s32.totalorder %s38, 1
      %p77 = por %p75, %p76
      %p78 = scmp.ne.s32.totalorder %s69, %s70
      %p79 = scmp.eq.s32.totalorder %s38, 0
      %p80 = por %p78, %p79
      %p81 = scmp.ne.s32.totalorder %s69, %s70
      %p82 = scmp.eq.s32.totalorder %s39, 1
      %p83 = por %p81, %p82
      %p85 = scmp.ne.s32.totalorder %s70, %s84
      %p86 = scmp.eq.s32.totalorder %s39, 0
      %p87 = por %p85, %p86
      %s89 = sadd.s32 %s88, 1
      %p92 = scmp.eq.s32.totalorder %s33, 1
      %p93 = scmp.ne.s32.totalorder %s88, %s90
      %p94 = scmp.eq.s32.totalorder %s33, 0
      %p95 = por %p93, %p94
      %p96 = scmp.ne.s32.totalorder %s88, %s90
      %p97 = scmp.eq.s32.totalorder %s38, 1
      %p98 = por %p96, %p97
      %p99 = scmp.ne.s32.totalorder %s90, %s91
      %p100 = scmp.eq.s32.totalorder %s38, 0
      %p101 = por %p99, %p100
      %p102 = scmp.ne.s32.totalorder %s90, %s91
      %p103 = scmp.eq.s32.totalorder %s39, 1
      %p104 = por %p102, %p103
      %p106 = scmp.ne.s32.totalorder %s91, %s105
      %p107 = scmp.eq.s32.totalorder %s39, 0
      %p108 = por %p106, %p107
      %s110 = sadd.s32 %s109, 1
      %p113 = scmp.eq.s32.totalorder %s33, 1
      %p114 = scmp.ne.s32.totalorder %s109, %s111
      %p115 = scmp.eq.s32.totalorder %s33, 0
      %p116 = por %p114, %p115
      %p117 = scmp.ne.s32.totalorder %s109, %s111
      %p118 = scmp.eq.s32.totalorder %s38, 1
      %p119 = por %p117, %p118
      %p120 = scmp.ne.s32.totalorder %s111, %s112
      %p121 = scmp.eq.s32.totalorder %s38, 0
      %p122 = por %p120, %p121
      %p123 = scmp.ne.s32.totalorder %s111, %s112
      %p124 = scmp.eq.s32.totalorder %s39, 1
      %p125 = por %p123, %p124
      %p127 = scmp.ne.s32.totalorder %s112, %s126
      %p128 = scmp.eq.s32.totalorder %s39, 0
      %p129 = por %p127, %p128
      %s131 = sadd.s32 %s130, 1
      %p134 = scmp.eq.s32.totalorder %s33, 1
      %p135 = scmp.ne.s32.totalorder %s130, %s132
      %p136 = scmp.eq.s32.totalorder %s33, 0
      %p137 = por %p135, %p136
      %p138 = scmp.ne.s32.totalorder %s130, %s132
      %p139 = scmp.eq.s32.totalorder %s38, 1
      %p140 = por %p138, %p139
      %p141 = scmp.ne.s32.totalorder %s132, %s133
      %p142 = scmp.eq.s32.totalorder %s38, 0
      %p143 = por %p141, %p142
      %p144 = scmp.ne.s32.totalorder %s132, %s133
      %p145 = scmp.eq.s32.totalorder %s39, 1
      %p146 = por %p144, %p145
      %p148 = scmp.ne.s32.totalorder %s133, %s147
      %p149 = scmp.eq.s32.totalorder %s39, 0
      %p150 = por %p148, %p149
      %s152 = sadd.s32 %s151, 1
      %p155 = scmp.eq.s32.totalorder %s33, 1
      %p156 = scmp.ne.s32.totalorder %s151, %s153
      %p157 = scmp.eq.s32.totalorder %s33, 0
      %p158 = por %p156, %p157
      %p159 = scmp.ne.s32.totalorder %s151, %s153
      %p160 = scmp.eq.s32.totalorder %s38, 1
      %p161 = por %p159, %p160
      %p162 = scmp.ne.s32.totalorder %s153, %s154
      %p163 = scmp.eq.s32.totalorder %s38, 0
      %p164 = por %p162, %p163
      %p165 = scmp.ne.s32.totalorder %s153, %s154
      %p166 = scmp.eq.s32.totalorder %s39, 1
      %p167 = por %p165, %p166
      %p169 = scmp.ne.s32.totalorder %s154, %s168
      %p170 = scmp.eq.s32.totalorder %s39, 0
      %p171 = por %p169, %p170
      %s173 = sadd.s32 %s172, 1
      %p176 = scmp.eq.s32.totalorder %s33, 1
      %p177 = scmp.ne.s32.totalorder %s172, %s174
      %p178 = scmp.eq.s32.totalorder %s33, 0
      %p179 = por %p177, %p178
      %p180 = scmp.ne.s32.totalorder %s172, %s174
      %p181 = scmp.eq.s32.totalorder %s38, 1
      %p182 = por %p180, %p181
      %p183 = scmp.ne.s32.totalorder %s174, %s175
      %p184 = scmp.eq.s32.totalorder %s38, 0
      %p185 = por %p183, %p184
      %p186 = scmp.ne.s32.totalorder %s174, %s175
      %p187 = scmp.eq.s32.totalorder %s39, 1
      %p188 = por %p186, %p187
      %p190 = scmp.ne.s32.totalorder %s175, %s189
      %p191 = scmp.eq.s32.totalorder %s39, 0
      %p192 = por %p190, %p191
      %s194 = sadd.s32 %s193, 1
      %p197 = scmp.eq.s32.totalorder %s33, 1
      %p198 = scmp.ne.s32.totalorder %s193, %s195
      %p199 = scmp.eq.s32.totalorder %s33, 0
      %p200 = por %p198, %p199
      %p201 = scmp.ne.s32.totalorder %s193, %s195
      %p202 = scmp.eq.s32.totalorder %s38, 1
      %p203 = por %p201, %p202
      %p204 = scmp.ne.s32.totalorder %s195, %s196
      %p205 = scmp.eq.s32.totalorder %s38, 0
      %p206 = por %p204, %p205
      %p207 = scmp.ne.s32.totalorder %s195, %s196
      %p208 = scmp.eq.s32.totalorder %s39, 1
      %p209 = por %p207, %p208
      %p211 = scmp.ne.s32.totalorder %s196, %s210
      %p212 = scmp.eq.s32.totalorder %s39, 0
      %p213 = por %p211, %p212
      %s215 = sadd.s32 %s214, 1
      %p218 = scmp.eq.s32.totalorder %s33, 1
      %p219 = scmp.ne.s32.totalorder %s214, %s216
      %p220 = scmp.eq.s32.totalorder %s33, 0
      %p221 = por %p219, %p220
      %p222 = scmp.ne.s32.totalorder %s214, %s216
      %p223 = scmp.eq.s32.totalorder %s38, 1
      %p224 = por %p222, %p223
      %p225 = scmp.ne.s32.totalorder %s216, %s217
      %p226 = scmp.eq.s32.totalorder %s38, 0
      %p227 = por %p225, %p226
      %p228 = scmp.ne.s32.totalorder %s216, %s217
      %p229 = scmp.eq.s32.totalorder %s39, 1
      %p230 = por %p228, %p229
      %p232 = scmp.ne.s32.totalorder %s217, %s231
      %p233 = scmp.eq.s32.totalorder %s39, 0
      %p234 = por %p232, %p233
      %s236 = sadd.s32 %s235, 1
      %p239 = scmp.eq.s32.totalorder %s33, 1
      %p240 = scmp.ne.s32.totalorder %s235, %s237
      %p241 = scmp.eq.s32.totalorder %s33, 0
      %p242 = por %p240, %p241
      %p243 = scmp.ne.s32.totalorder %s235, %s237
      %p244 = scmp.eq.s32.totalorder %s38, 1
      %p245 = por %p243, %p244
      %p246 = scmp.ne.s32.totalorder %s237, %s238
      %p247 = scmp.eq.s32.totalorder %s38, 0
      %p248 = por %p246, %p247
      %p249 = scmp.ne.s32.totalorder %s237, %s238
      %p250 = scmp.eq.s32.totalorder %s39, 1
      %p251 = por %p249, %p250
      %p253 = scmp.ne.s32.totalorder %s238, %s252
      %p254 = scmp.eq.s32.totalorder %s39, 0
      %p255 = por %p253, %p254
      %s257 = sadd.s32 %s256, 1
      %p260 = scmp.eq.s32.totalorder %s33, 1
      %p261 = scmp.ne.s32.totalorder %s256, %s258
      %p262 = scmp.eq.s32.totalorder %s33, 0
      %p263 = por %p261, %p262
      %p264 = scmp.ne.s32.totalorder %s256, %s258
      %p265 = scmp.eq.s32.totalorder %s38, 1
      %p266 = por %p264, %p265
      %p267 = scmp.ne.s32.totalorder %s258, %s259
      %p268 = scmp.eq.s32.totalorder %s38, 0
      %p269 = por %p267, %p268
      %p270 = scmp.ne.s32.totalorder %s258, %s259
      %p271 = scmp.eq.s32.totalorder %s39, 1
      %p272 = por %p270, %p271
      %p274 = scmp.ne.s32.totalorder %s259, %s273
      %p275 = scmp.eq.s32.totalorder %s39, 0
      %p276 = por %p274, %p275
      %s278 = sadd.s32 %s277, 1
      %p281 = scmp.eq.s32.totalorder %s33, 1
      %p282 = scmp.ne.s32.totalorder %s277, %s279
      %p283 = scmp.eq.s32.totalorder %s33, 0
      %p284 = por %p282, %p283
      %p285 = scmp.ne.s32.totalorder %s277, %s279
      %p286 = scmp.eq.s32.totalorder %s38, 1
      %p287 = por %p285, %p286
      %p288 = scmp.ne.s32.totalorder %s279, %s280
      %p289 = scmp.eq.s32.totalorder %s38, 0
      %p290 = por %p288, %p289
      %p291 = scmp.ne.s32.totalorder %s279, %s280
      %p292 = scmp.eq.s32.totalorder %s39, 1
      %p293 = por %p291, %p292
      %p295 = scmp.ne.s32.totalorder %s280, %s294
      %p296 = scmp.eq.s32.totalorder %s39, 0
      %p297 = por %p295, %p296
      %s299 = sadd.s32 %s298, 1
      %p302 = scmp.eq.s32.totalorder %s33, 1
      %p303 = scmp.ne.s32.totalorder %s298, %s300
      %p304 = scmp.eq.s32.totalorder %s33, 0
      %p305 = por %p303, %p304
      %p306 = scmp.ne.s32.totalorder %s298, %s300
      %p307 = scmp.eq.s32.totalorder %s38, 1
      %p308 = por %p306, %p307
      %p309 = scmp.ne.s32.totalorder %s300, %s301
      %p310 = scmp.eq.s32.totalorder %s38, 0
      %p311 = por %p309, %p310
      %p312 = scmp.ne.s32.totalorder %s300, %s301
      %p313 = scmp.eq.s32.totalorder %s39, 1
      %p314 = por %p312, %p313
      %p316 = scmp.ne.s32.totalorder %s301, %s315
      %p317 = scmp.eq.s32.totalorder %s39, 0
      %p318 = por %p316, %p317
      %s320 = sadd.s32 %s319, 1
      %p323 = scmp.eq.s32.totalorder %s33, 1
      %p324 = scmp.ne.s32.totalorder %s319, %s321
      %p325 = scmp.eq.s32.totalorder %s33, 0
      %p326 = por %p324, %p325
      %p327 = scmp.ne.s32.totalorder %s319, %s321
      %p328 = scmp.eq.s32.totalorder %s38, 1
      %p329 = por %p327, %p328
      %p330 = scmp.ne.s32.totalorder %s321, %s322
      %p331 = scmp.eq.s32.totalorder %s38, 0
      %p332 = por %p330, %p331
      %p333 = scmp.ne.s32.totalorder %s321, %s322
      %p334 = scmp.eq.s32.totalorder %s39, 1
      %p335 = por %p333, %p334
      %p337 = scmp.ne.s32.totalorder %s322, %s336
      %p338 = scmp.eq.s32.totalorder %s39, 0
      %p339 = por %p337, %p338
      %s341 = sadd.s32 %s340, 1
      %p344 = scmp.eq.s32.totalorder %s33, 1
      %p345 = scmp.ne.s32.totalorder %s340, %s342
      %p346 = scmp.eq.s32.totalorder %s33, 0
      %p347 = por %p345, %p346
      %p348 = scmp.ne.s32.totalorder %s340, %s342
      %p349 = scmp.eq.s32.totalorder %s38, 1
      %p350 = por %p348, %p349
      %p351 = scmp.ne.s32.totalorder %s342, %s343
      %p352 = scmp.eq.s32.totalorder %s38, 0
      %p353 = por %p351, %p352
      %p354 = scmp.ne.s32.totalorder %s342, %s343
      %p355 = scmp.eq.s32.totalorder %s39, 1
      %p356 = por %p354, %p355
      %p358 = scmp.ne.s32.totalorder %s343, %s357
      %p359 = scmp.eq.s32.totalorder %s39, 0
      %p360 = por %p358, %p359
      %s361 = ssub.s32 %s33, %s40
      %p362 = scmp.eq.s32.totalorder %s361, 0
      %s364 = sadd.s32 %s363, 1
      %s365 = scalar_select %p362, %s363, %s364
      %p368 = pneg %p362
      %p369 = scmp.eq.s32.totalorder %s33, 1
      %p370 = por %p368, %p369
      %p371 = scmp.ne.s32.totalorder %s363, %s366
      %p372 = scmp.eq.s32.totalorder %s33, 0
      %p373 = por %p371, %p372
      %p374 = scmp.ne.s32.totalorder %s363, %s366
      %p375 = scmp.eq.s32.totalorder %s38, 1
      %p376 = por %p374, %p375
      %p377 = scmp.ne.s32.totalorder %s366, %s367
      %p378 = scmp.eq.s32.totalorder %s38, 0
      %p379 = por %p377, %p378
      %p380 = scmp.ne.s32.totalorder %s366, %s367
      %p381 = scmp.eq.s32.totalorder %s39, 1
      %p382 = por %p380, %p381
      %p384 = scmp.ne.s32.totalorder %s367, %s383
      %p385 = scmp.eq.s32.totalorder %s39, 0
      %p386 = por %p384, %p385
      %p387 = scmp.le.s32.totalorder 1, %s33
      %p388 = scmp.lt.s32.totalorder %s33, 3
      %p389 = pnand %p387, %p388
      %p390 = pneg %p389
      // Predicated region
      $region9: #{tpu_custom_call.1} parent=5 // pred_check
        _
      $region10: #{tpu_custom_call.1} parent=5 // pred_check_branch
        %392 = sbr.rel (%p389) target = $region12
      $region11: #{tpu_custom_call.1} parent=5 // pred_region
        %s393 = ssub.s32 %s33, 1
        // Predicated region
        $region13: #{tpu_custom_call.1} parent=11 // pred_check
          %p394 = pneg %p80
        $region14: #{tpu_custom_call.1} parent=11 // pred_check_branch
          %396 = sbr.rel (%p394) target = $region16
        $region15: #{tpu_custom_call.1} parent=11 // pred_region
          %s398 = ssub.s32 7168, 7168
          %399 = vsyncadd [#allocation6], %s398
          %s400 = sshll.u32 [#allocation5], 4
          %s401 = int_to_ptr.vmem [resolvable:$true] %s400
          %406 = dma.hbm_to_vmem [thread:$0]  %s1, 7168, %s401, [#allocation6], 64, 64, 4
        $region16: #{tpu_custom_call.1} parent=11 // pred_fallthru
          _
        // Predicated region
        $region17: #{tpu_custom_call.1} parent=11 // pred_check
          %p407 = pneg %p101
        $region18: #{tpu_custom_call.1} parent=11 // pred_check_branch
          %409 = sbr.rel (%p407) target = $region20
        $region19: #{tpu_custom_call.1} parent=11 // pred_region
          %s411 = ssub.s32 16, 16
          %412 = vsyncadd [#allocation6], %s411
          %s414 = sshll.u32 [#allocation7], 4
          %s415 = int_to_ptr.vmem [resolvable:$true] %s414
          %417 = dma.hbm_to_vmem [thread:$0]  %s2, 16, %s415, [#allocation6]
        $region20: #{tpu_custom_call.1} parent=11 // pred_fallthru
          _
        // Predicated region
        $region21: #{tpu_custom_call.1} parent=11 // pred_check
          %p418 = pneg %p122
        $region22: #{tpu_custom_call.1} parent=11 // pred_check_branch
          %420 = sbr.rel (%p418) target = $region24
        $region23: #{tpu_custom_call.1} parent=11 // pred_region
          _
        $region24: #{tpu_custom_call.1} parent=11 // pred_fallthru
          _
        // Predicated region
        $region25: #{tpu_custom_call.1} parent=11 // pred_check
          %p421 = pneg %p143
        $region26: #{tpu_custom_call.1} parent=11 // pred_check_branch
          %423 = sbr.rel (%p421) target = $region28
        $region27: #{tpu_custom_call.1} parent=11 // pred_region
          %s425 = ssub.s32 16, 16
          %426 = vsyncadd [#allocation9], %s425
          %s428 = sshll.u32 [#allocation8], 4
          %s429 = int_to_ptr.vmem [resolvable:$true] %s428
          %431 = dma.hbm_to_vmem [thread:$0]  %s4, 16, %s429, [#allocation9]
        $region28: #{tpu_custom_call.1} parent=11 // pred_fallthru
          _
        // Predicated region
        $region29: #{tpu_custom_call.1} parent=11 // pred_check
          %p432 = pneg %p164
        $region30: #{tpu_custom_call.1} parent=11 // pred_check_branch
          %434 = sbr.rel (%p432) target = $region32
        $region31: #{tpu_custom_call.1} parent=11 // pred_region
          _
        $region32: #{tpu_custom_call.1} parent=11 // pred_fallthru
          _
        // Predicated region
        $region33: #{tpu_custom_call.1} parent=11 // pred_check
          %p435 = pneg %p185
        $region34: #{tpu_custom_call.1} parent=11 // pred_check_branch
          %437 = sbr.rel (%p435) target = $region36
        $region35: #{tpu_custom_call.1} parent=11 // pred_region
          %s439 = ssub.s32 16, 16
          %440 = vsyncadd [#allocation9], %s439
          %s442 = sshll.u32 [#allocation10], 4
          %s443 = int_to_ptr.vmem [resolvable:$true] %s442
          %445 = dma.hbm_to_vmem [thread:$0]  %s6, 16, %s443, [#allocation9]
        $region36: #{tpu_custom_call.1} parent=11 // pred_fallthru
          _
        // Predicated region
        $region37: #{tpu_custom_call.1} parent=11 // pred_check
          %p446 = pneg %p206
        $region38: #{tpu_custom_call.1} parent=11 // pred_check_branch
          %448 = sbr.rel (%p446) target = $region40
        $region39: #{tpu_custom_call.1} parent=11 // pred_region
          %s450 = ssub.s32 256, 256
          %451 = vsyncadd [#allocation12], %s450
          %s452 = sshll.u32 [#allocation11], 4
          %s453 = int_to_ptr.vmem [resolvable:$true] %s452
          %458 = dma.hbm_to_vmem [thread:$0]  %s7, 256, %s453, [#allocation12], 128, 128, 8
        $region40: #{tpu_custom_call.1} parent=11 // pred_fallthru
          _
        // Predicated region
        $region41: #{tpu_custom_call.1} parent=11 // pred_check
          %p459 = pneg %p227
        $region42: #{tpu_custom_call.1} parent=11 // pred_check_branch
          %461 = sbr.rel (%p459) target = $region44
        $region43: #{tpu_custom_call.1} parent=11 // pred_region
          %s463 = ssub.s32 16, 16
          %464 = vsyncadd [#allocation12], %s463
          %s466 = sshll.u32 [#allocation13], 4
          %s467 = int_to_ptr.vmem [resolvable:$true] %s466
          %469 = dma.hbm_to_vmem [thread:$0]  %s8, 16, %s467, [#allocation12]
        $region44: #{tpu_custom_call.1} parent=11 // pred_fallthru
          _
        // Predicated region
        $region45: #{tpu_custom_call.1} parent=11 // pred_check
          %p470 = pneg %p248
        $region46: #{tpu_custom_call.1} parent=11 // pred_check_branch
          %472 = sbr.rel (%p470) target = $region48
        $region47: #{tpu_custom_call.1} parent=11 // pred_region
          %s474 = ssub.s32 256, 256
          %475 = vsyncadd [#allocation15], %s474
          %s476 = sshll.u32 [#allocation14], 4
          %s477 = int_to_ptr.vmem [resolvable:$true] %s476
          %482 = dma.hbm_to_vmem [thread:$0]  %s9, 256, %s477, [#allocation15], 128, 128, 8
        $region48: #{tpu_custom_call.1} parent=11 // pred_fallthru
          _
        // Predicated region
        $region49: #{tpu_custom_call.1} parent=11 // pred_check
          %p483 = pneg %p269
        $region50: #{tpu_custom_call.1} parent=11 // pred_check_branch
          %485 = sbr.rel (%p483) target = $region52
        $region51: #{tpu_custom_call.1} parent=11 // pred_region
          %s487 = ssub.s32 16, 16
          %488 = vsyncadd [#allocation15], %s487
          %s490 = sshll.u32 [#allocation16], 4
          %s491 = int_to_ptr.vmem [resolvable:$true] %s490
          %493 = dma.hbm_to_vmem [thread:$0]  %s10, 16, %s491, [#allocation15]
        $region52: #{tpu_custom_call.1} parent=11 // pred_fallthru
          _
        // Predicated region
        $region53: #{tpu_custom_call.1} parent=11 // pred_check
          %p494 = pneg %p290
        $region54: #{tpu_custom_call.1} parent=11 // pred_check_branch
          %496 = sbr.rel (%p494) target = $region56
        $region55: #{tpu_custom_call.1} parent=11 // pred_region
          %s498 = ssub.s32 1024, 1024
          %499 = vsyncadd [#allocation18], %s498
          %s500 = sshll.u32 [#allocation17], 4
          %s501 = int_to_ptr.vmem [resolvable:$true] %s500
          %506 = dma.hbm_to_vmem [thread:$0]  %s11, 1024, %s501, [#allocation18], 128, 128, 8
        $region56: #{tpu_custom_call.1} parent=11 // pred_fallthru
          _
        // Predicated region
        $region57: #{tpu_custom_call.1} parent=11 // pred_check
          %p507 = pneg %p311
        $region58: #{tpu_custom_call.1} parent=11 // pred_check_branch
          %509 = sbr.rel (%p507) target = $region60
        $region59: #{tpu_custom_call.1} parent=11 // pred_region
          %s511 = ssub.s32 16, 16
          %512 = vsyncadd [#allocation18], %s511
          %s514 = sshll.u32 [#allocation19], 4
          %s515 = int_to_ptr.vmem [resolvable:$true] %s514
          %517 = dma.hbm_to_vmem [thread:$0]  %s12, 16, %s515, [#allocation18]
        $region60: #{tpu_custom_call.1} parent=11 // pred_fallthru
          _
        // Predicated region
        $region61: #{tpu_custom_call.1} parent=11 // pred_check
          %p518 = pneg %p332
        $region62: #{tpu_custom_call.1} parent=11 // pred_check_branch
          %520 = sbr.rel (%p518) target = $region64
        $region63: #{tpu_custom_call.1} parent=11 // pred_region
          %s522 = ssub.s32 7168, 7168
          %523 = vsyncadd [#allocation21], %s522
          %s524 = sshll.u32 [#allocation20], 4
          %s525 = int_to_ptr.vmem [resolvable:$true] %s524
          %530 = dma.hbm_to_vmem [thread:$0]  %s13, 7168, %s525, [#allocation21], 448, 448, 28
        $region64: #{tpu_custom_call.1} parent=11 // pred_fallthru
          _
        // Predicated region
        $region65: #{tpu_custom_call.1} parent=11 // pred_check
          %p531 = pneg %p353
        $region66: #{tpu_custom_call.1} parent=11 // pred_check_branch
          %533 = sbr.rel (%p531) target = $region68
        $region67: #{tpu_custom_call.1} parent=11 // pred_region
          %s535 = ssub.s32 112, 112
          %536 = vsyncadd [#allocation21], %s535
          %s538 = sshll.u32 [#allocation22], 4
          %s539 = int_to_ptr.vmem [resolvable:$true] %s538
          %541 = dma.hbm_to_vmem [thread:$0]  %s14, 112, %s539, [#allocation21]
        $region68: #{tpu_custom_call.1} parent=11 // pred_fallthru
          _
      $region12: #{tpu_custom_call.1} parent=5 // pred_fallthru
        _
      %p542 = scmp.lt.s32.totalorder %s33, 2
      // Predicated region
      $region69: #{tpu_custom_call.1} parent=5 // pred_check
        %p543 = pneg %p542
      $region70: #{tpu_custom_call.1} parent=5 // pred_check_branch
        %545 = sbr.rel (%p543) target = $region72
      $region71: #{tpu_custom_call.1} parent=5 // pred_region
        // Predicated region
        $region73: #{tpu_custom_call.1} parent=71 // pred_check
          %p546 = pneg %p53
        $region74: #{tpu_custom_call.1} parent=71 // pred_check_branch
          %548 = sbr.rel (%p546) target = $region76
        $region75: #{tpu_custom_call.1} parent=71 // pred_region
          %s549 = sand.u32 %s43, 1
          %s550 = scalar_lea.sflag [#allocation3], %s549
          %s551 = sand.u32 %s43, 1
          %s552 = smul.addr %s551, 896
          %s553 = scalar_lea.vmem [#allocation2], %s552
          %s554 = smul.u32 32, %s33
          %s556 = ssub.s32 14336, 14336
          %557 = vsyncadd %s550, %s556
          %s558 = smul.addr %s554, 7
          %s559 = smul.addr %s558, 64
          %s560 = scalar_lea.hbm %s0, %s559
          %s561 = sshll.u32 %s553, 4
          %s562 = int_to_ptr.vmem [resolvable:$true] %s561
          %567 = dma.hbm_to_vmem [thread:$0]  %s560, 14336, %s562, %s550, 448, 448, 28
        $region76: #{tpu_custom_call.1} parent=71 // pred_fallthru
          _
      $region72: #{tpu_custom_call.1} parent=5 // pred_fallthru
        _
      %p568 = scmp.le.s32.totalorder 1, %s33
      %p569 = scmp.lt.s32.totalorder %s33, 3
      %p570 = pnand %p568, %p569
      %p571 = pneg %p570
      // Predicated region
      $region77: #{tpu_custom_call.1} parent=5 // pred_check
        _
      $region78: #{tpu_custom_call.1} parent=5 // pred_check_branch
        %573 = sbr.rel (%p570) target = $region80
      $region79: #{tpu_custom_call.1} parent=5 // pred_region
        %s574 = ssub.s32 %s33, 1
        %s575 = sand.u32 %s46, 1
        %s576 = scalar_lea.sflag [#allocation3], %s575
        %s577 = sand.u32 %s46, 1
        %s578 = smul.addr %s577, 896
        %s579 = scalar_lea.vmem [#allocation2], %s578
        // Predicated region
        $region81: #{tpu_custom_call.1} parent=79 // pred_check
          %p580 = pneg %p59
        $region82: #{tpu_custom_call.1} parent=79 // pred_check_branch
          %582 = sbr.rel (%p580) target = $region84
        $region83: #{tpu_custom_call.1} parent=79 // pred_region
          %583 = dma.done %s576, 14336
        $region84: #{tpu_custom_call.1} parent=79 // pred_fallthru
          _
        // Predicated region
        $region85: #{tpu_custom_call.1} parent=79 // pred_check
          %p584 = pneg %p80
        $region86: #{tpu_custom_call.1} parent=79 // pred_check_branch
          %586 = sbr.rel (%p584) target = $region88
        $region87: #{tpu_custom_call.1} parent=79 // pred_region
          %587 = dma.done [#allocation6], 7168
        $region88: #{tpu_custom_call.1} parent=79 // pred_fallthru
          _
        // Predicated region
        $region89: #{tpu_custom_call.1} parent=79 // pred_check
          %p588 = pneg %p101
        $region90: #{tpu_custom_call.1} parent=79 // pred_check_branch
          %590 = sbr.rel (%p588) target = $region92
        $region91: #{tpu_custom_call.1} parent=79 // pred_region
          %591 = dma.done [#allocation6], 16
        $region92: #{tpu_custom_call.1} parent=79 // pred_fallthru
          _
        // Predicated region
        $region93: #{tpu_custom_call.1} parent=79 // pred_check
          %p592 = pneg %p143
        $region94: #{tpu_custom_call.1} parent=79 // pred_check_branch
          %594 = sbr.rel (%p592) target = $region96
        $region95: #{tpu_custom_call.1} parent=79 // pred_region
          %595 = dma.done [#allocation9], 16
        $region96: #{tpu_custom_call.1} parent=79 // pred_fallthru
          _
        // Predicated region
        $region97: #{tpu_custom_call.1} parent=79 // pred_check
          %p596 = pneg %p185
        $region98: #{tpu_custom_call.1} parent=79 // pred_check_branch
          %598 = sbr.rel (%p596) target = $region100
        $region99: #{tpu_custom_call.1} parent=79 // pred_region
          %599 = dma.done [#allocation9], 16
        $region100: #{tpu_custom_call.1} parent=79 // pred_fallthru
          _
        // Predicated region
        $region101: #{tpu_custom_call.1} parent=79 // pred_check
          %p600 = pneg %p206
        $region102: #{tpu_custom_call.1} parent=79 // pred_check_branch
          %602 = sbr.rel (%p600) target = $region104
        $region103: #{tpu_custom_call.1} parent=79 // pred_region
          %603 = dma.done [#allocation12], 256
        $region104: #{tpu_custom_call.1} parent=79 // pred_fallthru
          _
        // Predicated region
        $region105: #{tpu_custom_call.1} parent=79 // pred_check
          %p604 = pneg %p227
        $region106: #{tpu_custom_call.1} parent=79 // pred_check_branch
          %606 = sbr.rel (%p604) target = $region108
        $region107: #{tpu_custom_call.1} parent=79 // pred_region
          %607 = dma.done [#allocation12], 16
        $region108: #{tpu_custom_call.1} parent=79 // pred_fallthru
          _
        // Predicated region
        $region109: #{tpu_custom_call.1} parent=79 // pred_check
          %p608 = pneg %p248
        $region110: #{tpu_custom_call.1} parent=79 // pred_check_branch
          %610 = sbr.rel (%p608) target = $region112
        $region111: #{tpu_custom_call.1} parent=79 // pred_region
          %611 = dma.done [#allocation15], 256
        $region112: #{tpu_custom_call.1} parent=79 // pred_fallthru
          _
        // Predicated region
        $region113: #{tpu_custom_call.1} parent=79 // pred_check
          %p612 = pneg %p269
        $region114: #{tpu_custom_call.1} parent=79 // pred_check_branch
          %614 = sbr.rel (%p612) target = $region116
        $region115: #{tpu_custom_call.1} parent=79 // pred_region
          %615 = dma.done [#allocation15], 16
        $region116: #{tpu_custom_call.1} parent=79 // pred_fallthru
          _
        // Predicated region
        $region117: #{tpu_custom_call.1} parent=79 // pred_check
          %p616 = pneg %p290
        $region118: #{tpu_custom_call.1} parent=79 // pred_check_branch
          %618 = sbr.rel (%p616) target = $region120
        $region119: #{tpu_custom_call.1} parent=79 // pred_region
          %619 = dma.done [#allocation18], 1024
        $region120: #{tpu_custom_call.1} parent=79 // pred_fallthru
          _
        // Predicated region
        $region121: #{tpu_custom_call.1} parent=79 // pred_check
          %p620 = pneg %p311
        $region122: #{tpu_custom_call.1} parent=79 // pred_check_branch
          %622 = sbr.rel (%p620) target = $region124
        $region123: #{tpu_custom_call.1} parent=79 // pred_region
          %623 = dma.done [#allocation18], 16
        $region124: #{tpu_custom_call.1} parent=79 // pred_fallthru
          _
        // Predicated region
        $region125: #{tpu_custom_call.1} parent=79 // pred_check
          %p624 = pneg %p332
        $region126: #{tpu_custom_call.1} parent=79 // pred_check_branch
          %626 = sbr.rel (%p624) target = $region128
        $region127: #{tpu_custom_call.1} parent=79 // pred_region
          %627 = dma.done [#allocation21], 7168
        $region128: #{tpu_custom_call.1} parent=79 // pred_fallthru
          _
        // Predicated region
        $region129: #{tpu_custom_call.1} parent=79 // pred_check
          %p628 = pneg %p353
        $region130: #{tpu_custom_call.1} parent=79 // pred_check_branch
          %630 = sbr.rel (%p628) target = $region132
        $region131: #{tpu_custom_call.1} parent=79 // pred_region
          %631 = dma.done [#allocation21], 112
        $region132: #{tpu_custom_call.1} parent=79 // pred_fallthru
          _
        %s632 = sand.u32 %s46, 1
        %s633 = scalar_lea.sflag [#allocation3], %s632
        %s634 = sand.u32 %s46, 1
        %s635 = smul.addr %s634, 896
        %s636 = scalar_lea.vmem [#allocation2], %s635
        %p637 = pneg %p59
        %p638 = pneg %p56
        %p639 = pneg %p80
        %p640 = pneg %p77
        %p641 = pneg %p101
        %p642 = pneg %p98
        %p643 = pneg %p122
        %p644 = pneg %p119
        %p645 = pneg %p143
        %p646 = pneg %p140
        %p647 = pneg %p164
        %p648 = pneg %p161
        %p649 = pneg %p185
        %p650 = pneg %p182
        %p651 = pneg %p206
        %p652 = pneg %p203
        %p653 = pneg %p227
        %p654 = pneg %p224
        %p655 = pneg %p248
        %p656 = pneg %p245
        %p657 = pneg %p269
        %p658 = pneg %p266
        %p659 = pneg %p290
        %p660 = pneg %p287
        %p661 = pneg %p311
        %p662 = pneg %p308
        %p663 = pneg %p332
        %p664 = pneg %p329
        %p665 = pneg %p353
        %p666 = pneg %p350
        %p667 = pneg %p379
        %p668 = pneg %p376
        %s669 = sand.u32 %s366, 1
        %s670 = scalar_lea.sflag [#allocation4], %s669
        %s671 = sand.u32 %s366, 1
        %s672 = smul.addr %s671, 1792
        %s673 = scalar_lea.vmem [#allocation23], %s672
        %s674 = smul.u32 32, %s38
        %s675 = smul.u32 32, %s38
        %v677 = vld [vmem:[%s579] sm:$0xff]
        %v678 = vld [vmem:[%s579 + $0x8] sm:$0xff]
        %v679 = vld [vmem:[%s579 + $0x10] sm:$0xff]
        %v680 = vld [vmem:[%s579 + $0x18] sm:$0xf]
        %v681 = vld [vmem:[%s579 + $0x1c] sm:$0xff]
        %v682 = vld [vmem:[%s579 + $0x24] sm:$0xff]
        %v683 = vld [vmem:[%s579 + $0x2c] sm:$0xff]
        %v684 = vld [vmem:[%s579 + $0x34] sm:$0xf]
        %v685 = vld [vmem:[%s579 + $0x38] sm:$0xff]
        %v686 = vld [vmem:[%s579 + $0x40] sm:$0xff]
        %v687 = vld [vmem:[%s579 + $0x48] sm:$0xff]
        %v688 = vld [vmem:[%s579 + $0x50] sm:$0xf]
        %v689 = vld [vmem:[%s579 + $0x54] sm:$0xff]
        %v690 = vld [vmem:[%s579 + $0x5c] sm:$0xff]
        %v691 = vld [vmem:[%s579 + $0x64] sm:$0xff]
        %v692 = vld [vmem:[%s579 + $0x6c] sm:$0xf]
        %v693 = vld [vmem:[%s579 + $0x70] sm:$0xff]
        %v694 = vld [vmem:[%s579 + $0x78] sm:$0xff]
        %v695 = vld [vmem:[%s579 + $0x80] sm:$0xff]
        %v696 = vld [vmem:[%s579 + $0x88] sm:$0xf]
        %v697 = vld [vmem:[%s579 + $0x8c] sm:$0xff]
        %v698 = vld [vmem:[%s579 + $0x94] sm:$0xff]
        %v699 = vld [vmem:[%s579 + $0x9c] sm:$0xff]
        %v700 = vld [vmem:[%s579 + $0xa4] sm:$0xf]
        %v701 = vld [vmem:[%s579 + $0xa8] sm:$0xff]
        %v702 = vld [vmem:[%s579 + $0xb0] sm:$0xff]
        %v703 = vld [vmem:[%s579 + $0xb8] sm:$0xff]
        %v704 = vld [vmem:[%s579 + $0xc0] sm:$0xf]
        %v705 = vld [vmem:[%s579 + $0xc4] sm:$0xff]
        %v706 = vld [vmem:[%s579 + $0xcc] sm:$0xff]
        %v707 = vld [vmem:[%s579 + $0xd4] sm:$0xff]
        %v708 = vld [vmem:[%s579 + $0xdc] sm:$0xf]
        %v709 = vld [vmem:[%s579 + $0xe0] sm:$0xff]
        %v710 = vld [vmem:[%s579 + $0xe8] sm:$0xff]
        %v711 = vld [vmem:[%s579 + $0xf0] sm:$0xff]
        %v712 = vld [vmem:[%s579 + $0xf8] sm:$0xf]
        %v713 = vld [vmem:[%s579 + $0xfc] sm:$0xff]
        %v714 = vld [vmem:[%s579 + $0x104] sm:$0xff]
        %v715 = vld [vmem:[%s579 + $0x10c] sm:$0xff]
        %v716 = vld [vmem:[%s579 + $0x114] sm:$0xf]
        %v717 = vld [vmem:[%s579 + $0x118] sm:$0xff]
        %v718 = vld [vmem:[%s579 + $0x120] sm:$0xff]
        %v719 = vld [vmem:[%s579 + $0x128] sm:$0xff]
        %v720 = vld [vmem:[%s579 + $0x130] sm:$0xf]
        %v721 = vld [vmem:[%s579 + $0x134] sm:$0xff]
        %v722 = vld [vmem:[%s579 + $0x13c] sm:$0xff]
        %v723 = vld [vmem:[%s579 + $0x144] sm:$0xff]
        %v724 = vld [vmem:[%s579 + $0x14c] sm:$0xf]
        %v725 = vld [vmem:[%s579 + $0x150] sm:$0xff]
        %v726 = vld [vmem:[%s579 + $0x158] sm:$0xff]
        %v727 = vld [vmem:[%s579 + $0x160] sm:$0xff]
        %v728 = vld [vmem:[%s579 + $0x168] sm:$0xf]
        %v729 = vld [vmem:[%s579 + $0x16c] sm:$0xff]
        %v730 = vld [vmem:[%s579 + $0x174] sm:$0xff]
        %v731 = vld [vmem:[%s579 + $0x17c] sm:$0xff]
        %v732 = vld [vmem:[%s579 + $0x184] sm:$0xf]
        %v733 = vld [vmem:[%s579 + $0x188] sm:$0xff]
        %v734 = vld [vmem:[%s579 + $0x190] sm:$0xff]
        %v735 = vld [vmem:[%s579 + $0x198] sm:$0xff]
        %v736 = vld [vmem:[%s579 + $0x1a0] sm:$0xf]
        %v737 = vld [vmem:[%s579 + $0x1a4] sm:$0xff]
        %v738 = vld [vmem:[%s579 + $0x1ac] sm:$0xff]
        %v739 = vld [vmem:[%s579 + $0x1b4] sm:$0xff]
        %v740 = vld [vmem:[%s579 + $0x1bc] sm:$0xf]
        %v741 = vld [vmem:[%s579 + $0x1c0] sm:$0xff]
        %v742 = vld [vmem:[%s579 + $0x1c8] sm:$0xff]
        %v743 = vld [vmem:[%s579 + $0x1d0] sm:$0xff]
        %v744 = vld [vmem:[%s579 + $0x1d8] sm:$0xf]
        %v745 = vld [vmem:[%s579 + $0x1dc] sm:$0xff]
        %v746 = vld [vmem:[%s579 + $0x1e4] sm:$0xff]
        %v747 = vld [vmem:[%s579 + $0x1ec] sm:$0xff]
        %v748 = vld [vmem:[%s579 + $0x1f4] sm:$0xf]
        %v749 = vld [vmem:[%s579 + $0x1f8] sm:$0xff]
        %v750 = vld [vmem:[%s579 + $0x200] sm:$0xff]
        %v751 = vld [vmem:[%s579 + $0x208] sm:$0xff]
        %v752 = vld [vmem:[%s579 + $0x210] sm:$0xf]
        %v753 = vld [vmem:[%s579 + $0x214] sm:$0xff]
        %v754 = vld [vmem:[%s579 + $0x21c] sm:$0xff]
        %v755 = vld [vmem:[%s579 + $0x224] sm:$0xff]
        %v756 = vld [vmem:[%s579 + $0x22c] sm:$0xf]
        %v757 = vld [vmem:[%s579 + $0x230] sm:$0xff]
        %v758 = vld [vmem:[%s579 + $0x238] sm:$0xff]
        %v759 = vld [vmem:[%s579 + $0x240] sm:$0xff]
        %v760 = vld [vmem:[%s579 + $0x248] sm:$0xf]
        %v761 = vld [vmem:[%s579 + $0x24c] sm:$0xff]
        %v762 = vld [vmem:[%s579 + $0x254] sm:$0xff]
        %v763 = vld [vmem:[%s579 + $0x25c] sm:$0xff]
        %v764 = vld [vmem:[%s579 + $0x264] sm:$0xf]
        %v765 = vld [vmem:[%s579 + $0x268] sm:$0xff]
        %v766 = vld [vmem:[%s579 + $0x270] sm:$0xff]
        %v767 = vld [vmem:[%s579 + $0x278] sm:$0xff]
        %v768 = vld [vmem:[%s579 + $0x280] sm:$0xf]
        %v769 = vld [vmem:[%s579 + $0x284] sm:$0xff]
        %v770 = vld [vmem:[%s579 + $0x28c] sm:$0xff]
        %v771 = vld [vmem:[%s579 + $0x294] sm:$0xff]
        %v772 = vld [vmem:[%s579 + $0x29c] sm:$0xf]
        %v773 = vld [vmem:[%s579 + $0x2a0] sm:$0xff]
        %v774 = vld [vmem:[%s579 + $0x2a8] sm:$0xff]
        %v775 = vld [vmem:[%s579 + $0x2b0] sm:$0xff]
        %v776 = vld [vmem:[%s579 + $0x2b8] sm:$0xf]
        %v777 = vld [vmem:[%s579 + $0x2bc] sm:$0xff]
        %v778 = vld [vmem:[%s579 + $0x2c4] sm:$0xff]
        %v779 = vld [vmem:[%s579 + $0x2cc] sm:$0xff]
        %v780 = vld [vmem:[%s579 + $0x2d4] sm:$0xf]
        %v781 = vld [vmem:[%s579 + $0x2d8] sm:$0xff]
        %v782 = vld [vmem:[%s579 + $0x2e0] sm:$0xff]
        %v783 = vld [vmem:[%s579 + $0x2e8] sm:$0xff]
        %v784 = vld [vmem:[%s579 + $0x2f0] sm:$0xf]
        %v785 = vld [vmem:[%s579 + $0x2f4] sm:$0xff]
        %v786 = vld [vmem:[%s579 + $0x2fc] sm:$0xff]
        %v787 = vld [vmem:[%s579 + $0x304] sm:$0xff]
        %v788 = vld [vmem:[%s579 + $0x30c] sm:$0xf]
        %v789 = vld [vmem:[%s579 + $0x310] sm:$0xff]
        %v790 = vld [vmem:[%s579 + $0x318] sm:$0xff]
        %v791 = vld [vmem:[%s579 + $0x320] sm:$0xff]
        %v792 = vld [vmem:[%s579 + $0x328] sm:$0xf]
        %v793 = vld [vmem:[%s579 + $0x32c] sm:$0xff]
        %v794 = vld [vmem:[%s579 + $0x334] sm:$0xff]
        %v795 = vld [vmem:[%s579 + $0x33c] sm:$0xff]
        %v796 = vld [vmem:[%s579 + $0x344] sm:$0xf]
        %v797 = vld [vmem:[%s579 + $0x348] sm:$0xff]
        %v798 = vld [vmem:[%s579 + $0x350] sm:$0xff]
        %v799 = vld [vmem:[%s579 + $0x358] sm:$0xff]
        %v800 = vld [vmem:[%s579 + $0x360] sm:$0xf]
        %v801 = vld [vmem:[%s579 + $0x364] sm:$0xff]
        %v802 = vld [vmem:[%s579 + $0x36c] sm:$0xff]
        %v803 = vld [vmem:[%s579 + $0x374] sm:$0xff]
        %v804 = vld [vmem:[%s579 + $0x37c] sm:$0xf]
        %v805 = vld [vmem:[#allocation5] sm:$0xf]
        %v806 = vld [vmem:[#allocation5 + $0x4] sm:$0xf]
        %v807 = vld [vmem:[#allocation5 + $0x8] sm:$0xf]
        %v808 = vld [vmem:[#allocation5 + $0xc] sm:$0xf]
        %v809 = vld [vmem:[#allocation5 + $0x10] sm:$0xf]
        %v810 = vld [vmem:[#allocation5 + $0x14] sm:$0xf]
        %v811 = vld [vmem:[#allocation5 + $0x18] sm:$0xf]
        %v812 = vld [vmem:[#allocation5 + $0x1c] sm:$0xf]
        %v813 = vld [vmem:[#allocation5 + $0x20] sm:$0xf]
        %v814 = vld [vmem:[#allocation5 + $0x24] sm:$0xf]
        %v815 = vld [vmem:[#allocation5 + $0x28] sm:$0xf]
        %v816 = vld [vmem:[#allocation5 + $0x2c] sm:$0xf]
        %v817 = vld [vmem:[#allocation5 + $0x30] sm:$0xf]
        %v818 = vld [vmem:[#allocation5 + $0x34] sm:$0xf]
        %v819 = vld [vmem:[#allocation5 + $0x38] sm:$0xf]
        %v820 = vld [vmem:[#allocation5 + $0x3c] sm:$0xf]
        %v821 = vld [vmem:[#allocation5 + $0x40] sm:$0xf]
        %v822 = vld [vmem:[#allocation5 + $0x44] sm:$0xf]
        %v823 = vld [vmem:[#allocation5 + $0x48] sm:$0xf]
        %v824 = vld [vmem:[#allocation5 + $0x4c] sm:$0xf]
        %v825 = vld [vmem:[#allocation5 + $0x50] sm:$0xf]
        %v826 = vld [vmem:[#allocation5 + $0x54] sm:$0xf]
        %v827 = vld [vmem:[#allocation5 + $0x58] sm:$0xf]
        %v828 = vld [vmem:[#allocation5 + $0x5c] sm:$0xf]
        %v829 = vld [vmem:[#allocation5 + $0x60] sm:$0xf]
        %v830 = vld [vmem:[#allocation5 + $0x64] sm:$0xf]
        %v831 = vld [vmem:[#allocation5 + $0x68] sm:$0xf]
        %v832 = vld [vmem:[#allocation5 + $0x6c] sm:$0xf]
        %v833 = vld [vmem:[#allocation5 + $0x70] sm:$0xf]
        %v834 = vld [vmem:[#allocation5 + $0x74] sm:$0xf]
        %v835 = vld [vmem:[#allocation5 + $0x78] sm:$0xf]
        %v836 = vld [vmem:[#allocation5 + $0x7c] sm:$0xf]
        %v837 = vld [vmem:[#allocation5 + $0x80] sm:$0xf]
        %v838 = vld [vmem:[#allocation5 + $0x84] sm:$0xf]
        %v839 = vld [vmem:[#allocation5 + $0x88] sm:$0xf]
        %v840 = vld [vmem:[#allocation5 + $0x8c] sm:$0xf]
        %v841 = vld [vmem:[#allocation5 + $0x90] sm:$0xf]
        %v842 = vld [vmem:[#allocation5 + $0x94] sm:$0xf]
        %v843 = vld [vmem:[#allocation5 + $0x98] sm:$0xf]
        %v844 = vld [vmem:[#allocation5 + $0x9c] sm:$0xf]
        %v845 = vld [vmem:[#allocation5 + $0xa0] sm:$0xf]
        %v846 = vld [vmem:[#allocation5 + $0xa4] sm:$0xf]
        %v847 = vld [vmem:[#allocation5 + $0xa8] sm:$0xf]
        %v848 = vld [vmem:[#allocation5 + $0xac] sm:$0xf]
        %v849 = vld [vmem:[#allocation5 + $0xb0] sm:$0xf]
        %v850 = vld [vmem:[#allocation5 + $0xb4] sm:$0xf]
        %v851 = vld [vmem:[#allocation5 + $0xb8] sm:$0xf]
        %v852 = vld [vmem:[#allocation5 + $0xbc] sm:$0xf]
        %v853 = vld [vmem:[#allocation5 + $0xc0] sm:$0xf]
        %v854 = vld [vmem:[#allocation5 + $0xc4] sm:$0xf]
        %v855 = vld [vmem:[#allocation5 + $0xc8] sm:$0xf]
        %v856 = vld [vmem:[#allocation5 + $0xcc] sm:$0xf]
        %v857 = vld [vmem:[#allocation5 + $0xd0] sm:$0xf]
        %v858 = vld [vmem:[#allocation5 + $0xd4] sm:$0xf]
        %v859 = vld [vmem:[#allocation5 + $0xd8] sm:$0xf]
        %v860 = vld [vmem:[#allocation5 + $0xdc] sm:$0xf]
        %v861 = vld [vmem:[#allocation5 + $0xe0] sm:$0xf]
        %v862 = vld [vmem:[#allocation5 + $0xe4] sm:$0xf]
        %v863 = vld [vmem:[#allocation5 + $0xe8] sm:$0xf]
        %v864 = vld [vmem:[#allocation5 + $0xec] sm:$0xf]
        %v865 = vld [vmem:[#allocation5 + $0xf0] sm:$0xf]
        %v866 = vld [vmem:[#allocation5 + $0xf4] sm:$0xf]
        %v867 = vld [vmem:[#allocation5 + $0xf8] sm:$0xf]
        %v868 = vld [vmem:[#allocation5 + $0xfc] sm:$0xf]
        %v869 = vld [vmem:[#allocation5 + $0x100] sm:$0xf]
        %v870 = vld [vmem:[#allocation5 + $0x104] sm:$0xf]
        %v871 = vld [vmem:[#allocation5 + $0x108] sm:$0xf]
        %v872 = vld [vmem:[#allocation5 + $0x10c] sm:$0xf]
        %v873 = vld [vmem:[#allocation5 + $0x110] sm:$0xf]
        %v874 = vld [vmem:[#allocation5 + $0x114] sm:$0xf]
        %v875 = vld [vmem:[#allocation5 + $0x118] sm:$0xf]
        %v876 = vld [vmem:[#allocation5 + $0x11c] sm:$0xf]
        %v877 = vld [vmem:[#allocation5 + $0x120] sm:$0xf]
        %v878 = vld [vmem:[#allocation5 + $0x124] sm:$0xf]
        %v879 = vld [vmem:[#allocation5 + $0x128] sm:$0xf]
        %v880 = vld [vmem:[#allocation5 + $0x12c] sm:$0xf]
        %v881 = vld [vmem:[#allocation5 + $0x130] sm:$0xf]
        %v882 = vld [vmem:[#allocation5 + $0x134] sm:$0xf]
        %v883 = vld [vmem:[#allocation5 + $0x138] sm:$0xf]
        %v884 = vld [vmem:[#allocation5 + $0x13c] sm:$0xf]
        %v885 = vld [vmem:[#allocation5 + $0x140] sm:$0xf]
        %v886 = vld [vmem:[#allocation5 + $0x144] sm:$0xf]
        %v887 = vld [vmem:[#allocation5 + $0x148] sm:$0xf]
        %v888 = vld [vmem:[#allocation5 + $0x14c] sm:$0xf]
        %v889 = vld [vmem:[#allocation5 + $0x150] sm:$0xf]
        %v890 = vld [vmem:[#allocation5 + $0x154] sm:$0xf]
        %v891 = vld [vmem:[#allocation5 + $0x158] sm:$0xf]
        %v892 = vld [vmem:[#allocation5 + $0x15c] sm:$0xf]
        %v893 = vld [vmem:[#allocation5 + $0x160] sm:$0xf]
        %v894 = vld [vmem:[#allocation5 + $0x164] sm:$0xf]
        %v895 = vld [vmem:[#allocation5 + $0x168] sm:$0xf]
        %v896 = vld [vmem:[#allocation5 + $0x16c] sm:$0xf]
        %v897 = vld [vmem:[#allocation5 + $0x170] sm:$0xf]
        %v898 = vld [vmem:[#allocation5 + $0x174] sm:$0xf]
        %v899 = vld [vmem:[#allocation5 + $0x178] sm:$0xf]
        %v900 = vld [vmem:[#allocation5 + $0x17c] sm:$0xf]
        %v901 = vld [vmem:[#allocation5 + $0x180] sm:$0xf]
        %v902 = vld [vmem:[#allocation5 + $0x184] sm:$0xf]
        %v903 = vld [vmem:[#allocation5 + $0x188] sm:$0xf]
        %v904 = vld [vmem:[#allocation5 + $0x18c] sm:$0xf]
        %v905 = vld [vmem:[#allocation5 + $0x190] sm:$0xf]
        %v906 = vld [vmem:[#allocation5 + $0x194] sm:$0xf]
        %v907 = vld [vmem:[#allocation5 + $0x198] sm:$0xf]
        %v908 = vld [vmem:[#allocation5 + $0x19c] sm:$0xf]
        %v909 = vld [vmem:[#allocation5 + $0x1a0] sm:$0xf]
        %v910 = vld [vmem:[#allocation5 + $0x1a4] sm:$0xf]
        %v911 = vld [vmem:[#allocation5 + $0x1a8] sm:$0xf]
        %v912 = vld [vmem:[#allocation5 + $0x1ac] sm:$0xf]
        %v913 = vld [vmem:[#allocation5 + $0x1b0] sm:$0xf]
        %v914 = vld [vmem:[#allocation5 + $0x1b4] sm:$0xf]
        %v915 = vld [vmem:[#allocation5 + $0x1b8] sm:$0xf]
        %v916 = vld [vmem:[#allocation5 + $0x1bc] sm:$0xf]
        %v917 = vld [vmem:[#allocation7] sm:$0x1]
        %v919 = vlaneseq
        %v920 = vshrl.u32 %v919, 7
        %v921 = vsub.s32 0, %v920
        %v922 = vrot.slane %v917, %v921
        %v1052 = vunpack.c.l.b16 %v677
        %v1053 = vunpack.c.h.b16 %v677
        %v1054 = vunpack.c.l.b16 %v678
        %v1055 = vunpack.c.h.b16 %v678
        %v1056 = vunpack.c.l.b16 %v679
        %v1057 = vunpack.c.h.b16 %v679
        %v1058 = vunpack.c.l.b16 %v680
        %v1059 = vunpack.c.l.b16 %v681
        %v1060 = vunpack.c.h.b16 %v681
        %v1061 = vunpack.c.l.b16 %v682
        %v1062 = vunpack.c.h.b16 %v682
        %v1063 = vunpack.c.l.b16 %v683
        %v1064 = vunpack.c.h.b16 %v683
        %v1065 = vunpack.c.l.b16 %v684
        %v1066 = vunpack.c.l.b16 %v685
        %v1067 = vunpack.c.h.b16 %v685
        %v1068 = vunpack.c.l.b16 %v686
        %v1069 = vunpack.c.h.b16 %v686
        %v1070 = vunpack.c.l.b16 %v687
        %v1071 = vunpack.c.h.b16 %v687
        %v1072 = vunpack.c.l.b16 %v688
        %v1073 = vunpack.c.l.b16 %v689
        %v1074 = vunpack.c.h.b16 %v689
        %v1075 = vunpack.c.l.b16 %v690
        %v1076 = vunpack.c.h.b16 %v690
        %v1077 = vunpack.c.l.b16 %v691
        %v1078 = vunpack.c.h.b16 %v691
        %v1079 = vunpack.c.l.b16 %v692
        %v1080 = vunpack.c.l.b16 %v693
        %v1081 = vunpack.c.h.b16 %v693
        %v1082 = vunpack.c.l.b16 %v694
        %v1083 = vunpack.c.h.b16 %v694
        %v1084 = vunpack.c.l.b16 %v695
        %v1085 = vunpack.c.h.b16 %v695
        %v1086 = vunpack.c.l.b16 %v696
        %v1087 = vunpack.c.l.b16 %v697
        %v1088 = vunpack.c.h.b16 %v697
        %v1089 = vunpack.c.l.b16 %v698
        %v1090 = vunpack.c.h.b16 %v698
        %v1091 = vunpack.c.l.b16 %v699
        %v1092 = vunpack.c.h.b16 %v699
        %v1093 = vunpack.c.l.b16 %v700
        %v1094 = vunpack.c.l.b16 %v701
        %v1095 = vunpack.c.h.b16 %v701
        %v1096 = vunpack.c.l.b16 %v702
        %v1097 = vunpack.c.h.b16 %v702
        %v1098 = vunpack.c.l.b16 %v703
        %v1099 = vunpack.c.h.b16 %v703
        %v1100 = vunpack.c.l.b16 %v704
        %v1101 = vunpack.c.l.b16 %v705
        %v1102 = vunpack.c.h.b16 %v705
        %v1103 = vunpack.c.l.b16 %v706
        %v1104 = vunpack.c.h.b16 %v706
        %v1105 = vunpack.c.l.b16 %v707
        %v1106 = vunpack.c.h.b16 %v707
        %v1107 = vunpack.c.l.b16 %v708
        %v1108 = vunpack.c.l.b16 %v709
        %v1109 = vunpack.c.h.b16 %v709
        %v1110 = vunpack.c.l.b16 %v710
        %v1111 = vunpack.c.h.b16 %v710
        %v1112 = vunpack.c.l.b16 %v711
        %v1113 = vunpack.c.h.b16 %v711
        %v1114 = vunpack.c.l.b16 %v712
        %v1115 = vunpack.c.l.b16 %v713
        %v1116 = vunpack.c.h.b16 %v713
        %v1117 = vunpack.c.l.b16 %v714
        %v1118 = vunpack.c.h.b16 %v714
        %v1119 = vunpack.c.l.b16 %v715
        %v1120 = vunpack.c.h.b16 %v715
        %v1121 = vunpack.c.l.b16 %v716
        %v1122 = vunpack.c.l.b16 %v717
        %v1123 = vunpack.c.h.b16 %v717
        %v1124 = vunpack.c.l.b16 %v718
        %v1125 = vunpack.c.h.b16 %v718
        %v1126 = vunpack.c.l.b16 %v719
        %v1127 = vunpack.c.h.b16 %v719
        %v1128 = vunpack.c.l.b16 %v720
        %v1129 = vunpack.c.l.b16 %v721
        %v1130 = vunpack.c.h.b16 %v721
        %v1131 = vunpack.c.l.b16 %v722
        %v1132 = vunpack.c.h.b16 %v722
        %v1133 = vunpack.c.l.b16 %v723
        %v1134 = vunpack.c.h.b16 %v723
        %v1135 = vunpack.c.l.b16 %v724
        %v1136 = vunpack.c.l.b16 %v725
        %v1137 = vunpack.c.h.b16 %v725
        %v1138 = vunpack.c.l.b16 %v726
        %v1139 = vunpack.c.h.b16 %v726
        %v1140 = vunpack.c.l.b16 %v727
        %v1141 = vunpack.c.h.b16 %v727
        %v1142 = vunpack.c.l.b16 %v728
        %v1143 = vunpack.c.l.b16 %v729
        %v1144 = vunpack.c.h.b16 %v729
        %v1145 = vunpack.c.l.b16 %v730
        %v1146 = vunpack.c.h.b16 %v730
        %v1147 = vunpack.c.l.b16 %v731
        %v1148 = vunpack.c.h.b16 %v731
        %v1149 = vunpack.c.l.b16 %v732
        %v1150 = vunpack.c.l.b16 %v733
        %v1151 = vunpack.c.h.b16 %v733
        %v1152 = vunpack.c.l.b16 %v734
        %v1153 = vunpack.c.h.b16 %v734
        %v1154 = vunpack.c.l.b16 %v735
        %v1155 = vunpack.c.h.b16 %v735
        %v1156 = vunpack.c.l.b16 %v736
        %v1157 = vunpack.c.l.b16 %v737
        %v1158 = vunpack.c.h.b16 %v737
        %v1159 = vunpack.c.l.b16 %v738
        %v1160 = vunpack.c.h.b16 %v738
        %v1161 = vunpack.c.l.b16 %v739
        %v1162 = vunpack.c.h.b16 %v739
        %v1163 = vunpack.c.l.b16 %v740
        %v1164 = vunpack.c.l.b16 %v741
        %v1165 = vunpack.c.h.b16 %v741
        %v1166 = vunpack.c.l.b16 %v742
        %v1167 = vunpack.c.h.b16 %v742
        %v1168 = vunpack.c.l.b16 %v743
        %v1169 = vunpack.c.h.b16 %v743
        %v1170 = vunpack.c.l.b16 %v744
        %v1171 = vunpack.c.l.b16 %v745
        %v1172 = vunpack.c.h.b16 %v745
        %v1173 = vunpack.c.l.b16 %v746
        %v1174 = vunpack.c.h.b16 %v746
        %v1175 = vunpack.c.l.b16 %v747
        %v1176 = vunpack.c.h.b16 %v747
        %v1177 = vunpack.c.l.b16 %v748
        %v1178 = vunpack.c.l.b16 %v749
        %v1179 = vunpack.c.h.b16 %v749
        %v1180 = vunpack.c.l.b16 %v750
        %v1181 = vunpack.c.h.b16 %v750
        %v1182 = vunpack.c.l.b16 %v751
        %v1183 = vunpack.c.h.b16 %v751
        %v1184 = vunpack.c.l.b16 %v752
        %v1185 = vunpack.c.l.b16 %v753
        %v1186 = vunpack.c.h.b16 %v753
        %v1187 = vunpack.c.l.b16 %v754
        %v1188 = vunpack.c.h.b16 %v754
        %v1189 = vunpack.c.l.b16 %v755
        %v1190 = vunpack.c.h.b16 %v755
        %v1191 = vunpack.c.l.b16 %v756
        %v1192 = vunpack.c.l.b16 %v757
        %v1193 = vunpack.c.h.b16 %v757
        %v1194 = vunpack.c.l.b16 %v758
        %v1195 = vunpack.c.h.b16 %v758
        %v1196 = vunpack.c.l.b16 %v759
        %v1197 = vunpack.c.h.b16 %v759
        %v1198 = vunpack.c.l.b16 %v760
        %v1199 = vunpack.c.l.b16 %v761
        %v1200 = vunpack.c.h.b16 %v761
        %v1201 = vunpack.c.l.b16 %v762
        %v1202 = vunpack.c.h.b16 %v762
        %v1203 = vunpack.c.l.b16 %v763
        %v1204 = vunpack.c.h.b16 %v763
        %v1205 = vunpack.c.l.b16 %v764
        %v1206 = vunpack.c.l.b16 %v765
        %v1207 = vunpack.c.h.b16 %v765
        %v1208 = vunpack.c.l.b16 %v766
        %v1209 = vunpack.c.h.b16 %v766
        %v1210 = vunpack.c.l.b16 %v767
        %v1211 = vunpack.c.h.b16 %v767
        %v1212 = vunpack.c.l.b16 %v768
        %v1213 = vunpack.c.l.b16 %v769
        %v1214 = vunpack.c.h.b16 %v769
        %v1215 = vunpack.c.l.b16 %v770
        %v1216 = vunpack.c.h.b16 %v770
        %v1217 = vunpack.c.l.b16 %v771
        %v1218 = vunpack.c.h.b16 %v771
        %v1219 = vunpack.c.l.b16 %v772
        %v1220 = vunpack.c.l.b16 %v773
        %v1221 = vunpack.c.h.b16 %v773
        %v1222 = vunpack.c.l.b16 %v774
        %v1223 = vunpack.c.h.b16 %v774
        %v1224 = vunpack.c.l.b16 %v775
        %v1225 = vunpack.c.h.b16 %v775
        %v1226 = vunpack.c.l.b16 %v776
        %v1227 = vunpack.c.l.b16 %v777
        %v1228 = vunpack.c.h.b16 %v777
        %v1229 = vunpack.c.l.b16 %v778
        %v1230 = vunpack.c.h.b16 %v778
        %v1231 = vunpack.c.l.b16 %v779
        %v1232 = vunpack.c.h.b16 %v779
        %v1233 = vunpack.c.l.b16 %v780
        %v1234 = vunpack.c.l.b16 %v781
        %v1235 = vunpack.c.h.b16 %v781
        %v1236 = vunpack.c.l.b16 %v782
        %v1237 = vunpack.c.h.b16 %v782
        %v1238 = vunpack.c.l.b16 %v783
        %v1239 = vunpack.c.h.b16 %v783
        %v1240 = vunpack.c.l.b16 %v784
        %v1241 = vunpack.c.l.b16 %v785
        %v1242 = vunpack.c.h.b16 %v785
        %v1243 = vunpack.c.l.b16 %v786
        %v1244 = vunpack.c.h.b16 %v786
        %v1245 = vunpack.c.l.b16 %v787
        %v1246 = vunpack.c.h.b16 %v787
        %v1247 = vunpack.c.l.b16 %v788
        %v1248 = vunpack.c.l.b16 %v789
        %v1249 = vunpack.c.h.b16 %v789
        %v1250 = vunpack.c.l.b16 %v790
        %v1251 = vunpack.c.h.b16 %v790
        %v1252 = vunpack.c.l.b16 %v791
        %v1253 = vunpack.c.h.b16 %v791
        %v1254 = vunpack.c.l.b16 %v792
        %v1255 = vunpack.c.l.b16 %v793
        %v1256 = vunpack.c.h.b16 %v793
        %v1257 = vunpack.c.l.b16 %v794
        %v1258 = vunpack.c.h.b16 %v794
        %v1259 = vunpack.c.l.b16 %v795
        %v1260 = vunpack.c.h.b16 %v795
        %v1261 = vunpack.c.l.b16 %v796
        %v1262 = vunpack.c.l.b16 %v797
        %v1263 = vunpack.c.h.b16 %v797
        %v1264 = vunpack.c.l.b16 %v798
        %v1265 = vunpack.c.h.b16 %v798
        %v1266 = vunpack.c.l.b16 %v799
        %v1267 = vunpack.c.h.b16 %v799
        %v1268 = vunpack.c.l.b16 %v800
        %v1269 = vunpack.c.l.b16 %v801
        %v1270 = vunpack.c.h.b16 %v801
        %v1271 = vunpack.c.l.b16 %v802
        %v1272 = vunpack.c.h.b16 %v802
        %v1273 = vunpack.c.l.b16 %v803
        %v1274 = vunpack.c.h.b16 %v803
        %v1275 = vunpack.c.l.b16 %v804
        %v1276 = vpack.c.b16 %v1059, %v1052
        %v1277 = vpack.c.b16 %v1060, %v1053
        %v1278 = vpack.c.b16 %v1061, %v1054
        %v1279 = vpack.c.b16 %v1062, %v1055
        %v1280 = vpack.c.b16 %v1063, %v1056
        %v1281 = vpack.c.b16 %v1064, %v1057
        %v1282 = vpack.c.b16 %v1065, %v1058
        %v1283 = vpack.c.b16 %v1073, %v1066
        %v1284 = vpack.c.b16 %v1074, %v1067
        %v1285 = vpack.c.b16 %v1075, %v1068
        %v1286 = vpack.c.b16 %v1076, %v1069
        %v1287 = vpack.c.b16 %v1077, %v1070
        %v1288 = vpack.c.b16 %v1078, %v1071
        %v1289 = vpack.c.b16 %v1079, %v1072
        %v1290 = vpack.c.b16 %v1087, %v1080
        %v1291 = vpack.c.b16 %v1088, %v1081
        %v1292 = vpack.c.b16 %v1089, %v1082
        %v1293 = vpack.c.b16 %v1090, %v1083
        %v1294 = vpack.c.b16 %v1091, %v1084
        %v1295 = vpack.c.b16 %v1092, %v1085
        %v1296 = vpack.c.b16 %v1093, %v1086
        %v1297 = vpack.c.b16 %v1101, %v1094
        %v1298 = vpack.c.b16 %v1102, %v1095
        %v1299 = vpack.c.b16 %v1103, %v1096
        %v1300 = vpack.c.b16 %v1104, %v1097
        %v1301 = vpack.c.b16 %v1105, %v1098
        %v1302 = vpack.c.b16 %v1106, %v1099
        %v1303 = vpack.c.b16 %v1107, %v1100
        %v1304 = vpack.c.b16 %v1115, %v1108
        %v1305 = vpack.c.b16 %v1116, %v1109
        %v1306 = vpack.c.b16 %v1117, %v1110
        %v1307 = vpack.c.b16 %v1118, %v1111
        %v1308 = vpack.c.b16 %v1119, %v1112
        %v1309 = vpack.c.b16 %v1120, %v1113
        %v1310 = vpack.c.b16 %v1121, %v1114
        %v1311 = vpack.c.b16 %v1129, %v1122
        %v1312 = vpack.c.b16 %v1130, %v1123
        %v1313 = vpack.c.b16 %v1131, %v1124
        %v1314 = vpack.c.b16 %v1132, %v1125
        %v1315 = vpack.c.b16 %v1133, %v1126
        %v1316 = vpack.c.b16 %v1134, %v1127
        %v1317 = vpack.c.b16 %v1135, %v1128
        %v1318 = vpack.c.b16 %v1143, %v1136
        %v1319 = vpack.c.b16 %v1144, %v1137
        %v1320 = vpack.c.b16 %v1145, %v1138
        %v1321 = vpack.c.b16 %v1146, %v1139
        %v1322 = vpack.c.b16 %v1147, %v1140
        %v1323 = vpack.c.b16 %v1148, %v1141
        %v1324 = vpack.c.b16 %v1149, %v1142
        %v1325 = vpack.c.b16 %v1157, %v1150
        %v1326 = vpack.c.b16 %v1158, %v1151
        %v1327 = vpack.c.b16 %v1159, %v1152
        %v1328 = vpack.c.b16 %v1160, %v1153
        %v1329 = vpack.c.b16 %v1161, %v1154
        %v1330 = vpack.c.b16 %v1162, %v1155
        %v1331 = vpack.c.b16 %v1163, %v1156
        %v1332 = vpack.c.b16 %v1171, %v1164
        %v1333 = vpack.c.b16 %v1172, %v1165
        %v1334 = vpack.c.b16 %v1173, %v1166
        %v1335 = vpack.c.b16 %v1174, %v1167
        %v1336 = vpack.c.b16 %v1175, %v1168
        %v1337 = vpack.c.b16 %v1176, %v1169
        %v1338 = vpack.c.b16 %v1177, %v1170
        %v1339 = vpack.c.b16 %v1185, %v1178
        %v1340 = vpack.c.b16 %v1186, %v1179
        %v1341 = vpack.c.b16 %v1187, %v1180
        %v1342 = vpack.c.b16 %v1188, %v1181
        %v1343 = vpack.c.b16 %v1189, %v1182
        %v1344 = vpack.c.b16 %v1190, %v1183
        %v1345 = vpack.c.b16 %v1191, %v1184
        %v1346 = vpack.c.b16 %v1199, %v1192
        %v1347 = vpack.c.b16 %v1200, %v1193
        %v1348 = vpack.c.b16 %v1201, %v1194
        %v1349 = vpack.c.b16 %v1202, %v1195
        %v1350 = vpack.c.b16 %v1203, %v1196
        %v1351 = vpack.c.b16 %v1204, %v1197
        %v1352 = vpack.c.b16 %v1205, %v1198
        %v1353 = vpack.c.b16 %v1213, %v1206
        %v1354 = vpack.c.b16 %v1214, %v1207
        %v1355 = vpack.c.b16 %v1215, %v1208
        %v1356 = vpack.c.b16 %v1216, %v1209
        %v1357 = vpack.c.b16 %v1217, %v1210
        %v1358 = vpack.c.b16 %v1218, %v1211
        %v1359 = vpack.c.b16 %v1219, %v1212
        %v1360 = vpack.c.b16 %v1227, %v1220
        %v1361 = vpack.c.b16 %v1228, %v1221
        %v1362 = vpack.c.b16 %v1229, %v1222
        %v1363 = vpack.c.b16 %v1230, %v1223
        %v1364 = vpack.c.b16 %v1231, %v1224
        %v1365 = vpack.c.b16 %v1232, %v1225
        %v1366 = vpack.c.b16 %v1233, %v1226
        %v1367 = vpack.c.b16 %v1241, %v1234
        %v1368 = vpack.c.b16 %v1242, %v1235
        %v1369 = vpack.c.b16 %v1243, %v1236
        %v1370 = vpack.c.b16 %v1244, %v1237
        %v1371 = vpack.c.b16 %v1245, %v1238
        %v1372 = vpack.c.b16 %v1246, %v1239
        %v1373 = vpack.c.b16 %v1247, %v1240
        %v1374 = vpack.c.b16 %v1255, %v1248
        %v1375 = vpack.c.b16 %v1256, %v1249
        %v1376 = vpack.c.b16 %v1257, %v1250
        %v1377 = vpack.c.b16 %v1258, %v1251
        %v1378 = vpack.c.b16 %v1259, %v1252
        %v1379 = vpack.c.b16 %v1260, %v1253
        %v1380 = vpack.c.b16 %v1261, %v1254
        %v1381 = vpack.c.b16 %v1269, %v1262
        %v1382 = vpack.c.b16 %v1270, %v1263
        %v1383 = vpack.c.b16 %v1271, %v1264
        %v1384 = vpack.c.b16 %v1272, %v1265
        %v1385 = vpack.c.b16 %v1273, %v1266
        %v1386 = vpack.c.b16 %v1274, %v1267
        %v1387 = vpack.c.b16 %v1275, %v1268
        %v1612 = vunpack.c.l.b16 %v805
        %v1613 = vunpack.c.l.b16 %v806
        %v1614 = vunpack.c.l.b16 %v807
        %v1615 = vunpack.c.l.b16 %v808
        %v1616 = vunpack.c.l.b16 %v809
        %v1617 = vunpack.c.l.b16 %v810
        %v1618 = vunpack.c.l.b16 %v811
        %v1619 = vunpack.c.l.b16 %v812
        %v1620 = vunpack.c.l.b16 %v813
        %v1621 = vunpack.c.l.b16 %v814
        %v1622 = vunpack.c.l.b16 %v815
        %v1623 = vunpack.c.l.b16 %v816
        %v1624 = vunpack.c.l.b16 %v817
        %v1625 = vunpack.c.l.b16 %v818
        %v1626 = vunpack.c.l.b16 %v819
        %v1627 = vunpack.c.l.b16 %v820
        %v1628 = vunpack.c.l.b16 %v821
        %v1629 = vunpack.c.l.b16 %v822
        %v1630 = vunpack.c.l.b16 %v823
        %v1631 = vunpack.c.l.b16 %v824
        %v1632 = vunpack.c.l.b16 %v825
        %v1633 = vunpack.c.l.b16 %v826
        %v1634 = vunpack.c.l.b16 %v827
        %v1635 = vunpack.c.l.b16 %v828
        %v1636 = vunpack.c.l.b16 %v829
        %v1637 = vunpack.c.l.b16 %v830
        %v1638 = vunpack.c.l.b16 %v831
        %v1639 = vunpack.c.l.b16 %v832
        %v1640 = vunpack.c.l.b16 %v833
        %v1641 = vunpack.c.l.b16 %v834
        %v1642 = vunpack.c.l.b16 %v835
        %v1643 = vunpack.c.l.b16 %v836
        %v1644 = vunpack.c.l.b16 %v837
        %v1645 = vunpack.c.l.b16 %v838
        %v1646 = vunpack.c.l.b16 %v839
        %v1647 = vunpack.c.l.b16 %v840
        %v1648 = vunpack.c.l.b16 %v841
        %v1649 = vunpack.c.l.b16 %v842
        %v1650 = vunpack.c.l.b16 %v843
        %v1651 = vunpack.c.l.b16 %v844
        %v1652 = vunpack.c.l.b16 %v845
        %v1653 = vunpack.c.l.b16 %v846
        %v1654 = vunpack.c.l.b16 %v847
        %v1655 = vunpack.c.l.b16 %v848
        %v1656 = vunpack.c.l.b16 %v849
        %v1657 = vunpack.c.l.b16 %v850
        %v1658 = vunpack.c.l.b16 %v851
        %v1659 = vunpack.c.l.b16 %v852
        %v1660 = vunpack.c.l.b16 %v853
        %v1661 = vunpack.c.l.b16 %v854
        %v1662 = vunpack.c.l.b16 %v855
        %v1663 = vunpack.c.l.b16 %v856
        %v1664 = vunpack.c.l.b16 %v857
        %v1665 = vunpack.c.l.b16 %v858
        %v1666 = vunpack.c.l.b16 %v859
        %v1667 = vunpack.c.l.b16 %v860
        %v1668 = vunpack.c.l.b16 %v861
        %v1669 = vunpack.c.l.b16 %v862
        %v1670 = vunpack.c.l.b16 %v863
        %v1671 = vunpack.c.l.b16 %v864
        %v1672 = vunpack.c.l.b16 %v865
        %v1673 = vunpack.c.l.b16 %v866
        %v1674 = vunpack.c.l.b16 %v867
        %v1675 = vunpack.c.l.b16 %v868
        %v1676 = vunpack.c.l.b16 %v869
        %v1677 = vunpack.c.l.b16 %v870
        %v1678 = vunpack.c.l.b16 %v871
        %v1679 = vunpack.c.l.b16 %v872
        %v1680 = vunpack.c.l.b16 %v873
        %v1681 = vunpack.c.l.b16 %v874
        %v1682 = vunpack.c.l.b16 %v875
        %v1683 = vunpack.c.l.b16 %v876
        %v1684 = vunpack.c.l.b16 %v877
        %v1685 = vunpack.c.l.b16 %v878
        %v1686 = vunpack.c.l.b16 %v879
        %v1687 = vunpack.c.l.b16 %v880
        %v1688 = vunpack.c.l.b16 %v881
        %v1689 = vunpack.c.l.b16 %v882
        %v1690 = vunpack.c.l.b16 %v883
        %v1691 = vunpack.c.l.b16 %v884
        %v1692 = vunpack.c.l.b16 %v885
        %v1693 = vunpack.c.l.b16 %v886
        %v1694 = vunpack.c.l.b16 %v887
        %v1695 = vunpack.c.l.b16 %v888
        %v1696 = vunpack.c.l.b16 %v889
        %v1697 = vunpack.c.l.b16 %v890
        %v1698 = vunpack.c.l.b16 %v891
        %v1699 = vunpack.c.l.b16 %v892
        %v1700 = vunpack.c.l.b16 %v893
        %v1701 = vunpack.c.l.b16 %v894
        %v1702 = vunpack.c.l.b16 %v895
        %v1703 = vunpack.c.l.b16 %v896
        %v1704 = vunpack.c.l.b16 %v897
        %v1705 = vunpack.c.l.b16 %v898
        %v1706 = vunpack.c.l.b16 %v899
        %v1707 = vunpack.c.l.b16 %v900
        %v1708 = vunpack.c.l.b16 %v901
        %v1709 = vunpack.c.l.b16 %v902
        %v1710 = vunpack.c.l.b16 %v903
        %v1711 = vunpack.c.l.b16 %v904
        %v1712 = vunpack.c.l.b16 %v905
        %v1713 = vunpack.c.l.b16 %v906
        %v1714 = vunpack.c.l.b16 %v907
        %v1715 = vunpack.c.l.b16 %v908
        %v1716 = vunpack.c.l.b16 %v909
        %v1717 = vunpack.c.l.b16 %v910
        %v1718 = vunpack.c.l.b16 %v911
        %v1719 = vunpack.c.l.b16 %v912
        %v1720 = vunpack.c.l.b16 %v913
        %v1721 = vunpack.c.l.b16 %v914
        %v1722 = vunpack.c.l.b16 %v915
        %v1723 = vunpack.c.l.b16 %v916
        %v1724 = vpack.c.b16 %v1613, %v1612
        %v1725 = vpack.c.b16 %v1615, %v1614
        %v1726 = vpack.c.b16 %v1617, %v1616
        %v1727 = vpack.c.b16 %v1619, %v1618
        %v1728 = vpack.c.b16 %v1621, %v1620
        %v1729 = vpack.c.b16 %v1623, %v1622
        %v1730 = vpack.c.b16 %v1625, %v1624
        %v1731 = vpack.c.b16 %v1627, %v1626
        %v1732 = vpack.c.b16 %v1629, %v1628
        %v1733 = vpack.c.b16 %v1631, %v1630
        %v1734 = vpack.c.b16 %v1633, %v1632
        %v1735 = vpack.c.b16 %v1635, %v1634
        %v1736 = vpack.c.b16 %v1637, %v1636
        %v1737 = vpack.c.b16 %v1639, %v1638
        %v1738 = vpack.c.b16 %v1641, %v1640
        %v1739 = vpack.c.b16 %v1643, %v1642
        %v1740 = vpack.c.b16 %v1645, %v1644
        %v1741 = vpack.c.b16 %v1647, %v1646
        %v1742 = vpack.c.b16 %v1649, %v1648
        %v1743 = vpack.c.b16 %v1651, %v1650
        %v1744 = vpack.c.b16 %v1653, %v1652
        %v1745 = vpack.c.b16 %v1655, %v1654
        %v1746 = vpack.c.b16 %v1657, %v1656
        %v1747 = vpack.c.b16 %v1659, %v1658
        %v1748 = vpack.c.b16 %v1661, %v1660
        %v1749 = vpack.c.b16 %v1663, %v1662
        %v1750 = vpack.c.b16 %v1665, %v1664
        %v1751 = vpack.c.b16 %v1667, %v1666
        %v1752 = vpack.c.b16 %v1669, %v1668
        %v1753 = vpack.c.b16 %v1671, %v1670
        %v1754 = vpack.c.b16 %v1673, %v1672
        %v1755 = vpack.c.b16 %v1675, %v1674
        %v1756 = vpack.c.b16 %v1677, %v1676
        %v1757 = vpack.c.b16 %v1679, %v1678
        %v1758 = vpack.c.b16 %v1681, %v1680
        %v1759 = vpack.c.b16 %v1683, %v1682
        %v1760 = vpack.c.b16 %v1685, %v1684
        %v1761 = vpack.c.b16 %v1687, %v1686
        %v1762 = vpack.c.b16 %v1689, %v1688
        %v1763 = vpack.c.b16 %v1691, %v1690
        %v1764 = vpack.c.b16 %v1693, %v1692
        %v1765 = vpack.c.b16 %v1695, %v1694
        %v1766 = vpack.c.b16 %v1697, %v1696
        %v1767 = vpack.c.b16 %v1699, %v1698
        %v1768 = vpack.c.b16 %v1701, %v1700
        %v1769 = vpack.c.b16 %v1703, %v1702
        %v1770 = vpack.c.b16 %v1705, %v1704
        %v1771 = vpack.c.b16 %v1707, %v1706
        %v1772 = vpack.c.b16 %v1709, %v1708
        %v1773 = vpack.c.b16 %v1711, %v1710
        %v1774 = vpack.c.b16 %v1713, %v1712
        %v1775 = vpack.c.b16 %v1715, %v1714
        %v1776 = vpack.c.b16 %v1717, %v1716
        %v1777 = vpack.c.b16 %v1719, %v1718
        %v1778 = vpack.c.b16 %v1721, %v1720
        %v1779 = vpack.c.b16 %v1723, %v1722
        %1836 = vmatprep.subr.bf16.mxu0 0
        %1837 = vmatpush1.bf16.msra.mxu0 %v1724
        %1838 = vmatprep.subr.bf16.mxu0 0
        %1839 = vmatpush1.bf16.msra.mxu0 %v1725
        %1840 = vmatprep.subr.bf16.mxu0 0
        %1841 = vmatpush1.bf16.msra.mxu0 %v1726
        %1842 = vmatprep.subr.bf16.mxu0 0
        %1843 = vmatpush1.bf16.msra.mxu0 %v1727
        %1844 = vmatprep.subr.bf16.mxu0 0
        %1845 = vmatpush1.bf16.msra.mxu0 %v1728
        %1846 = vmatprep.subr.bf16.mxu0 0
        %1847 = vmatpush1.bf16.msra.mxu0 %v1729
        %1848 = vmatprep.subr.bf16.mxu0 0
        %1849 = vmatpush1.bf16.msra.mxu0 %v1730
        %1850 = vmatprep.subr.bf16.mxu0 0
        %1851 = vmatpush1.bf16.msra.mxu0 %v1731
        %1852 = vmatprep.subr.bf16.mxu0 0
        %1853 = vmatpush1.bf16.msra.mxu0 %v1732
        %1854 = vmatprep.subr.bf16.mxu0 0
        %1855 = vmatpush1.bf16.msra.mxu0 %v1733
        %1856 = vmatprep.subr.bf16.mxu0 0
        %1857 = vmatpush1.bf16.msra.mxu0 %v1734
        %1858 = vmatprep.subr.bf16.mxu0 0
        %1859 = vmatpush1.bf16.msra.mxu0 %v1735
        %1860 = vmatprep.subr.bf16.mxu0 0
        %1861 = vmatpush1.bf16.msra.mxu0 %v1736
        %1862 = vmatprep.subr.bf16.mxu0 0
        %1863 = vmatpush1.bf16.msra.mxu0 %v1737
        %1864 = vmatprep.subr.bf16.mxu0 0
        %1865 = vmatpush1.bf16.msra.mxu0 %v1738
        %1866 = vmatprep.subr.bf16.mxu0 0
        %1867 = vmatpush1.bf16.msra.mxu0 %v1739
        %1868 = vmatprep.mubr.bf16.mxu0 %v1277
        %1869 = vmatmul.mubr.bf16.gmra.mrb[0].mxu0 %v1276
        %v1870 = vpop.f32.mrb[0].mxu0
        %v1871 = vadd.f32 %v922, %v1870
        %v1872 = vpop.f32.mrb[0].mxu0
        %v1873 = vpop.f32.mrb[0].mxu0
        %v1874 = vadd.f32 %v922, %v1873
        %v1875 = vpop.f32.mrb[0].mxu0
        %1876 = vmatprep.mubr.bf16.mxu0 %v1284
        %1877 = vmatmul.mubr.bf16.gmra.mrb[0].mxu0 %v1283
        %v1878 = vpop.f32.mrb[0].mxu0
        %v1879 = vadd.f32 %v922, %v1878
        %v1880 = vpop.f32.mrb[0].mxu0
        %v1881 = vpop.f32.mrb[0].mxu0
        %v1882 = vadd.f32 %v922, %v1881
        %v1883 = vpop.f32.mrb[0].mxu0
        %1884 = vmatprep.mubr.bf16.mxu0 %v1291
        %1885 = vmatmul.mubr.bf16.gmra.mrb[0].mxu0 %v1290
        %v1886 = vpop.f32.mrb[0].mxu0
        %v1887 = vadd.f32 %v922, %v1886
        %v1888 = vpop.f32.mrb[0].mxu0
        %v1889 = vpop.f32.mrb[0].mxu0
        %v1890 = vadd.f32 %v922, %v1889
        %v1891 = vpop.f32.mrb[0].mxu0
        %1892 = vmatprep.mubr.bf16.mxu0 %v1298
        %1893 = vmatmul.mubr.bf16.gmra.mrb[0].mxu0 %v1297
        %v1894 = vpop.f32.mrb[0].mxu0
        %v1895 = vadd.f32 %v922, %v1894
        %v1896 = vpop.f32.mrb[0].mxu0
        %v1897 = vpop.f32.mrb[0].mxu0
        %v1898 = vadd.f32 %v922, %v1897
        %v1899 = vpop.f32.mrb[0].mxu0
        %1900 = vmatprep.mubr.bf16.mxu0 %v1305
        %1901 = vmatmul.mubr.bf16.gmra.mrb[0].mxu0 %v1304
        %v1902 = vpop.f32.mrb[0].mxu0
        %v1903 = vadd.f32 %v922, %v1902
        %v1904 = vpop.f32.mrb[0].mxu0
        %v1905 = vpop.f32.mrb[0].mxu0
        %v1906 = vadd.f32 %v922, %v1905
        %v1907 = vpop.f32.mrb[0].mxu0
        %1908 = vmatprep.mubr.bf16.mxu0 %v1312
        %1909 = vmatmul.mubr.bf16.gmra.mrb[0].mxu0 %v1311
        %v1910 = vpop.f32.mrb[0].mxu0
        %v1911 = vadd.f32 %v922, %v1910
        %v1912 = vpop.f32.mrb[0].mxu0
        %v1913 = vpop.f32.mrb[0].mxu0
        %v1914 = vadd.f32 %v922, %v1913
        %v1915 = vpop.f32.mrb[0].mxu0
        %1916 = vmatprep.mubr.bf16.mxu0 %v1319
        %1917 = vmatmul.mubr.bf16.gmra.mrb[0].mxu0 %v1318
        %v1918 = vpop.f32.mrb[0].mxu0
        %v1919 = vadd.f32 %v922, %v1918
        %v1920 = vpop.f32.mrb[0].mxu0
        %v1921 = vpop.f32.mrb[0].mxu0
        %v1922 = vadd.f32 %v922, %v1921
        %v1923 = vpop.f32.mrb[0].mxu0
        %1924 = vmatprep.mubr.bf16.mxu0 %v1326
        %1925 = vmatmul.mubr.bf16.gmra.mrb[0].mxu0 %v1325
        %v1926 = vpop.f32.mrb[0].mxu0
        %v1927 = vadd.f32 %v922, %v1926
        %v1928 = vpop.f32.mrb[0].mxu0
        %v1929 = vpop.f32.mrb[0].mxu0
        %v1930 = vadd.f32 %v922, %v1929
        %v1931 = vpop.f32.mrb[0].mxu0
        %1932 = vmatprep.mubr.bf16.mxu0 %v1333
        %1933 = vmatmul.mubr.bf16.gmra.mrb[0].mxu0 %v1332
        %v1934 = vpop.f32.mrb[0].mxu0
        %v1935 = vadd.f32 %v922, %v1934
        %v1936 = vpop.f32.mrb[0].mxu0
        %v1937 = vpop.f32.mrb[0].mxu0
        %v1938 = vadd.f32 %v922, %v1937
        %v1939 = vpop.f32.mrb[0].mxu0
        %1940 = vmatprep.mubr.bf16.mxu0 %v1340
        %1941 = vmatmul.mubr.bf16.gmra.mrb[0].mxu0 %v1339
        %v1942 = vpop.f32.mrb[0].mxu0
        %v1943 = vadd.f32 %v922, %v1942
        %v1944 = vpop.f32.mrb[0].mxu0
        %v1945 = vpop.f32.mrb[0].mxu0
        %v1946 = vadd.f32 %v922, %v1945
        %v1947 = vpop.f32.mrb[0].mxu0
        %1948 = vmatprep.mubr.bf16.mxu0 %v1347
        %1949 = vmatmul.mubr.bf16.gmra.mrb[0].mxu0 %v1346
        %v1950 = vpop.f32.mrb[0].mxu0
        %v1951 = vadd.f32 %v922, %v1950
        %v1952 = vpop.f32.mrb[0].mxu0
        %v1953 = vpop.f32.mrb[0].mxu0
        %v1954 = vadd.f32 %v922, %v1953
        %v1955 = vpop.f32.mrb[0].mxu0
        %1956 = vmatprep.mubr.bf16.mxu0 %v1354
        %1957 = vmatmul.mubr.bf16.gmra.mrb[0].mxu0 %v1353
        %v1958 = vpop.f32.mrb[0].mxu0
        %v1959 = vadd.f32 %v922, %v1958
        %v1960 = vpop.f32.mrb[0].mxu0
        %v1961 = vpop.f32.mrb[0].mxu0
        %v1962 = vadd.f32 %v922, %v1961
        %v1963 = vpop.f32.mrb[0].mxu0
        %1964 = vmatprep.mubr.bf16.mxu0 %v1361
        %1965 = vmatmul.mubr.bf16.gmra.mrb[0].mxu0 %v1360
        %v1966 = vpop.f32.mrb[0].mxu0
        %v1967 = vadd.f32 %v922, %v1966
        %v1968 = vpop.f32.mrb[0].mxu0
        %v1969 = vpop.f32.mrb[0].mxu0
        %v1970 = vadd.f32 %v922, %v1969
        %v1971 = vpop.f32.mrb[0].mxu0
        %1972 = vmatprep.mubr.bf16.mxu0 %v1368
        %1973 = vmatmul.mubr.bf16.gmra.mrb[0].mxu0 %v1367
        %v1974 = vpop.f32.mrb[0].mxu0
        %v1975 = vadd.f32 %v922, %v1974
        %v1976 = vpop.f32.mrb[0].mxu0
        %v1977 = vpop.f32.mrb[0].mxu0
        %v1978 = vadd.f32 %v922, %v1977
        %v1979 = vpop.f32.mrb[0].mxu0
        %1980 = vmatprep.mubr.bf16.mxu0 %v1375
        %1981 = vmatmul.mubr.bf16.gmra.mrb[0].mxu0 %v1374
        %v1982 = vpop.f32.mrb[0].mxu0
        %v1983 = vadd.f32 %v922, %v1982
        %v1984 = vpop.f32.mrb[0].mxu0
        %v1985 = vpop.f32.mrb[0].mxu0
        %v1986 = vadd.f32 %v922, %v1985
        %v1987 = vpop.f32.mrb[0].mxu0
        %1988 = vmatprep.mubr.bf16.mxu0 %v1382
        %1989 = vmatmul.mubr.bf16.gmra.mrb[0].mxu0 %v1381
        %v1990 = vpop.f32.mrb[0].mxu0
        %v1991 = vadd.f32 %v922, %v1990
        %v1992 = vpop.f32.mrb[0].mxu0
        %v1993 = vpop.f32.mrb[0].mxu0
        %v1994 = vadd.f32 %v922, %v1993
        %v1995 = vpop.f32.mrb[0].mxu0
        %1996 = vdwg.mxu0
        %1997 = vmatprep.subr.bf16.mxu0 0
        %1998 = vmatpush1.bf16.msra.mxu0 %v1740
        %1999 = vmatprep.subr.bf16.mxu0 0
        %2000 = vmatpush1.bf16.msra.mxu0 %v1741
        %2001 = vmatprep.subr.bf16.mxu0 0
        %2002 = vmatpush1.bf16.msra.mxu0 %v1742
        %2003 = vmatprep.subr.bf16.mxu0 0
        %2004 = vmatpush1.bf16.msra.mxu0 %v1743
        %2005 = vmatprep.subr.bf16.mxu0 0
        %2006 = vmatpush1.bf16.msra.mxu0 %v1744
        %2007 = vmatprep.subr.bf16.mxu0 0
        %2008 = vmatpush1.bf16.msra.mxu0 %v1745
        %2009 = vmatprep.subr.bf16.mxu0 0
        %2010 = vmatpush1.bf16.msra.mxu0 %v1746
        %2011 = vmatprep.subr.bf16.mxu0 0
        %2012 = vmatpush1.bf16.msra.mxu0 %v1747
        %2013 = vmatprep.subr.bf16.mxu0 0
        %2014 = vmatpush1.bf16.msra.mxu0 %v1748
        %2015 = vmatprep.subr.bf16.mxu0 0
        %2016 = vmatpush1.bf16.msra.mxu0 %v1749
        %2017 = vmatprep.subr.bf16.mxu0 0
        %2018 = vmatpush1.bf16.msra.mxu0 %v1750
        %2019 = vmatprep.subr.bf16.mxu0 0
        %2020 = vmatpush1.bf16.msra.mxu0 %v1751
        %2021 = vmatprep.subr.bf16.mxu0 0
        %2022 = vmatpush1.bf16.msra.mxu0 %v1752
        %2023 = vmatprep.subr.bf16.mxu0 0
        %2024 = vmatpush1.bf16.msra.mxu0 %v1753
        %2025 = vmatprep.subr.bf16.mxu0 0
        %2026 = vmatpush1.bf16.msra.mxu0 %v1754
        %2027 = vmatprep.subr.bf16.mxu0 0
        %2028 = vmatpush1.bf16.msra.mxu0 %v1755
        %2029 = vmatprep.mubr.bf16.mxu0 %v1279
        %2030 = vmatmul.mubr.bf16.gmra.mrb[0].mxu0 %v1278
        %v2031 = vpop.f32.mrb[0].mxu0
        %v2032 = vadd.f32 %v1871, %v2031
        %v2033 = vpop.f32.mrb[0].mxu0
        %v2034 = vpop.f32.mrb[0].mxu0
        %v2035 = vadd.f32 %v1874, %v2034
        %v2036 = vpop.f32.mrb[0].mxu0
        %2037 = vmatprep.mubr.bf16.mxu0 %v1286
        %2038 = vmatmul.mubr.bf16.gmra.mrb[0].mxu0 %v1285
        %v2039 = vpop.f32.mrb[0].mxu0
        %v2040 = vadd.f32 %v1879, %v2039
        %v2041 = vpop.f32.mrb[0].mxu0
        %v2042 = vpop.f32.mrb[0].mxu0
        %v2043 = vadd.f32 %v1882, %v2042
        %v2044 = vpop.f32.mrb[0].mxu0
        %2045 = vmatprep.mubr.bf16.mxu0 %v1293
        %2046 = vmatmul.mubr.bf16.gmra.mrb[0].mxu0 %v1292
        %v2047 = vpop.f32.mrb[0].mxu0
        %v2048 = vadd.f32 %v1887, %v2047
        %v2049 = vpop.f32.mrb[0].mxu0
        %v2050 = vpop.f32.mrb[0].mxu0
        %v2051 = vadd.f32 %v1890, %v2050
        %v2052 = vpop.f32.mrb[0].mxu0
        %2053 = vmatprep.mubr.bf16.mxu0 %v1300
        %2054 = vmatmul.mubr.bf16.gmra.mrb[0].mxu0 %v1299
        %v2055 = vpop.f32.mrb[0].mxu0
        %v2056 = vadd.f32 %v1895, %v2055
        %v2057 = vpop.f32.mrb[0].mxu0
        %v2058 = vpop.f32.mrb[0].mxu0
        %v2059 = vadd.f32 %v1898, %v2058
        %v2060 = vpop.f32.mrb[0].mxu0
        %2061 = vmatprep.mubr.bf16.mxu0 %v1307
        %2062 = vmatmul.mubr.bf16.gmra.mrb[0].mxu0 %v1306
        %v2063 = vpop.f32.mrb[0].mxu0
        %v2064 = vadd.f32 %v1903, %v2063
        %v2065 = vpop.f32.mrb[0].mxu0
        %v2066 = vpop.f32.mrb[0].mxu0
        %v2067 = vadd.f32 %v1906, %v2066
        %v2068 = vpop.f32.mrb[0].mxu0
        %2069 = vmatprep.mubr.bf16.mxu0 %v1314
        %2070 = vmatmul.mubr.bf16.gmra.mrb[0].mxu0 %v1313
        %v2071 = vpop.f32.mrb[0].mxu0
        %v2072 = vadd.f32 %v1911, %v2071
        %v2073 = vpop.f32.mrb[0].mxu0
        %v2074 = vpop.f32.mrb[0].mxu0
        %v2075 = vadd.f32 %v1914, %v2074
        %v2076 = vpop.f32.mrb[0].mxu0
        %2077 = vmatprep.mubr.bf16.mxu0 %v1321
        %2078 = vmatmul.mubr.bf16.gmra.mrb[0].mxu0 %v1320
        %v2079 = vpop.f32.mrb[0].mxu0
        %v2080 = vadd.f32 %v1919, %v2079
        %v2081 = vpop.f32.mrb[0].mxu0
        %v2082 = vpop.f32.mrb[0].mxu0
        %v2083 = vadd.f32 %v1922, %v2082
        %v2084 = vpop.f32.mrb[0].mxu0
        %2085 = vmatprep.mubr.bf16.mxu0 %v1328
        %2086 = vmatmul.mubr.bf16.gmra.mrb[0].mxu0 %v1327
        %v2087 = vpop.f32.mrb[0].mxu0
        %v2088 = vadd.f32 %v1927, %v2087
        %v2089 = vpop.f32.mrb[0].mxu0
        %v2090 = vpop.f32.mrb[0].mxu0
        %v2091 = vadd.f32 %v1930, %v2090
        %v2092 = vpop.f32.mrb[0].mxu0
        %2093 = vmatprep.mubr.bf16.mxu0 %v1335
        %2094 = vmatmul.mubr.bf16.gmra.mrb[0].mxu0 %v1334
        %v2095 = vpop.f32.mrb[0].mxu0
        %v2096 = vadd.f32 %v1935, %v2095
        %v2097 = vpop.f32.mrb[0].mxu0
        %v2098 = vpop.f32.mrb[0].mxu0
        %v2099 = vadd.f32 %v1938, %v2098
        %v2100 = vpop.f32.mrb[0].mxu0
        %2101 = vmatprep.mubr.bf16.mxu0 %v1342
        %2102 = vmatmul.mubr.bf16.gmra.mrb[0].mxu0 %v1341
        %v2103 = vpop.f32.mrb[0].mxu0
        %v2104 = vadd.f32 %v1943, %v2103
        %v2105 = vpop.f32.mrb[0].mxu0
        %v2106 = vpop.f32.mrb[0].mxu0
        %v2107 = vadd.f32 %v1946, %v2106
        %v2108 = vpop.f32.mrb[0].mxu0
        %2109 = vmatprep.mubr.bf16.mxu0 %v1349
        %2110 = vmatmul.mubr.bf16.gmra.mrb[0].mxu0 %v1348
        %v2111 = vpop.f32.mrb[0].mxu0
        %v2112 = vadd.f32 %v1951, %v2111
        %v2113 = vpop.f32.mrb[0].mxu0
        %v2114 = vpop.f32.mrb[0].mxu0
        %v2115 = vadd.f32 %v1954, %v2114
        %v2116 = vpop.f32.mrb[0].mxu0
        %2117 = vmatprep.mubr.bf16.mxu0 %v1356
        %2118 = vmatmul.mubr.bf16.gmra.mrb[0].mxu0 %v1355
        %v2119 = vpop.f32.mrb[0].mxu0
        %v2120 = vadd.f32 %v1959, %v2119
        %v2121 = vpop.f32.mrb[0].mxu0
        %v2122 = vpop.f32.mrb[0].mxu0
        %v2123 = vadd.f32 %v1962, %v2122
        %v2124 = vpop.f32.mrb[0].mxu0
        %2125 = vmatprep.mubr.bf16.mxu0 %v1363
        %2126 = vmatmul.mubr.bf16.gmra.mrb[0].mxu0 %v1362
        %v2127 = vpop.f32.mrb[0].mxu0
        %v2128 = vadd.f32 %v1967, %v2127
        %v2129 = vpop.f32.mrb[0].mxu0
        %v2130 = vpop.f32.mrb[0].mxu0
        %v2131 = vadd.f32 %v1970, %v2130
        %v2132 = vpop.f32.mrb[0].mxu0
        %2133 = vmatprep.mubr.bf16.mxu0 %v1370
        %2134 = vmatmul.mubr.bf16.gmra.mrb[0].mxu0 %v1369
        %v2135 = vpop.f32.mrb[0].mxu0
        %v2136 = vadd.f32 %v1975, %v2135
        %v2137 = vpop.f32.mrb[0].mxu0
        %v2138 = vpop.f32.mrb[0].mxu0
        %v2139 = vadd.f32 %v1978, %v2138
        %v2140 = vpop.f32.mrb[0].mxu0
        %2141 = vmatprep.mubr.bf16.mxu0 %v1377
        %2142 = vmatmul.mubr.bf16.gmra.mrb[0].mxu0 %v1376
        %v2143 = vpop.f32.mrb[0].mxu0
        %v2144 = vadd.f32 %v1983, %v2143
        %v2145 = vpop.f32.mrb[0].mxu0
        %v2146 = vpop.f32.mrb[0].mxu0
        %v2147 = vadd.f32 %v1986, %v2146
        %v2148 = vpop.f32.mrb[0].mxu0
        %2149 = vmatprep.mubr.bf16.mxu0 %v1384
        %2150 = vmatmul.mubr.bf16.gmra.mrb[0].mxu0 %v1383
        %v2151 = vpop.f32.mrb[0].mxu0
        %v2152 = vadd.f32 %v1991, %v2151
        %v2153 = vpop.f32.mrb[0].mxu0
        %v2154 = vpop.f32.mrb[0].mxu0
        %v2155 = vadd.f32 %v1994, %v2154
        %v2156 = vpop.f32.mrb[0].mxu0
        %2157 = vdwg.mxu0
        %2158 = vmatprep.subr.bf16.mxu0 0
        %2159 = vmatpush1.bf16.msra.mxu0 %v1756
        %2160 = vmatprep.subr.bf16.mxu0 0
        %2161 = vmatpush1.bf16.msra.mxu0 %v1757
        %2162 = vmatprep.subr.bf16.mxu0 0
        %2163 = vmatpush1.bf16.msra.mxu0 %v1758
        %2164 = vmatprep.subr.bf16.mxu0 0
        %2165 = vmatpush1.bf16.msra.mxu0 %v1759
        %2166 = vmatprep.subr.bf16.mxu0 0
        %2167 = vmatpush1.bf16.msra.mxu0 %v1760
        %2168 = vmatprep.subr.bf16.mxu0 0
        %2169 = vmatpush1.bf16.msra.mxu0 %v1761
        %2170 = vmatprep.subr.bf16.mxu0 0
        %2171 = vmatpush1.bf16.msra.mxu0 %v1762
        %2172 = vmatprep.subr.bf16.mxu0 0
        %2173 = vmatpush1.bf16.msra.mxu0 %v1763
        %2174 = vmatprep.subr.bf16.mxu0 0
        %2175 = vmatpush1.bf16.msra.mxu0 %v1764
        %2176 = vmatprep.subr.bf16.mxu0 0
        %2177 = vmatpush1.bf16.msra.mxu0 %v1765
        %2178 = vmatprep.subr.bf16.mxu0 0
        %2179 = vmatpush1.bf16.msra.mxu0 %v1766
        %2180 = vmatprep.subr.bf16.mxu0 0
        %2181 = vmatpush1.bf16.msra.mxu0 %v1767
        %2182 = vmatprep.subr.bf16.mxu0 0
        %2183 = vmatpush1.bf16.msra.mxu0 %v1768
        %2184 = vmatprep.subr.bf16.mxu0 0
        %2185 = vmatpush1.bf16.msra.mxu0 %v1769
        %2186 = vmatprep.subr.bf16.mxu0 0
        %2187 = vmatpush1.bf16.msra.mxu0 %v1770
        %2188 = vmatprep.subr.bf16.mxu0 0
        %2189 = vmatpush1.bf16.msra.mxu0 %v1771
        %2190 = vmatprep.mubr.bf16.mxu0 %v1281
        %2191 = vmatmul.mubr.bf16.gmra.mrb[0].mxu0 %v1280
        %v2192 = vpop.f32.mrb[0].mxu0
        %v2193 = vadd.f32 %v2032, %v2192
        %v2194 = vpop.f32.mrb[0].mxu0
        %v2195 = vpop.f32.mrb[0].mxu0
        %v2196 = vadd.f32 %v2035, %v2195
        %v2197 = vpop.f32.mrb[0].mxu0
        %2198 = vmatprep.mubr.bf16.mxu0 %v1288
        %2199 = vmatmul.mubr.bf16.gmra.mrb[0].mxu0 %v1287
        %v2200 = vpop.f32.mrb[0].mxu0
        %v2201 = vadd.f32 %v2040, %v2200
        %v2202 = vpop.f32.mrb[0].mxu0
        %v2203 = vpop.f32.mrb[0].mxu0
        %v2204 = vadd.f32 %v2043, %v2203
        %v2205 = vpop.f32.mrb[0].mxu0
        %2206 = vmatprep.mubr.bf16.mxu0 %v1295
        %2207 = vmatmul.mubr.bf16.gmra.mrb[0].mxu0 %v1294
        %v2208 = vpop.f32.mrb[0].mxu0
        %v2209 = vadd.f32 %v2048, %v2208
        %v2210 = vpop.f32.mrb[0].mxu0
        %v2211 = vpop.f32.mrb[0].mxu0
        %v2212 = vadd.f32 %v2051, %v2211
        %v2213 = vpop.f32.mrb[0].mxu0
        %2214 = vmatprep.mubr.bf16.mxu0 %v1302
        %2215 = vmatmul.mubr.bf16.gmra.mrb[0].mxu0 %v1301
        %v2216 = vpop.f32.mrb[0].mxu0
        %v2217 = vadd.f32 %v2056, %v2216
        %v2218 = vpop.f32.mrb[0].mxu0
        %v2219 = vpop.f32.mrb[0].mxu0
        %v2220 = vadd.f32 %v2059, %v2219
        %v2221 = vpop.f32.mrb[0].mxu0
        %2222 = vmatprep.mubr.bf16.mxu0 %v1309
        %2223 = vmatmul.mubr.bf16.gmra.mrb[0].mxu0 %v1308
        %v2224 = vpop.f32.mrb[0].mxu0
        %v2225 = vadd.f32 %v2064, %v2224
        %v2226 = vpop.f32.mrb[0].mxu0
        %v2227 = vpop.f32.mrb[0].mxu0
        %v2228 = vadd.f32 %v2067, %v2227
        %v2229 = vpop.f32.mrb[0].mxu0
        %2230 = vmatprep.mubr.bf16.mxu0 %v1316
        %2231 = vmatmul.mubr.bf16.gmra.mrb[0].mxu0 %v1315
        %v2232 = vpop.f32.mrb[0].mxu0
        %v2233 = vadd.f32 %v2072, %v2232
        %v2234 = vpop.f32.mrb[0].mxu0
        %v2235 = vpop.f32.mrb[0].mxu0
        %v2236 = vadd.f32 %v2075, %v2235
        %v2237 = vpop.f32.mrb[0].mxu0
        %2238 = vmatprep.mubr.bf16.mxu0 %v1323
        %2239 = vmatmul.mubr.bf16.gmra.mrb[0].mxu0 %v1322
        %v2240 = vpop.f32.mrb[0].mxu0
        %v2241 = vadd.f32 %v2080, %v2240
        %v2242 = vpop.f32.mrb[0].mxu0
        %v2243 = vpop.f32.mrb[0].mxu0
        %v2244 = vadd.f32 %v2083, %v2243
        %v2245 = vpop.f32.mrb[0].mxu0
        %2246 = vmatprep.mubr.bf16.mxu0 %v1330
        %2247 = vmatmul.mubr.bf16.gmra.mrb[0].mxu0 %v1329
        %v2248 = vpop.f32.mrb[0].mxu0
        %v2249 = vadd.f32 %v2088, %v2248
        %v2250 = vpop.f32.mrb[0].mxu0
        %v2251 = vpop.f32.mrb[0].mxu0
        %v2252 = vadd.f32 %v2091, %v2251
        %v2253 = vpop.f32.mrb[0].mxu0
        %2254 = vmatprep.mubr.bf16.mxu0 %v1337
        %2255 = vmatmul.mubr.bf16.gmra.mrb[0].mxu0 %v1336
        %v2256 = vpop.f32.mrb[0].mxu0
        %v2257 = vadd.f32 %v2096, %v2256
        %v2258 = vpop.f32.mrb[0].mxu0
        %v2259 = vpop.f32.mrb[0].mxu0
        %v2260 = vadd.f32 %v2099, %v2259
        %v2261 = vpop.f32.mrb[0].mxu0
        %2262 = vmatprep.mubr.bf16.mxu0 %v1344
        %2263 = vmatmul.mubr.bf16.gmra.mrb[0].mxu0 %v1343
        %v2264 = vpop.f32.mrb[0].mxu0
        %v2265 = vadd.f32 %v2104, %v2264
        %v2266 = vpop.f32.mrb[0].mxu0
        %v2267 = vpop.f32.mrb[0].mxu0
        %v2268 = vadd.f32 %v2107, %v2267
        %v2269 = vpop.f32.mrb[0].mxu0
        %2270 = vmatprep.mubr.bf16.mxu0 %v1351
        %2271 = vmatmul.mubr.bf16.gmra.mrb[0].mxu0 %v1350
        %v2272 = vpop.f32.mrb[0].mxu0
        %v2273 = vadd.f32 %v2112, %v2272
        %v2274 = vpop.f32.mrb[0].mxu0
        %v2275 = vpop.f32.mrb[0].mxu0
        %v2276 = vadd.f32 %v2115, %v2275
        %v2277 = vpop.f32.mrb[0].mxu0
        %2278 = vmatprep.mubr.bf16.mxu0 %v1358
        %2279 = vmatmul.mubr.bf16.gmra.mrb[0].mxu0 %v1357
        %v2280 = vpop.f32.mrb[0].mxu0
        %v2281 = vadd.f32 %v2120, %v2280
        %v2282 = vpop.f32.mrb[0].mxu0
        %v2283 = vpop.f32.mrb[0].mxu0
        %v2284 = vadd.f32 %v2123, %v2283
        %v2285 = vpop.f32.mrb[0].mxu0
        %2286 = vmatprep.mubr.bf16.mxu0 %v1365
        %2287 = vmatmul.mubr.bf16.gmra.mrb[0].mxu0 %v1364
        %v2288 = vpop.f32.mrb[0].mxu0
        %v2289 = vadd.f32 %v2128, %v2288
        %v2290 = vpop.f32.mrb[0].mxu0
        %v2291 = vpop.f32.mrb[0].mxu0
        %v2292 = vadd.f32 %v2131, %v2291
        %v2293 = vpop.f32.mrb[0].mxu0
        %2294 = vmatprep.mubr.bf16.mxu0 %v1372
        %2295 = vmatmul.mubr.bf16.gmra.mrb[0].mxu0 %v1371
        %v2296 = vpop.f32.mrb[0].mxu0
        %v2297 = vadd.f32 %v2136, %v2296
        %v2298 = vpop.f32.mrb[0].mxu0
        %v2299 = vpop.f32.mrb[0].mxu0
        %v2300 = vadd.f32 %v2139, %v2299
        %v2301 = vpop.f32.mrb[0].mxu0
        %2302 = vmatprep.mubr.bf16.mxu0 %v1379
        %2303 = vmatmul.mubr.bf16.gmra.mrb[0].mxu0 %v1378
        %v2304 = vpop.f32.mrb[0].mxu0
        %v2305 = vadd.f32 %v2144, %v2304
        %v2306 = vpop.f32.mrb[0].mxu0
        %v2307 = vpop.f32.mrb[0].mxu0
        %v2308 = vadd.f32 %v2147, %v2307
        %v2309 = vpop.f32.mrb[0].mxu0
        %2310 = vmatprep.mubr.bf16.mxu0 %v1386
        %2311 = vmatmul.mubr.bf16.gmra.mrb[0].mxu0 %v1385
        %v2312 = vpop.f32.mrb[0].mxu0
        %v2313 = vadd.f32 %v2152, %v2312
        %v2314 = vpop.f32.mrb[0].mxu0
        %v2315 = vpop.f32.mrb[0].mxu0
        %v2316 = vadd.f32 %v2155, %v2315
        %v2317 = vpop.f32.mrb[0].mxu0
        %2318 = vdwg.mxu0
        %2319 = vmatprep.subr.bf16.mxu0 0
        %2320 = vmatpush1.bf16.msra.mxu0 %v1772
        %2321 = vmatprep.subr.bf16.mxu0 0
        %2322 = vmatpush1.bf16.msra.mxu0 %v1773
        %2323 = vmatprep.subr.bf16.mxu0 0
        %2324 = vmatpush1.bf16.msra.mxu0 %v1774
        %2325 = vmatprep.subr.bf16.mxu0 0
        %2326 = vmatpush1.bf16.msra.mxu0 %v1775
        %2327 = vmatprep.subr.bf16.mxu0 0
        %2328 = vmatpush1.bf16.msra.mxu0 %v1776
        %2329 = vmatprep.subr.bf16.mxu0 0
        %2330 = vmatpush1.bf16.msra.mxu0 %v1777
        %2331 = vmatprep.subr.bf16.mxu0 0
        %2332 = vmatpush1.bf16.msra.mxu0 %v1778
        %2333 = vmatprep.subr.bf16.mxu0 0
        %2334 = vmatpush1.bf16.msra.mxu0 %v1779
        %2335 = vmatprep.subr.bf16.mxu0 0
        %2336 = vmatpush1.bf16.msra.mxu0 0
        %2337 = vmatprep.subr.bf16.mxu0 0
        %2338 = vmatpush1.bf16.msra.mxu0 0
        %2339 = vmatprep.subr.bf16.mxu0 0
        %2340 = vmatpush1.bf16.msra.mxu0 0
        %2341 = vmatprep.subr.bf16.mxu0 0
        %2342 = vmatpush1.bf16.msra.mxu0 0
        %2343 = vmatprep.subr.bf16.mxu0 0
        %2344 = vmatpush1.bf16.msra.mxu0 0
        %2345 = vmatprep.subr.bf16.mxu0 0
        %2346 = vmatpush1.bf16.msra.mxu0 0
        %2347 = vmatprep.subr.bf16.mxu0 0
        %2348 = vmatpush1.bf16.msra.mxu0 0
        %2349 = vmatprep.subr.bf16.mxu0 0
        %2350 = vmatpush1.bf16.msra.mxu0 0
        %2351 = vmatprep.mubr.bf16.mxu0 0
        %2352 = vmatmul.mubr.bf16.gmra.mrb[0].mxu0 %v1282
        %v2353 = vpop.f32.mrb[0].mxu0
        %v2354 = vadd.f32 %v2193, %v2353
        %v2355 = vpop.f32.mrb[0].mxu0
        %v2356 = vpop.f32.mrb[0].mxu0
        %v2357 = vadd.f32 %v2196, %v2356
        %v2358 = vpop.f32.mrb[0].mxu0
        %2359 = vmatprep.mubr.bf16.mxu0 0
        %2360 = vmatmul.mubr.bf16.gmra.mrb[0].mxu0 %v1289
        %v2361 = vpop.f32.mrb[0].mxu0
        %v2362 = vadd.f32 %v2201, %v2361
        %v2363 = vpop.f32.mrb[0].mxu0
        %v2364 = vpop.f32.mrb[0].mxu0
        %v2365 = vadd.f32 %v2204, %v2364
        %v2366 = vpop.f32.mrb[0].mxu0
        %2367 = vmatprep.mubr.bf16.mxu0 0
        %2368 = vmatmul.mubr.bf16.gmra.mrb[0].mxu0 %v1296
        %v2369 = vpop.f32.mrb[0].mxu0
        %v2370 = vadd.f32 %v2209, %v2369
        %v2371 = vpop.f32.mrb[0].mxu0
        %v2372 = vpop.f32.mrb[0].mxu0
        %v2373 = vadd.f32 %v2212, %v2372
        %v2374 = vpop.f32.mrb[0].mxu0
        %2375 = vmatprep.mubr.bf16.mxu0 0
        %2376 = vmatmul.mubr.bf16.gmra.mrb[0].mxu0 %v1303
        %v2377 = vpop.f32.mrb[0].mxu0
        %v2378 = vadd.f32 %v2217, %v2377
        %v2379 = vpop.f32.mrb[0].mxu0
        %v2380 = vpop.f32.mrb[0].mxu0
        %v2381 = vadd.f32 %v2220, %v2380
        %v2382 = vpop.f32.mrb[0].mxu0
        %2383 = vmatprep.mubr.bf16.mxu0 0
        %2384 = vmatmul.mubr.bf16.gmra.mrb[0].mxu0 %v1310
        %v2385 = vpop.f32.mrb[0].mxu0
        %v2386 = vadd.f32 %v2225, %v2385
        %v2387 = vpop.f32.mrb[0].mxu0
        %v2388 = vpop.f32.mrb[0].mxu0
        %v2389 = vadd.f32 %v2228, %v2388
        %v2390 = vpop.f32.mrb[0].mxu0
        %2391 = vmatprep.mubr.bf16.mxu0 0
        %2392 = vmatmul.mubr.bf16.gmra.mrb[0].mxu0 %v1317
        %v2393 = vpop.f32.mrb[0].mxu0
        %v2394 = vadd.f32 %v2233, %v2393
        %v2395 = vpop.f32.mrb[0].mxu0
        %v2396 = vpop.f32.mrb[0].mxu0
        %v2397 = vadd.f32 %v2236, %v2396
        %v2398 = vpop.f32.mrb[0].mxu0
        %2399 = vmatprep.mubr.bf16.mxu0 0
        %2400 = vmatmul.mubr.bf16.gmra.mrb[0].mxu0 %v1324
        %v2401 = vpop.f32.mrb[0].mxu0
        %v2402 = vadd.f32 %v2241, %v2401
        %v2403 = vpop.f32.mrb[0].mxu0
        %v2404 = vpop.f32.mrb[0].mxu0
        %v2405 = vadd.f32 %v2244, %v2404
        %v2406 = vpop.f32.mrb[0].mxu0
        %2407 = vmatprep.mubr.bf16.mxu0 0
        %2408 = vmatmul.mubr.bf16.gmra.mrb[0].mxu0 %v1331
        %v2409 = vpop.f32.mrb[0].mxu0
        %v2410 = vadd.f32 %v2249, %v2409
        %v2411 = vpop.f32.mrb[0].mxu0
        %v2412 = vpop.f32.mrb[0].mxu0
        %v2413 = vadd.f32 %v2252, %v2412
        %v2414 = vpop.f32.mrb[0].mxu0
        %2415 = vmatprep.mubr.bf16.mxu0 0
        %2416 = vmatmul.mubr.bf16.gmra.mrb[0].mxu0 %v1338
        %v2417 = vpop.f32.mrb[0].mxu0
        %v2418 = vadd.f32 %v2257, %v2417
        %v2419 = vpop.f32.mrb[0].mxu0
        %v2420 = vpop.f32.mrb[0].mxu0
        %v2421 = vadd.f32 %v2260, %v2420
        %v2422 = vpop.f32.mrb[0].mxu0
        %2423 = vmatprep.mubr.bf16.mxu0 0
        %2424 = vmatmul.mubr.bf16.gmra.mrb[0].mxu0 %v1345
        %v2425 = vpop.f32.mrb[0].mxu0
        %v2426 = vadd.f32 %v2265, %v2425
        %v2427 = vpop.f32.mrb[0].mxu0
        %v2428 = vpop.f32.mrb[0].mxu0
        %v2429 = vadd.f32 %v2268, %v2428
        %v2430 = vpop.f32.mrb[0].mxu0
        %2431 = vmatprep.mubr.bf16.mxu0 0
        %2432 = vmatmul.mubr.bf16.gmra.mrb[0].mxu0 %v1352
        %v2433 = vpop.f32.mrb[0].mxu0
        %v2434 = vadd.f32 %v2273, %v2433
        %v2435 = vpop.f32.mrb[0].mxu0
        %v2436 = vpop.f32.mrb[0].mxu0
        %v2437 = vadd.f32 %v2276, %v2436
        %v2438 = vpop.f32.mrb[0].mxu0
        %2439 = vmatprep.mubr.bf16.mxu0 0
        %2440 = vmatmul.mubr.bf16.gmra.mrb[0].mxu0 %v1359
        %v2441 = vpop.f32.mrb[0].mxu0
        %v2442 = vadd.f32 %v2281, %v2441
        %v2443 = vpop.f32.mrb[0].mxu0
        %v2444 = vpop.f32.mrb[0].mxu0
        %v2445 = vadd.f32 %v2284, %v2444
        %v2446 = vpop.f32.mrb[0].mxu0
        %2447 = vmatprep.mubr.bf16.mxu0 0
        %2448 = vmatmul.mubr.bf16.gmra.mrb[0].mxu0 %v1366
        %v2449 = vpop.f32.mrb[0].mxu0
        %v2450 = vadd.f32 %v2289, %v2449
        %v2451 = vpop.f32.mrb[0].mxu0
        %v2452 = vpop.f32.mrb[0].mxu0
        %v2453 = vadd.f32 %v2292, %v2452
        %v2454 = vpop.f32.mrb[0].mxu0
        %2455 = vmatprep.mubr.bf16.mxu0 0
        %2456 = vmatmul.mubr.bf16.gmra.mrb[0].mxu0 %v1373
        %v2457 = vpop.f32.mrb[0].mxu0
        %v2458 = vadd.f32 %v2297, %v2457
        %v2459 = vpop.f32.mrb[0].mxu0
        %v2460 = vpop.f32.mrb[0].mxu0
        %v2461 = vadd.f32 %v2300, %v2460
        %v2462 = vpop.f32.mrb[0].mxu0
        %2463 = vmatprep.mubr.bf16.mxu0 0
        %2464 = vmatmul.mubr.bf16.gmra.mrb[0].mxu0 %v1380
        %v2465 = vpop.f32.mrb[0].mxu0
        %v2466 = vadd.f32 %v2305, %v2465
        %v2467 = vpop.f32.mrb[0].mxu0
        %v2468 = vpop.f32.mrb[0].mxu0
        %v2469 = vadd.f32 %v2308, %v2468
        %v2470 = vpop.f32.mrb[0].mxu0
        %2471 = vmatprep.mubr.bf16.mxu0 0
        %2472 = vmatmul.mubr.bf16.gmra.mrb[0].mxu0 %v1387
        %v2473 = vpop.f32.mrb[0].mxu0
        %v2474 = vadd.f32 %v2313, %v2473
        %v2475 = vpop.f32.mrb[0].mxu0
        %v2476 = vpop.f32.mrb[0].mxu0
        %v2477 = vadd.f32 %v2316, %v2476
        %v2478 = vpop.f32.mrb[0].mxu0
        %2479 = vdwg.mxu0
        %v2480 = vmax.f32 %v2354, 0.0
        %v2481 = vmax.f32 %v2357, 0.0
        %v2482 = vmax.f32 %v2362, 0.0
        %v2483 = vmax.f32 %v2365, 0.0
        %v2484 = vmax.f32 %v2370, 0.0
        %v2485 = vmax.f32 %v2373, 0.0
        %v2486 = vmax.f32 %v2378, 0.0
        %v2487 = vmax.f32 %v2381, 0.0
        %v2488 = vmax.f32 %v2386, 0.0
        %v2489 = vmax.f32 %v2389, 0.0
        %v2490 = vmax.f32 %v2394, 0.0
        %v2491 = vmax.f32 %v2397, 0.0
        %v2492 = vmax.f32 %v2402, 0.0
        %v2493 = vmax.f32 %v2405, 0.0
        %v2494 = vmax.f32 %v2410, 0.0
        %v2495 = vmax.f32 %v2413, 0.0
        %v2496 = vmax.f32 %v2418, 0.0
        %v2497 = vmax.f32 %v2421, 0.0
        %v2498 = vmax.f32 %v2426, 0.0
        %v2499 = vmax.f32 %v2429, 0.0
        %v2500 = vmax.f32 %v2434, 0.0
        %v2501 = vmax.f32 %v2437, 0.0
        %v2502 = vmax.f32 %v2442, 0.0
        %v2503 = vmax.f32 %v2445, 0.0
        %v2504 = vmax.f32 %v2450, 0.0
        %v2505 = vmax.f32 %v2453, 0.0
        %v2506 = vmax.f32 %v2458, 0.0
        %v2507 = vmax.f32 %v2461, 0.0
        %v2508 = vmax.f32 %v2466, 0.0
        %v2509 = vmax.f32 %v2469, 0.0
        %v2510 = vmax.f32 %v2474, 0.0
        %v2511 = vmax.f32 %v2477, 0.0
        %v2512 = vld [vmem:[%s3] sm:$0xff]
        %v2513 = vld [vmem:[%s3 + $0x8] sm:$0xff]
        %v2514 = vld [vmem:[%s3 + $0x10] sm:$0xff]
        %v2515 = vld [vmem:[%s3 + $0x18] sm:$0xff]
        %v2516 = vld [vmem:[%s3 + $0x20] sm:$0xff]
        %v2517 = vld [vmem:[%s3 + $0x28] sm:$0xff]
        %v2518 = vld [vmem:[%s3 + $0x30] sm:$0xff]
        %v2519 = vld [vmem:[%s3 + $0x38] sm:$0xff]
        %v2520 = vld [vmem:[%s3 + $0x40] sm:$0xff]
        %v2521 = vld [vmem:[%s3 + $0x48] sm:$0xff]
        %v2522 = vld [vmem:[%s3 + $0x50] sm:$0xff]
        %v2523 = vld [vmem:[%s3 + $0x58] sm:$0xff]
        %v2524 = vld [vmem:[%s3 + $0x60] sm:$0xff]
        %v2525 = vld [vmem:[%s3 + $0x68] sm:$0xff]
        %v2526 = vld [vmem:[%s3 + $0x70] sm:$0xff]
        %v2527 = vld [vmem:[%s3 + $0x78] sm:$0xff]
        %v2528 = vld [vmem:[#allocation8] sm:$0x1]
        %v2530 = vlaneseq
        %v2531 = vshrl.u32 %v2530, 7
        %v2532 = vsub.s32 0, %v2531
        %v2533 = vrot.slane %v2528, %v2532
        %2535 = vmatprep.subr.mxu0 0.0
        %2536 = vmatpush1.msra.mxu0 %v2512
        %2537 = vmatprep.subr.mxu0 0.0
        %2538 = vmatpush1.msra.mxu0 %v2513
        %2539 = vmatprep.subr.mxu0 0.0
        %2540 = vmatpush1.msra.mxu0 %v2514
        %2541 = vmatprep.subr.mxu0 0.0
        %2542 = vmatpush1.msra.mxu0 %v2515
        %2543 = vmatprep.subr.mxu0 0.0
        %2544 = vmatpush1.msra.mxu0 %v2516
        %2545 = vmatprep.subr.mxu0 0.0
        %2546 = vmatpush1.msra.mxu0 %v2517
        %2547 = vmatprep.subr.mxu0 0.0
        %2548 = vmatpush1.msra.mxu0 %v2518
        %2549 = vmatprep.subr.mxu0 0.0
        %2550 = vmatpush1.msra.mxu0 %v2519
        %2551 = vmatprep.subr.mxu0 0.0
        %2552 = vmatpush1.msra.mxu0 %v2520
        %2553 = vmatprep.subr.mxu0 0.0
        %2554 = vmatpush1.msra.mxu0 %v2521
        %2555 = vmatprep.subr.mxu0 0.0
        %2556 = vmatpush1.msra.mxu0 %v2522
        %2557 = vmatprep.subr.mxu0 0.0
        %2558 = vmatpush1.msra.mxu0 %v2523
        %2559 = vmatprep.subr.mxu0 0.0
        %2560 = vmatpush1.msra.mxu0 %v2524
        %2561 = vmatprep.subr.mxu0 0.0
        %2562 = vmatpush1.msra.mxu0 %v2525
        %2563 = vmatprep.subr.mxu0 0.0
        %2564 = vmatpush1.msra.mxu0 %v2526
        %2565 = vmatprep.subr.mxu0 0.0
        %2566 = vmatpush1.msra.mxu0 %v2527
        %2567 = vmatprep.subr.mxu0 0.0
        %2568 = vmatpush1.msra.mxu0 0.0
        %2569 = vmatprep.subr.mxu0 0.0
        %2570 = vmatpush1.msra.mxu0 0.0
        %2571 = vmatprep.subr.mxu0 0.0
        %2572 = vmatpush1.msra.mxu0 0.0
        %2573 = vmatprep.subr.mxu0 0.0
        %2574 = vmatpush1.msra.mxu0 0.0
        %2575 = vmatprep.subr.mxu0 0.0
        %2576 = vmatpush1.msra.mxu0 0.0
        %2577 = vmatprep.subr.mxu0 0.0
        %2578 = vmatpush1.msra.mxu0 0.0
        %2579 = vmatprep.subr.mxu0 0.0
        %2580 = vmatpush1.msra.mxu0 0.0
        %2581 = vmatprep.subr.mxu0 0.0
        %2582 = vmatpush1.msra.mxu0 0.0
        %2583 = vmatprep.subr.mxu0 0.0
        %2584 = vmatpush1.msra.mxu0 0.0
        %2585 = vmatprep.subr.mxu0 0.0
        %2586 = vmatpush1.msra.mxu0 0.0
        %2587 = vmatprep.subr.mxu0 0.0
        %2588 = vmatpush1.msra.mxu0 0.0
        %2589 = vmatprep.subr.mxu0 0.0
        %2590 = vmatpush1.msra.mxu0 0.0
        %2591 = vmatprep.subr.mxu0 0.0
        %2592 = vmatpush1.msra.mxu0 0.0
        %2593 = vmatprep.subr.mxu0 0.0
        %2594 = vmatpush1.msra.mxu0 0.0
        %2595 = vmatprep.subr.mxu0 0.0
        %2596 = vmatpush1.msra.mxu0 0.0
        %2597 = vmatprep.subr.mxu0 0.0
        %2598 = vmatpush1.msra.mxu0 0.0
        %2599 = vmatprep.mubr.f32.mxu0 0.0
        %2600 = vmatmul.mubr.f32.gmra.mrb[0].mxu0 %v2480
        %v2601 = vpop.f32.mrb[0].mxu0
        %v2602 = vadd.f32 %v2533, %v2601
        %v2603 = vpop.f32.mrb[0].mxu0
        %2604 = vmatprep.mubr.f32.mxu0 0.0
        %2605 = vmatmul.mubr.f32.gmra.mrb[0].mxu0 %v2481
        %v2606 = vpop.f32.mrb[0].mxu0
        %v2607 = vadd.f32 %v2533, %v2606
        %v2608 = vpop.f32.mrb[0].mxu0
        %2609 = vmatprep.mubr.f32.mxu0 0.0
        %2610 = vmatmul.mubr.f32.gmra.mrb[0].mxu0 %v2482
        %v2611 = vpop.f32.mrb[0].mxu0
        %v2612 = vadd.f32 %v2533, %v2611
        %v2613 = vpop.f32.mrb[0].mxu0
        %2614 = vmatprep.mubr.f32.mxu0 0.0
        %2615 = vmatmul.mubr.f32.gmra.mrb[0].mxu0 %v2483
        %v2616 = vpop.f32.mrb[0].mxu0
        %v2617 = vadd.f32 %v2533, %v2616
        %v2618 = vpop.f32.mrb[0].mxu0
        %2619 = vmatprep.mubr.f32.mxu0 0.0
        %2620 = vmatmul.mubr.f32.gmra.mrb[0].mxu0 %v2484
        %v2621 = vpop.f32.mrb[0].mxu0
        %v2622 = vadd.f32 %v2533, %v2621
        %v2623 = vpop.f32.mrb[0].mxu0
        %2624 = vmatprep.mubr.f32.mxu0 0.0
        %2625 = vmatmul.mubr.f32.gmra.mrb[0].mxu0 %v2485
        %v2626 = vpop.f32.mrb[0].mxu0
        %v2627 = vadd.f32 %v2533, %v2626
        %v2628 = vpop.f32.mrb[0].mxu0
        %2629 = vmatprep.mubr.f32.mxu0 0.0
        %2630 = vmatmul.mubr.f32.gmra.mrb[0].mxu0 %v2486
        %v2631 = vpop.f32.mrb[0].mxu0
        %v2632 = vadd.f32 %v2533, %v2631
        %v2633 = vpop.f32.mrb[0].mxu0
        %2634 = vmatprep.mubr.f32.mxu0 0.0
        %2635 = vmatmul.mubr.f32.gmra.mrb[0].mxu0 %v2487
        %v2636 = vpop.f32.mrb[0].mxu0
        %v2637 = vadd.f32 %v2533, %v2636
        %v2638 = vpop.f32.mrb[0].mxu0
        %2639 = vmatprep.mubr.f32.mxu0 0.0
        %2640 = vmatmul.mubr.f32.gmra.mrb[0].mxu0 %v2488
        %v2641 = vpop.f32.mrb[0].mxu0
        %v2642 = vadd.f32 %v2533, %v2641
        %v2643 = vpop.f32.mrb[0].mxu0
        %2644 = vmatprep.mubr.f32.mxu0 0.0
        %2645 = vmatmul.mubr.f32.gmra.mrb[0].mxu0 %v2489
        %v2646 = vpop.f32.mrb[0].mxu0
        %v2647 = vadd.f32 %v2533, %v2646
        %v2648 = vpop.f32.mrb[0].mxu0
        %2649 = vmatprep.mubr.f32.mxu0 0.0
        %2650 = vmatmul.mubr.f32.gmra.mrb[0].mxu0 %v2490
        %v2651 = vpop.f32.mrb[0].mxu0
        %v2652 = vadd.f32 %v2533, %v2651
        %v2653 = vpop.f32.mrb[0].mxu0
        %2654 = vmatprep.mubr.f32.mxu0 0.0
        %2655 = vmatmul.mubr.f32.gmra.mrb[0].mxu0 %v2491
        %v2656 = vpop.f32.mrb[0].mxu0
        %v2657 = vadd.f32 %v2533, %v2656
        %v2658 = vpop.f32.mrb[0].mxu0
        %2659 = vmatprep.mubr.f32.mxu0 0.0
        %2660 = vmatmul.mubr.f32.gmra.mrb[0].mxu0 %v2492
        %v2661 = vpop.f32.mrb[0].mxu0
        %v2662 = vadd.f32 %v2533, %v2661
        %v2663 = vpop.f32.mrb[0].mxu0
        %2664 = vmatprep.mubr.f32.mxu0 0.0
        %2665 = vmatmul.mubr.f32.gmra.mrb[0].mxu0 %v2493
        %v2666 = vpop.f32.mrb[0].mxu0
        %v2667 = vadd.f32 %v2533, %v2666
        %v2668 = vpop.f32.mrb[0].mxu0
        %2669 = vmatprep.mubr.f32.mxu0 0.0
        %2670 = vmatmul.mubr.f32.gmra.mrb[0].mxu0 %v2494
        %v2671 = vpop.f32.mrb[0].mxu0
        %v2672 = vadd.f32 %v2533, %v2671
        %v2673 = vpop.f32.mrb[0].mxu0
        %2674 = vmatprep.mubr.f32.mxu0 0.0
        %2675 = vmatmul.mubr.f32.gmra.mrb[0].mxu0 %v2495
        %v2676 = vpop.f32.mrb[0].mxu0
        %v2677 = vadd.f32 %v2533, %v2676
        %v2678 = vpop.f32.mrb[0].mxu0
        %2679 = vmatprep.mubr.f32.mxu0 0.0
        %2680 = vmatmul.mubr.f32.gmra.mrb[0].mxu0 %v2496
        %v2681 = vpop.f32.mrb[0].mxu0
        %v2682 = vadd.f32 %v2533, %v2681
        %v2683 = vpop.f32.mrb[0].mxu0
        %2684 = vmatprep.mubr.f32.mxu0 0.0
        %2685 = vmatmul.mubr.f32.gmra.mrb[0].mxu0 %v2497
        %v2686 = vpop.f32.mrb[0].mxu0
        %v2687 = vadd.f32 %v2533, %v2686
        %v2688 = vpop.f32.mrb[0].mxu0
        %2689 = vmatprep.mubr.f32.mxu0 0.0
        %2690 = vmatmul.mubr.f32.gmra.mrb[0].mxu0 %v2498
        %v2691 = vpop.f32.mrb[0].mxu0
        %v2692 = vadd.f32 %v2533, %v2691
        %v2693 = vpop.f32.mrb[0].mxu0
        %2694 = vmatprep.mubr.f32.mxu0 0.0
        %2695 = vmatmul.mubr.f32.gmra.mrb[0].mxu0 %v2499
        %v2696 = vpop.f32.mrb[0].mxu0
        %v2697 = vadd.f32 %v2533, %v2696
        %v2698 = vpop.f32.mrb[0].mxu0
        %2699 = vmatprep.mubr.f32.mxu0 0.0
        %2700 = vmatmul.mubr.f32.gmra.mrb[0].mxu0 %v2500
        %v2701 = vpop.f32.mrb[0].mxu0
        %v2702 = vadd.f32 %v2533, %v2701
        %v2703 = vpop.f32.mrb[0].mxu0
        %2704 = vmatprep.mubr.f32.mxu0 0.0
        %2705 = vmatmul.mubr.f32.gmra.mrb[0].mxu0 %v2501
        %v2706 = vpop.f32.mrb[0].mxu0
        %v2707 = vadd.f32 %v2533, %v2706
        %v2708 = vpop.f32.mrb[0].mxu0
        %2709 = vmatprep.mubr.f32.mxu0 0.0
        %2710 = vmatmul.mubr.f32.gmra.mrb[0].mxu0 %v2502
        %v2711 = vpop.f32.mrb[0].mxu0
        %v2712 = vadd.f32 %v2533, %v2711
        %v2713 = vpop.f32.mrb[0].mxu0
        %2714 = vmatprep.mubr.f32.mxu0 0.0
        %2715 = vmatmul.mubr.f32.gmra.mrb[0].mxu0 %v2503
        %v2716 = vpop.f32.mrb[0].mxu0
        %v2717 = vadd.f32 %v2533, %v2716
        %v2718 = vpop.f32.mrb[0].mxu0
        %2719 = vmatprep.mubr.f32.mxu0 0.0
        %2720 = vmatmul.mubr.f32.gmra.mrb[0].mxu0 %v2504
        %v2721 = vpop.f32.mrb[0].mxu0
        %v2722 = vadd.f32 %v2533, %v2721
        %v2723 = vpop.f32.mrb[0].mxu0
        %2724 = vmatprep.mubr.f32.mxu0 0.0
        %2725 = vmatmul.mubr.f32.gmra.mrb[0].mxu0 %v2505
        %v2726 = vpop.f32.mrb[0].mxu0
        %v2727 = vadd.f32 %v2533, %v2726
        %v2728 = vpop.f32.mrb[0].mxu0
        %2729 = vmatprep.mubr.f32.mxu0 0.0
        %2730 = vmatmul.mubr.f32.gmra.mrb[0].mxu0 %v2506
        %v2731 = vpop.f32.mrb[0].mxu0
        %v2732 = vadd.f32 %v2533, %v2731
        %v2733 = vpop.f32.mrb[0].mxu0
        %2734 = vmatprep.mubr.f32.mxu0 0.0
        %2735 = vmatmul.mubr.f32.gmra.mrb[0].mxu0 %v2507
        %v2736 = vpop.f32.mrb[0].mxu0
        %v2737 = vadd.f32 %v2533, %v2736
        %v2738 = vpop.f32.mrb[0].mxu0
        %2739 = vmatprep.mubr.f32.mxu0 0.0
        %2740 = vmatmul.mubr.f32.gmra.mrb[0].mxu0 %v2508
        %v2741 = vpop.f32.mrb[0].mxu0
        %v2742 = vadd.f32 %v2533, %v2741
        %v2743 = vpop.f32.mrb[0].mxu0
        %2744 = vmatprep.mubr.f32.mxu0 0.0
        %2745 = vmatmul.mubr.f32.gmra.mrb[0].mxu0 %v2509
        %v2746 = vpop.f32.mrb[0].mxu0
        %v2747 = vadd.f32 %v2533, %v2746
        %v2748 = vpop.f32.mrb[0].mxu0
        %2749 = vmatprep.mubr.f32.mxu0 0.0
        %2750 = vmatmul.mubr.f32.gmra.mrb[0].mxu0 %v2510
        %v2751 = vpop.f32.mrb[0].mxu0
        %v2752 = vadd.f32 %v2533, %v2751
        %v2753 = vpop.f32.mrb[0].mxu0
        %2754 = vmatprep.mubr.f32.mxu0 0.0
        %2755 = vmatmul.mubr.f32.gmra.mrb[0].mxu0 %v2511
        %v2756 = vpop.f32.mrb[0].mxu0
        %v2757 = vadd.f32 %v2533, %v2756
        %v2758 = vpop.f32.mrb[0].mxu0
        %2759 = vdwg.mxu0
        %v2760 = vmax.f32 %v2602, 0.0
        %v2761 = vmax.f32 %v2607, 0.0
        %v2762 = vmax.f32 %v2612, 0.0
        %v2763 = vmax.f32 %v2617, 0.0
        %v2764 = vmax.f32 %v2622, 0.0
        %v2765 = vmax.f32 %v2627, 0.0
        %v2766 = vmax.f32 %v2632, 0.0
        %v2767 = vmax.f32 %v2637, 0.0
        %v2768 = vmax.f32 %v2642, 0.0
        %v2769 = vmax.f32 %v2647, 0.0
        %v2770 = vmax.f32 %v2652, 0.0
        %v2771 = vmax.f32 %v2657, 0.0
        %v2772 = vmax.f32 %v2662, 0.0
        %v2773 = vmax.f32 %v2667, 0.0
        %v2774 = vmax.f32 %v2672, 0.0
        %v2775 = vmax.f32 %v2677, 0.0
        %v2776 = vmax.f32 %v2682, 0.0
        %v2777 = vmax.f32 %v2687, 0.0
        %v2778 = vmax.f32 %v2692, 0.0
        %v2779 = vmax.f32 %v2697, 0.0
        %v2780 = vmax.f32 %v2702, 0.0
        %v2781 = vmax.f32 %v2707, 0.0
        %v2782 = vmax.f32 %v2712, 0.0
        %v2783 = vmax.f32 %v2717, 0.0
        %v2784 = vmax.f32 %v2722, 0.0
        %v2785 = vmax.f32 %v2727, 0.0
        %v2786 = vmax.f32 %v2732, 0.0
        %v2787 = vmax.f32 %v2737, 0.0
        %v2788 = vmax.f32 %v2742, 0.0
        %v2789 = vmax.f32 %v2747, 0.0
        %v2790 = vmax.f32 %v2752, 0.0
        %v2791 = vmax.f32 %v2757, 0.0
        %v2792 = vld [vmem:[%s5] sm:$0xff]
        %v2793 = vld [vmem:[%s5 + $0x8] sm:$0xff]
        %v2794 = vld [vmem:[%s5 + $0x10] sm:$0xff]
        %v2795 = vld [vmem:[%s5 + $0x18] sm:$0xff]
        %v2796 = vld [vmem:[%s5 + $0x20] sm:$0xff]
        %v2797 = vld [vmem:[%s5 + $0x28] sm:$0xff]
        %v2798 = vld [vmem:[%s5 + $0x30] sm:$0xff]
        %v2799 = vld [vmem:[%s5 + $0x38] sm:$0xff]
        %v2800 = vld [vmem:[#allocation10] sm:$0x1]
        %v2802 = vlaneseq
        %v2803 = vshrl.u32 %v2802, 7
        %v2804 = vsub.s32 0, %v2803
        %v2805 = vrot.slane %v2800, %v2804
        %vm2807 = vcmask 523264
        %v2809 = vsel %vm2807, %v2760, 0
        %v2812 = vsel %vm2807, %v2761, 0
        %v2815 = vsel %vm2807, %v2762, 0
        %v2818 = vsel %vm2807, %v2763, 0
        %v2821 = vsel %vm2807, %v2764, 0
        %v2824 = vsel %vm2807, %v2765, 0
        %v2827 = vsel %vm2807, %v2766, 0
        %v2830 = vsel %vm2807, %v2767, 0
        %v2833 = vsel %vm2807, %v2768, 0
        %v2836 = vsel %vm2807, %v2769, 0
        %v2839 = vsel %vm2807, %v2770, 0
        %v2842 = vsel %vm2807, %v2771, 0
        %v2845 = vsel %vm2807, %v2772, 0
        %v2848 = vsel %vm2807, %v2773, 0
        %v2851 = vsel %vm2807, %v2774, 0
        %v2854 = vsel %vm2807, %v2775, 0
        %v2857 = vsel %vm2807, %v2776, 0
        %v2860 = vsel %vm2807, %v2777, 0
        %v2863 = vsel %vm2807, %v2778, 0
        %v2866 = vsel %vm2807, %v2779, 0
        %v2869 = vsel %vm2807, %v2780, 0
        %v2872 = vsel %vm2807, %v2781, 0
        %v2875 = vsel %vm2807, %v2782, 0
        %v2878 = vsel %vm2807, %v2783, 0
        %v2881 = vsel %vm2807, %v2784, 0
        %v2884 = vsel %vm2807, %v2785, 0
        %v2887 = vsel %vm2807, %v2786, 0
        %v2890 = vsel %vm2807, %v2787, 0
        %v2893 = vsel %vm2807, %v2788, 0
        %v2896 = vsel %vm2807, %v2789, 0
        %v2899 = vsel %vm2807, %v2790, 0
        %v2902 = vsel %vm2807, %v2791, 0
        %2904 = vmatprep.subr.mxu0 0.0
        %2905 = vmatpush1.msra.mxu0 %v2792
        %2906 = vmatprep.subr.mxu0 0.0
        %2907 = vmatpush1.msra.mxu0 %v2793
        %2908 = vmatprep.subr.mxu0 0.0
        %2909 = vmatpush1.msra.mxu0 %v2794
        %2910 = vmatprep.subr.mxu0 0.0
        %2911 = vmatpush1.msra.mxu0 %v2795
        %2912 = vmatprep.subr.mxu0 0.0
        %2913 = vmatpush1.msra.mxu0 %v2796
        %2914 = vmatprep.subr.mxu0 0.0
        %2915 = vmatpush1.msra.mxu0 %v2797
        %2916 = vmatprep.subr.mxu0 0.0
        %2917 = vmatpush1.msra.mxu0 %v2798
        %2918 = vmatprep.subr.mxu0 0.0
        %2919 = vmatpush1.msra.mxu0 %v2799
        %2920 = vmatprep.subr.mxu0 0.0
        %2921 = vmatpush1.msra.mxu0 0.0
        %2922 = vmatprep.subr.mxu0 0.0
        %2923 = vmatpush1.msra.mxu0 0.0
        %2924 = vmatprep.subr.mxu0 0.0
        %2925 = vmatpush1.msra.mxu0 0.0
        %2926 = vmatprep.subr.mxu0 0.0
        %2927 = vmatpush1.msra.mxu0 0.0
        %2928 = vmatprep.subr.mxu0 0.0
        %2929 = vmatpush1.msra.mxu0 0.0
        %2930 = vmatprep.subr.mxu0 0.0
        %2931 = vmatpush1.msra.mxu0 0.0
        %2932 = vmatprep.subr.mxu0 0.0
        %2933 = vmatpush1.msra.mxu0 0.0
        %2934 = vmatprep.subr.mxu0 0.0
        %2935 = vmatpush1.msra.mxu0 0.0
        %2936 = vmatprep.subr.mxu0 0.0
        %2937 = vmatpush1.msra.mxu0 0.0
        %2938 = vmatprep.subr.mxu0 0.0
        %2939 = vmatpush1.msra.mxu0 0.0
        %2940 = vmatprep.subr.mxu0 0.0
        %2941 = vmatpush1.msra.mxu0 0.0
        %2942 = vmatprep.subr.mxu0 0.0
        %2943 = vmatpush1.msra.mxu0 0.0
        %2944 = vmatprep.subr.mxu0 0.0
        %2945 = vmatpush1.msra.mxu0 0.0
        %2946 = vmatprep.subr.mxu0 0.0
        %2947 = vmatpush1.msra.mxu0 0.0
        %2948 = vmatprep.subr.mxu0 0.0
        %2949 = vmatpush1.msra.mxu0 0.0
        %2950 = vmatprep.subr.mxu0 0.0
        %2951 = vmatpush1.msra.mxu0 0.0
        %2952 = vmatprep.subr.mxu0 0.0
        %2953 = vmatpush1.msra.mxu0 0.0
        %2954 = vmatprep.subr.mxu0 0.0
        %2955 = vmatpush1.msra.mxu0 0.0
        %2956 = vmatprep.subr.mxu0 0.0
        %2957 = vmatpush1.msra.mxu0 0.0
        %2958 = vmatprep.subr.mxu0 0.0
        %2959 = vmatpush1.msra.mxu0 0.0
        %2960 = vmatprep.subr.mxu0 0.0
        %2961 = vmatpush1.msra.mxu0 0.0
        %2962 = vmatprep.subr.mxu0 0.0
        %2963 = vmatpush1.msra.mxu0 0.0
        %2964 = vmatprep.subr.mxu0 0.0
        %2965 = vmatpush1.msra.mxu0 0.0
        %2966 = vmatprep.subr.mxu0 0.0
        %2967 = vmatpush1.msra.mxu0 0.0
        %2968 = vmatprep.mubr.f32.mxu0 0.0
        %2969 = vmatmul.mubr.f32.gmra.mrb[0].mxu0 %v2809
        %v2970 = vpop.f32.mrb[0].mxu0
        %v2971 = vadd.f32 %v2805, %v2970
        %v2972 = vpop.f32.mrb[0].mxu0
        %2973 = vmatprep.mubr.f32.mxu0 0.0
        %2974 = vmatmul.mubr.f32.gmra.mrb[0].mxu0 %v2812
        %v2975 = vpop.f32.mrb[0].mxu0
        %v2976 = vadd.f32 %v2805, %v2975
        %v2977 = vpop.f32.mrb[0].mxu0
        %2978 = vmatprep.mubr.f32.mxu0 0.0
        %2979 = vmatmul.mubr.f32.gmra.mrb[0].mxu0 %v2815
        %v2980 = vpop.f32.mrb[0].mxu0
        %v2981 = vadd.f32 %v2805, %v2980
        %v2982 = vpop.f32.mrb[0].mxu0
        %2983 = vmatprep.mubr.f32.mxu0 0.0
        %2984 = vmatmul.mubr.f32.gmra.mrb[0].mxu0 %v2818
        %v2985 = vpop.f32.mrb[0].mxu0
        %v2986 = vadd.f32 %v2805, %v2985
        %v2987 = vpop.f32.mrb[0].mxu0
        %2988 = vmatprep.mubr.f32.mxu0 0.0
        %2989 = vmatmul.mubr.f32.gmra.mrb[0].mxu0 %v2821
        %v2990 = vpop.f32.mrb[0].mxu0
        %v2991 = vadd.f32 %v2805, %v2990
        %v2992 = vpop.f32.mrb[0].mxu0
        %2993 = vmatprep.mubr.f32.mxu0 0.0
        %2994 = vmatmul.mubr.f32.gmra.mrb[0].mxu0 %v2824
        %v2995 = vpop.f32.mrb[0].mxu0
        %v2996 = vadd.f32 %v2805, %v2995
        %v2997 = vpop.f32.mrb[0].mxu0
        %2998 = vmatprep.mubr.f32.mxu0 0.0
        %2999 = vmatmul.mubr.f32.gmra.mrb[0].mxu0 %v2827
        %v3000 = vpop.f32.mrb[0].mxu0
        %v3001 = vadd.f32 %v2805, %v3000
        %v3002 = vpop.f32.mrb[0].mxu0
        %3003 = vmatprep.mubr.f32.mxu0 0.0
        %3004 = vmatmul.mubr.f32.gmra.mrb[0].mxu0 %v2830
        %v3005 = vpop.f32.mrb[0].mxu0
        %v3006 = vadd.f32 %v2805, %v3005
        %v3007 = vpop.f32.mrb[0].mxu0
        %3008 = vmatprep.mubr.f32.mxu0 0.0
        %3009 = vmatmul.mubr.f32.gmra.mrb[0].mxu0 %v2833
        %v3010 = vpop.f32.mrb[0].mxu0
        %v3011 = vadd.f32 %v2805, %v3010
        %v3012 = vpop.f32.mrb[0].mxu0
        %3013 = vmatprep.mubr.f32.mxu0 0.0
        %3014 = vmatmul.mubr.f32.gmra.mrb[0].mxu0 %v2836
        %v3015 = vpop.f32.mrb[0].mxu0
        %v3016 = vadd.f32 %v2805, %v3015
        %v3017 = vpop.f32.mrb[0].mxu0
        %3018 = vmatprep.mubr.f32.mxu0 0.0
        %3019 = vmatmul.mubr.f32.gmra.mrb[0].mxu0 %v2839
        %v3020 = vpop.f32.mrb[0].mxu0
        %v3021 = vadd.f32 %v2805, %v3020
        %v3022 = vpop.f32.mrb[0].mxu0
        %3023 = vmatprep.mubr.f32.mxu0 0.0
        %3024 = vmatmul.mubr.f32.gmra.mrb[0].mxu0 %v2842
        %v3025 = vpop.f32.mrb[0].mxu0
        %v3026 = vadd.f32 %v2805, %v3025
        %v3027 = vpop.f32.mrb[0].mxu0
        %3028 = vmatprep.mubr.f32.mxu0 0.0
        %3029 = vmatmul.mubr.f32.gmra.mrb[0].mxu0 %v2845
        %v3030 = vpop.f32.mrb[0].mxu0
        %v3031 = vadd.f32 %v2805, %v3030
        %v3032 = vpop.f32.mrb[0].mxu0
        %3033 = vmatprep.mubr.f32.mxu0 0.0
        %3034 = vmatmul.mubr.f32.gmra.mrb[0].mxu0 %v2848
        %v3035 = vpop.f32.mrb[0].mxu0
        %v3036 = vadd.f32 %v2805, %v3035
        %v3037 = vpop.f32.mrb[0].mxu0
        %3038 = vmatprep.mubr.f32.mxu0 0.0
        %3039 = vmatmul.mubr.f32.gmra.mrb[0].mxu0 %v2851
        %v3040 = vpop.f32.mrb[0].mxu0
        %v3041 = vadd.f32 %v2805, %v3040
        %v3042 = vpop.f32.mrb[0].mxu0
        %3043 = vmatprep.mubr.f32.mxu0 0.0
        %3044 = vmatmul.mubr.f32.gmra.mrb[0].mxu0 %v2854
        %v3045 = vpop.f32.mrb[0].mxu0
        %v3046 = vadd.f32 %v2805, %v3045
        %v3047 = vpop.f32.mrb[0].mxu0
        %3048 = vmatprep.mubr.f32.mxu0 0.0
        %3049 = vmatmul.mubr.f32.gmra.mrb[0].mxu0 %v2857
        %v3050 = vpop.f32.mrb[0].mxu0
        %v3051 = vadd.f32 %v2805, %v3050
        %v3052 = vpop.f32.mrb[0].mxu0
        %3053 = vmatprep.mubr.f32.mxu0 0.0
        %3054 = vmatmul.mubr.f32.gmra.mrb[0].mxu0 %v2860
        %v3055 = vpop.f32.mrb[0].mxu0
        %v3056 = vadd.f32 %v2805, %v3055
        %v3057 = vpop.f32.mrb[0].mxu0
        %3058 = vmatprep.mubr.f32.mxu0 0.0
        %3059 = vmatmul.mubr.f32.gmra.mrb[0].mxu0 %v2863
        %v3060 = vpop.f32.mrb[0].mxu0
        %v3061 = vadd.f32 %v2805, %v3060
        %v3062 = vpop.f32.mrb[0].mxu0
        %3063 = vmatprep.mubr.f32.mxu0 0.0
        %3064 = vmatmul.mubr.f32.gmra.mrb[0].mxu0 %v2866
        %v3065 = vpop.f32.mrb[0].mxu0
        %v3066 = vadd.f32 %v2805, %v3065
        %v3067 = vpop.f32.mrb[0].mxu0
        %3068 = vmatprep.mubr.f32.mxu0 0.0
        %3069 = vmatmul.mubr.f32.gmra.mrb[0].mxu0 %v2869
        %v3070 = vpop.f32.mrb[0].mxu0
        %v3071 = vadd.f32 %v2805, %v3070
        %v3072 = vpop.f32.mrb[0].mxu0
        %3073 = vmatprep.mubr.f32.mxu0 0.0
        %3074 = vmatmul.mubr.f32.gmra.mrb[0].mxu0 %v2872
        %v3075 = vpop.f32.mrb[0].mxu0
        %v3076 = vadd.f32 %v2805, %v3075
        %v3077 = vpop.f32.mrb[0].mxu0
        %3078 = vmatprep.mubr.f32.mxu0 0.0
        %3079 = vmatmul.mubr.f32.gmra.mrb[0].mxu0 %v2875
        %v3080 = vpop.f32.mrb[0].mxu0
        %v3081 = vadd.f32 %v2805, %v3080
        %v3082 = vpop.f32.mrb[0].mxu0
        %3083 = vmatprep.mubr.f32.mxu0 0.0
        %3084 = vmatmul.mubr.f32.gmra.mrb[0].mxu0 %v2878
        %v3085 = vpop.f32.mrb[0].mxu0
        %v3086 = vadd.f32 %v2805, %v3085
        %v3087 = vpop.f32.mrb[0].mxu0
        %3088 = vmatprep.mubr.f32.mxu0 0.0
        %3089 = vmatmul.mubr.f32.gmra.mrb[0].mxu0 %v2881
        %v3090 = vpop.f32.mrb[0].mxu0
        %v3091 = vadd.f32 %v2805, %v3090
        %v3092 = vpop.f32.mrb[0].mxu0
        %3093 = vmatprep.mubr.f32.mxu0 0.0
        %3094 = vmatmul.mubr.f32.gmra.mrb[0].mxu0 %v2884
        %v3095 = vpop.f32.mrb[0].mxu0
        %v3096 = vadd.f32 %v2805, %v3095
        %v3097 = vpop.f32.mrb[0].mxu0
        %3098 = vmatprep.mubr.f32.mxu0 0.0
        %3099 = vmatmul.mubr.f32.gmra.mrb[0].mxu0 %v2887
        %v3100 = vpop.f32.mrb[0].mxu0
        %v3101 = vadd.f32 %v2805, %v3100
        %v3102 = vpop.f32.mrb[0].mxu0
        %3103 = vmatprep.mubr.f32.mxu0 0.0
        %3104 = vmatmul.mubr.f32.gmra.mrb[0].mxu0 %v2890
        %v3105 = vpop.f32.mrb[0].mxu0
        %v3106 = vadd.f32 %v2805, %v3105
        %v3107 = vpop.f32.mrb[0].mxu0
        %3108 = vmatprep.mubr.f32.mxu0 0.0
        %3109 = vmatmul.mubr.f32.gmra.mrb[0].mxu0 %v2893
        %v3110 = vpop.f32.mrb[0].mxu0
        %v3111 = vadd.f32 %v2805, %v3110
        %v3112 = vpop.f32.mrb[0].mxu0
        %3113 = vmatprep.mubr.f32.mxu0 0.0
        %3114 = vmatmul.mubr.f32.gmra.mrb[0].mxu0 %v2896
        %v3115 = vpop.f32.mrb[0].mxu0
        %v3116 = vadd.f32 %v2805, %v3115
        %v3117 = vpop.f32.mrb[0].mxu0
        %3118 = vmatprep.mubr.f32.mxu0 0.0
        %3119 = vmatmul.mubr.f32.gmra.mrb[0].mxu0 %v2899
        %v3120 = vpop.f32.mrb[0].mxu0
        %v3121 = vadd.f32 %v2805, %v3120
        %v3122 = vpop.f32.mrb[0].mxu0
        %3123 = vmatprep.mubr.f32.mxu0 0.0
        %3124 = vmatmul.mubr.f32.gmra.mrb[0].mxu0 %v2902
        %v3125 = vpop.f32.mrb[0].mxu0
        %v3126 = vadd.f32 %v2805, %v3125
        %v3127 = vpop.f32.mrb[0].mxu0
        %3128 = vdwg.mxu0
        %v3129 = vmax.f32 %v2971, 0.0
        %v3130 = vmax.f32 %v2976, 0.0
        %v3131 = vmax.f32 %v2981, 0.0
        %v3132 = vmax.f32 %v2986, 0.0
        %v3133 = vmax.f32 %v2991, 0.0
        %v3134 = vmax.f32 %v2996, 0.0
        %v3135 = vmax.f32 %v3001, 0.0
        %v3136 = vmax.f32 %v3006, 0.0
        %v3137 = vmax.f32 %v3011, 0.0
        %v3138 = vmax.f32 %v3016, 0.0
        %v3139 = vmax.f32 %v3021, 0.0
        %v3140 = vmax.f32 %v3026, 0.0
        %v3141 = vmax.f32 %v3031, 0.0
        %v3142 = vmax.f32 %v3036, 0.0
        %v3143 = vmax.f32 %v3041, 0.0
        %v3144 = vmax.f32 %v3046, 0.0
        %v3145 = vmax.f32 %v3051, 0.0
        %v3146 = vmax.f32 %v3056, 0.0
        %v3147 = vmax.f32 %v3061, 0.0
        %v3148 = vmax.f32 %v3066, 0.0
        %v3149 = vmax.f32 %v3071, 0.0
        %v3150 = vmax.f32 %v3076, 0.0
        %v3151 = vmax.f32 %v3081, 0.0
        %v3152 = vmax.f32 %v3086, 0.0
        %v3153 = vmax.f32 %v3091, 0.0
        %v3154 = vmax.f32 %v3096, 0.0
        %v3155 = vmax.f32 %v3101, 0.0
        %v3156 = vmax.f32 %v3106, 0.0
        %v3157 = vmax.f32 %v3111, 0.0
        %v3158 = vmax.f32 %v3116, 0.0
        %v3159 = vmax.f32 %v3121, 0.0
        %v3160 = vmax.f32 %v3126, 0.0
        %v3161 = vld [vmem:[#allocation11] sm:$0xff]
        %v3162 = vld [vmem:[#allocation11 + $0x8] sm:$0xf]
        %v3163 = vld [vmem:[#allocation13] sm:$0x1]
        %v3165 = vlaneseq
        %v3166 = vshrl.u32 %v3165, 7
        %v3167 = vsub.s32 0, %v3166
        %v3168 = vrot.slane %v3163, %v3167
        %vm3170 = vcmask 97280
        %v3172 = vsel %vm3170, %v3129, 0
        %v3175 = vsel %vm3170, %v3130, 0
        %v3178 = vsel %vm3170, %v3131, 0
        %v3181 = vsel %vm3170, %v3132, 0
        %v3184 = vsel %vm3170, %v3133, 0
        %v3187 = vsel %vm3170, %v3134, 0
        %v3190 = vsel %vm3170, %v3135, 0
        %v3193 = vsel %vm3170, %v3136, 0
        %v3196 = vsel %vm3170, %v3137, 0
        %v3199 = vsel %vm3170, %v3138, 0
        %v3202 = vsel %vm3170, %v3139, 0
        %v3205 = vsel %vm3170, %v3140, 0
        %v3208 = vsel %vm3170, %v3141, 0
        %v3211 = vsel %vm3170, %v3142, 0
        %v3214 = vsel %vm3170, %v3143, 0
        %v3217 = vsel %vm3170, %v3144, 0
        %v3220 = vsel %vm3170, %v3145, 0
        %v3223 = vsel %vm3170, %v3146, 0
        %v3226 = vsel %vm3170, %v3147, 0
        %v3229 = vsel %vm3170, %v3148, 0
        %v3232 = vsel %vm3170, %v3149, 0
        %v3235 = vsel %vm3170, %v3150, 0
        %v3238 = vsel %vm3170, %v3151, 0
        %v3241 = vsel %vm3170, %v3152, 0
        %v3244 = vsel %vm3170, %v3153, 0
        %v3247 = vsel %vm3170, %v3154, 0
        %v3250 = vsel %vm3170, %v3155, 0
        %v3253 = vsel %vm3170, %v3156, 0
        %v3256 = vsel %vm3170, %v3157, 0
        %v3259 = vsel %vm3170, %v3158, 0
        %v3262 = vsel %vm3170, %v3159, 0
        %v3265 = vsel %vm3170, %v3160, 0
        %vm3267 = vcmask 1043456
        %v3269 = vsel %vm3267, %v3162, 0
        %3271 = vmatprep.subr.mxu0 0.0
        %3272 = vmatpush1.msra.mxu0 %v3161
        %3273 = vmatprep.subr.mxu0 0.0
        %3274 = vmatpush1.msra.mxu0 %v3269
        %3275 = vmatprep.subr.mxu0 0.0
        %3276 = vmatpush1.msra.mxu0 0.0
        %3277 = vmatprep.subr.mxu0 0.0
        %3278 = vmatpush1.msra.mxu0 0.0
        %3279 = vmatprep.subr.mxu0 0.0
        %3280 = vmatpush1.msra.mxu0 0.0
        %3281 = vmatprep.subr.mxu0 0.0
        %3282 = vmatpush1.msra.mxu0 0.0
        %3283 = vmatprep.subr.mxu0 0.0
        %3284 = vmatpush1.msra.mxu0 0.0
        %3285 = vmatprep.subr.mxu0 0.0
        %3286 = vmatpush1.msra.mxu0 0.0
        %3287 = vmatprep.subr.mxu0 0.0
        %3288 = vmatpush1.msra.mxu0 0.0
        %3289 = vmatprep.subr.mxu0 0.0
        %3290 = vmatpush1.msra.mxu0 0.0
        %3291 = vmatprep.subr.mxu0 0.0
        %3292 = vmatpush1.msra.mxu0 0.0
        %3293 = vmatprep.subr.mxu0 0.0
        %3294 = vmatpush1.msra.mxu0 0.0
        %3295 = vmatprep.subr.mxu0 0.0
        %3296 = vmatpush1.msra.mxu0 0.0
        %3297 = vmatprep.subr.mxu0 0.0
        %3298 = vmatpush1.msra.mxu0 0.0
        %3299 = vmatprep.subr.mxu0 0.0
        %3300 = vmatpush1.msra.mxu0 0.0
        %3301 = vmatprep.subr.mxu0 0.0
        %3302 = vmatpush1.msra.mxu0 0.0
        %3303 = vmatprep.subr.mxu0 0.0
        %3304 = vmatpush1.msra.mxu0 0.0
        %3305 = vmatprep.subr.mxu0 0.0
        %3306 = vmatpush1.msra.mxu0 0.0
        %3307 = vmatprep.subr.mxu0 0.0
        %3308 = vmatpush1.msra.mxu0 0.0
        %3309 = vmatprep.subr.mxu0 0.0
        %3310 = vmatpush1.msra.mxu0 0.0
        %3311 = vmatprep.subr.mxu0 0.0
        %3312 = vmatpush1.msra.mxu0 0.0
        %3313 = vmatprep.subr.mxu0 0.0
        %3314 = vmatpush1.msra.mxu0 0.0
        %3315 = vmatprep.subr.mxu0 0.0
        %3316 = vmatpush1.msra.mxu0 0.0
        %3317 = vmatprep.subr.mxu0 0.0
        %3318 = vmatpush1.msra.mxu0 0.0
        %3319 = vmatprep.subr.mxu0 0.0
        %3320 = vmatpush1.msra.mxu0 0.0
        %3321 = vmatprep.subr.mxu0 0.0
        %3322 = vmatpush1.msra.mxu0 0.0
        %3323 = vmatprep.subr.mxu0 0.0
        %3324 = vmatpush1.msra.mxu0 0.0
        %3325 = vmatprep.subr.mxu0 0.0
        %3326 = vmatpush1.msra.mxu0 0.0
        %3327 = vmatprep.subr.mxu0 0.0
        %3328 = vmatpush1.msra.mxu0 0.0
        %3329 = vmatprep.subr.mxu0 0.0
        %3330 = vmatpush1.msra.mxu0 0.0
        %3331 = vmatprep.subr.mxu0 0.0
        %3332 = vmatpush1.msra.mxu0 0.0
        %3333 = vmatprep.subr.mxu0 0.0
        %3334 = vmatpush1.msra.mxu0 0.0
        %3335 = vmatprep.mubr.f32.mxu0 0.0
        %3336 = vmatmul.mubr.f32.gmra.mrb[0].mxu0 %v3172
        %v3337 = vpop.f32.mrb[0].mxu0
        %v3338 = vadd.f32 %v3168, %v3337
        %v3339 = vpop.f32.mrb[0].mxu0
        %3340 = vmatprep.mubr.f32.mxu0 0.0
        %3341 = vmatmul.mubr.f32.gmra.mrb[0].mxu0 %v3175
        %v3342 = vpop.f32.mrb[0].mxu0
        %v3343 = vadd.f32 %v3168, %v3342
        %v3344 = vpop.f32.mrb[0].mxu0
        %3345 = vmatprep.mubr.f32.mxu0 0.0
        %3346 = vmatmul.mubr.f32.gmra.mrb[0].mxu0 %v3178
        %v3347 = vpop.f32.mrb[0].mxu0
        %v3348 = vadd.f32 %v3168, %v3347
        %v3349 = vpop.f32.mrb[0].mxu0
        %3350 = vmatprep.mubr.f32.mxu0 0.0
        %3351 = vmatmul.mubr.f32.gmra.mrb[0].mxu0 %v3181
        %v3352 = vpop.f32.mrb[0].mxu0
        %v3353 = vadd.f32 %v3168, %v3352
        %v3354 = vpop.f32.mrb[0].mxu0
        %3355 = vmatprep.mubr.f32.mxu0 0.0
        %3356 = vmatmul.mubr.f32.gmra.mrb[0].mxu0 %v3184
        %v3357 = vpop.f32.mrb[0].mxu0
        %v3358 = vadd.f32 %v3168, %v3357
        %v3359 = vpop.f32.mrb[0].mxu0
        %3360 = vmatprep.mubr.f32.mxu0 0.0
        %3361 = vmatmul.mubr.f32.gmra.mrb[0].mxu0 %v3187
        %v3362 = vpop.f32.mrb[0].mxu0
        %v3363 = vadd.f32 %v3168, %v3362
        %v3364 = vpop.f32.mrb[0].mxu0
        %3365 = vmatprep.mubr.f32.mxu0 0.0
        %3366 = vmatmul.mubr.f32.gmra.mrb[0].mxu0 %v3190
        %v3367 = vpop.f32.mrb[0].mxu0
        %v3368 = vadd.f32 %v3168, %v3367
        %v3369 = vpop.f32.mrb[0].mxu0
        %3370 = vmatprep.mubr.f32.mxu0 0.0
        %3371 = vmatmul.mubr.f32.gmra.mrb[0].mxu0 %v3193
        %v3372 = vpop.f32.mrb[0].mxu0
        %v3373 = vadd.f32 %v3168, %v3372
        %v3374 = vpop.f32.mrb[0].mxu0
        %3375 = vmatprep.mubr.f32.mxu0 0.0
        %3376 = vmatmul.mubr.f32.gmra.mrb[0].mxu0 %v3196
        %v3377 = vpop.f32.mrb[0].mxu0
        %v3378 = vadd.f32 %v3168, %v3377
        %v3379 = vpop.f32.mrb[0].mxu0
        %3380 = vmatprep.mubr.f32.mxu0 0.0
        %3381 = vmatmul.mubr.f32.gmra.mrb[0].mxu0 %v3199
        %v3382 = vpop.f32.mrb[0].mxu0
        %v3383 = vadd.f32 %v3168, %v3382
        %v3384 = vpop.f32.mrb[0].mxu0
        %3385 = vmatprep.mubr.f32.mxu0 0.0
        %3386 = vmatmul.mubr.f32.gmra.mrb[0].mxu0 %v3202
        %v3387 = vpop.f32.mrb[0].mxu0
        %v3388 = vadd.f32 %v3168, %v3387
        %v3389 = vpop.f32.mrb[0].mxu0
        %3390 = vmatprep.mubr.f32.mxu0 0.0
        %3391 = vmatmul.mubr.f32.gmra.mrb[0].mxu0 %v3205
        %v3392 = vpop.f32.mrb[0].mxu0
        %v3393 = vadd.f32 %v3168, %v3392
        %v3394 = vpop.f32.mrb[0].mxu0
        %3395 = vmatprep.mubr.f32.mxu0 0.0
        %3396 = vmatmul.mubr.f32.gmra.mrb[0].mxu0 %v3208
        %v3397 = vpop.f32.mrb[0].mxu0
        %v3398 = vadd.f32 %v3168, %v3397
        %v3399 = vpop.f32.mrb[0].mxu0
        %3400 = vmatprep.mubr.f32.mxu0 0.0
        %3401 = vmatmul.mubr.f32.gmra.mrb[0].mxu0 %v3211
        %v3402 = vpop.f32.mrb[0].mxu0
        %v3403 = vadd.f32 %v3168, %v3402
        %v3404 = vpop.f32.mrb[0].mxu0
        %3405 = vmatprep.mubr.f32.mxu0 0.0
        %3406 = vmatmul.mubr.f32.gmra.mrb[0].mxu0 %v3214
        %v3407 = vpop.f32.mrb[0].mxu0
        %v3408 = vadd.f32 %v3168, %v3407
        %v3409 = vpop.f32.mrb[0].mxu0
        %3410 = vmatprep.mubr.f32.mxu0 0.0
        %3411 = vmatmul.mubr.f32.gmra.mrb[0].mxu0 %v3217
        %v3412 = vpop.f32.mrb[0].mxu0
        %v3413 = vadd.f32 %v3168, %v3412
        %v3414 = vpop.f32.mrb[0].mxu0
        %3415 = vmatprep.mubr.f32.mxu0 0.0
        %3416 = vmatmul.mubr.f32.gmra.mrb[0].mxu0 %v3220
        %v3417 = vpop.f32.mrb[0].mxu0
        %v3418 = vadd.f32 %v3168, %v3417
        %v3419 = vpop.f32.mrb[0].mxu0
        %3420 = vmatprep.mubr.f32.mxu0 0.0
        %3421 = vmatmul.mubr.f32.gmra.mrb[0].mxu0 %v3223
        %v3422 = vpop.f32.mrb[0].mxu0
        %v3423 = vadd.f32 %v3168, %v3422
        %v3424 = vpop.f32.mrb[0].mxu0
        %3425 = vmatprep.mubr.f32.mxu0 0.0
        %3426 = vmatmul.mubr.f32.gmra.mrb[0].mxu0 %v3226
        %v3427 = vpop.f32.mrb[0].mxu0
        %v3428 = vadd.f32 %v3168, %v3427
        %v3429 = vpop.f32.mrb[0].mxu0
        %3430 = vmatprep.mubr.f32.mxu0 0.0
        %3431 = vmatmul.mubr.f32.gmra.mrb[0].mxu0 %v3229
        %v3432 = vpop.f32.mrb[0].mxu0
        %v3433 = vadd.f32 %v3168, %v3432
        %v3434 = vpop.f32.mrb[0].mxu0
        %3435 = vmatprep.mubr.f32.mxu0 0.0
        %3436 = vmatmul.mubr.f32.gmra.mrb[0].mxu0 %v3232
        %v3437 = vpop.f32.mrb[0].mxu0
        %v3438 = vadd.f32 %v3168, %v3437
        %v3439 = vpop.f32.mrb[0].mxu0
        %3440 = vmatprep.mubr.f32.mxu0 0.0
        %3441 = vmatmul.mubr.f32.gmra.mrb[0].mxu0 %v3235
        %v3442 = vpop.f32.mrb[0].mxu0
        %v3443 = vadd.f32 %v3168, %v3442
        %v3444 = vpop.f32.mrb[0].mxu0
        %3445 = vmatprep.mubr.f32.mxu0 0.0
        %3446 = vmatmul.mubr.f32.gmra.mrb[0].mxu0 %v3238
        %v3447 = vpop.f32.mrb[0].mxu0
        %v3448 = vadd.f32 %v3168, %v3447
        %v3449 = vpop.f32.mrb[0].mxu0
        %3450 = vmatprep.mubr.f32.mxu0 0.0
        %3451 = vmatmul.mubr.f32.gmra.mrb[0].mxu0 %v3241
        %v3452 = vpop.f32.mrb[0].mxu0
        %v3453 = vadd.f32 %v3168, %v3452
        %v3454 = vpop.f32.mrb[0].mxu0
        %3455 = vmatprep.mubr.f32.mxu0 0.0
        %3456 = vmatmul.mubr.f32.gmra.mrb[0].mxu0 %v3244
        %v3457 = vpop.f32.mrb[0].mxu0
        %v3458 = vadd.f32 %v3168, %v3457
        %v3459 = vpop.f32.mrb[0].mxu0
        %3460 = vmatprep.mubr.f32.mxu0 0.0
        %3461 = vmatmul.mubr.f32.gmra.mrb[0].mxu0 %v3247
        %v3462 = vpop.f32.mrb[0].mxu0
        %v3463 = vadd.f32 %v3168, %v3462
        %v3464 = vpop.f32.mrb[0].mxu0
        %3465 = vmatprep.mubr.f32.mxu0 0.0
        %3466 = vmatmul.mubr.f32.gmra.mrb[0].mxu0 %v3250
        %v3467 = vpop.f32.mrb[0].mxu0
        %v3468 = vadd.f32 %v3168, %v3467
        %v3469 = vpop.f32.mrb[0].mxu0
        %3470 = vmatprep.mubr.f32.mxu0 0.0
        %3471 = vmatmul.mubr.f32.gmra.mrb[0].mxu0 %v3253
        %v3472 = vpop.f32.mrb[0].mxu0
        %v3473 = vadd.f32 %v3168, %v3472
        %v3474 = vpop.f32.mrb[0].mxu0
        %3475 = vmatprep.mubr.f32.mxu0 0.0
        %3476 = vmatmul.mubr.f32.gmra.mrb[0].mxu0 %v3256
        %v3477 = vpop.f32.mrb[0].mxu0
        %v3478 = vadd.f32 %v3168, %v3477
        %v3479 = vpop.f32.mrb[0].mxu0
        %3480 = vmatprep.mubr.f32.mxu0 0.0
        %3481 = vmatmul.mubr.f32.gmra.mrb[0].mxu0 %v3259
        %v3482 = vpop.f32.mrb[0].mxu0
        %v3483 = vadd.f32 %v3168, %v3482
        %v3484 = vpop.f32.mrb[0].mxu0
        %3485 = vmatprep.mubr.f32.mxu0 0.0
        %3486 = vmatmul.mubr.f32.gmra.mrb[0].mxu0 %v3262
        %v3487 = vpop.f32.mrb[0].mxu0
        %v3488 = vadd.f32 %v3168, %v3487
        %v3489 = vpop.f32.mrb[0].mxu0
        %3490 = vmatprep.mubr.f32.mxu0 0.0
        %3491 = vmatmul.mubr.f32.gmra.mrb[0].mxu0 %v3265
        %v3492 = vpop.f32.mrb[0].mxu0
        %v3493 = vadd.f32 %v3168, %v3492
        %v3494 = vpop.f32.mrb[0].mxu0
        %3495 = vdwg.mxu0
        %v3496 = vmax.f32 %v3338, 0.0
        %v3497 = vmax.f32 %v3343, 0.0
        %v3498 = vmax.f32 %v3348, 0.0
        %v3499 = vmax.f32 %v3353, 0.0
        %v3500 = vmax.f32 %v3358, 0.0
        %v3501 = vmax.f32 %v3363, 0.0
        %v3502 = vmax.f32 %v3368, 0.0
        %v3503 = vmax.f32 %v3373, 0.0
        %v3504 = vmax.f32 %v3378, 0.0
        %v3505 = vmax.f32 %v3383, 0.0
        %v3506 = vmax.f32 %v3388, 0.0
        %v3507 = vmax.f32 %v3393, 0.0
        %v3508 = vmax.f32 %v3398, 0.0
        %v3509 = vmax.f32 %v3403, 0.0
        %v3510 = vmax.f32 %v3408, 0.0
        %v3511 = vmax.f32 %v3413, 0.0
        %v3512 = vmax.f32 %v3418, 0.0
        %v3513 = vmax.f32 %v3423, 0.0
        %v3514 = vmax.f32 %v3428, 0.0
        %v3515 = vmax.f32 %v3433, 0.0
        %v3516 = vmax.f32 %v3438, 0.0
        %v3517 = vmax.f32 %v3443, 0.0
        %v3518 = vmax.f32 %v3448, 0.0
        %v3519 = vmax.f32 %v3453, 0.0
        %v3520 = vmax.f32 %v3458, 0.0
        %v3521 = vmax.f32 %v3463, 0.0
        %v3522 = vmax.f32 %v3468, 0.0
        %v3523 = vmax.f32 %v3473, 0.0
        %v3524 = vmax.f32 %v3478, 0.0
        %v3525 = vmax.f32 %v3483, 0.0
        %v3526 = vmax.f32 %v3488, 0.0
        %v3527 = vmax.f32 %v3493, 0.0
        %v3528 = vld [vmem:[#allocation14] sm:$0xff]
        %v3529 = vld [vmem:[#allocation14 + $0x8] sm:$0xf]
        %v3530 = vld [vmem:[#allocation16] sm:$0x1]
        %v3532 = vlaneseq
        %v3533 = vshrl.u32 %v3532, 7
        %v3534 = vsub.s32 0, %v3533
        %v3535 = vrot.slane %v3530, %v3534
        %v3538 = vsel %vm3170, %v3496, 0
        %v3541 = vsel %vm3170, %v3497, 0
        %v3544 = vsel %vm3170, %v3498, 0
        %v3547 = vsel %vm3170, %v3499, 0
        %v3550 = vsel %vm3170, %v3500, 0
        %v3553 = vsel %vm3170, %v3501, 0
        %v3556 = vsel %vm3170, %v3502, 0
        %v3559 = vsel %vm3170, %v3503, 0
        %v3562 = vsel %vm3170, %v3504, 0
        %v3565 = vsel %vm3170, %v3505, 0
        %v3568 = vsel %vm3170, %v3506, 0
        %v3571 = vsel %vm3170, %v3507, 0
        %v3574 = vsel %vm3170, %v3508, 0
        %v3577 = vsel %vm3170, %v3509, 0
        %v3580 = vsel %vm3170, %v3510, 0
        %v3583 = vsel %vm3170, %v3511, 0
        %v3586 = vsel %vm3170, %v3512, 0
        %v3589 = vsel %vm3170, %v3513, 0
        %v3592 = vsel %vm3170, %v3514, 0
        %v3595 = vsel %vm3170, %v3515, 0
        %v3598 = vsel %vm3170, %v3516, 0
        %v3601 = vsel %vm3170, %v3517, 0
        %v3604 = vsel %vm3170, %v3518, 0
        %v3607 = vsel %vm3170, %v3519, 0
        %v3610 = vsel %vm3170, %v3520, 0
        %v3613 = vsel %vm3170, %v3521, 0
        %v3616 = vsel %vm3170, %v3522, 0
        %v3619 = vsel %vm3170, %v3523, 0
        %v3622 = vsel %vm3170, %v3524, 0
        %v3625 = vsel %vm3170, %v3525, 0
        %v3628 = vsel %vm3170, %v3526, 0
        %v3631 = vsel %vm3170, %v3527, 0
        %v3634 = vsel %vm3267, %v3529, 0
        %3636 = vmatprep.subr.mxu0 0.0
        %3637 = vmatpush1.msra.mxu0 %v3528
        %3638 = vmatprep.subr.mxu0 0.0
        %3639 = vmatpush1.msra.mxu0 %v3634
        %3640 = vmatprep.subr.mxu0 0.0
        %3641 = vmatpush1.msra.mxu0 0.0
        %3642 = vmatprep.subr.mxu0 0.0
        %3643 = vmatpush1.msra.mxu0 0.0
        %3644 = vmatprep.subr.mxu0 0.0
        %3645 = vmatpush1.msra.mxu0 0.0
        %3646 = vmatprep.subr.mxu0 0.0
        %3647 = vmatpush1.msra.mxu0 0.0
        %3648 = vmatprep.subr.mxu0 0.0
        %3649 = vmatpush1.msra.mxu0 0.0
        %3650 = vmatprep.subr.mxu0 0.0
        %3651 = vmatpush1.msra.mxu0 0.0
        %3652 = vmatprep.subr.mxu0 0.0
        %3653 = vmatpush1.msra.mxu0 0.0
        %3654 = vmatprep.subr.mxu0 0.0
        %3655 = vmatpush1.msra.mxu0 0.0
        %3656 = vmatprep.subr.mxu0 0.0
        %3657 = vmatpush1.msra.mxu0 0.0
        %3658 = vmatprep.subr.mxu0 0.0
        %3659 = vmatpush1.msra.mxu0 0.0
        %3660 = vmatprep.subr.mxu0 0.0
        %3661 = vmatpush1.msra.mxu0 0.0
        %3662 = vmatprep.subr.mxu0 0.0
        %3663 = vmatpush1.msra.mxu0 0.0
        %3664 = vmatprep.subr.mxu0 0.0
        %3665 = vmatpush1.msra.mxu0 0.0
        %3666 = vmatprep.subr.mxu0 0.0
        %3667 = vmatpush1.msra.mxu0 0.0
        %3668 = vmatprep.subr.mxu0 0.0
        %3669 = vmatpush1.msra.mxu0 0.0
        %3670 = vmatprep.subr.mxu0 0.0
        %3671 = vmatpush1.msra.mxu0 0.0
        %3672 = vmatprep.subr.mxu0 0.0
        %3673 = vmatpush1.msra.mxu0 0.0
        %3674 = vmatprep.subr.mxu0 0.0
        %3675 = vmatpush1.msra.mxu0 0.0
        %3676 = vmatprep.subr.mxu0 0.0
        %3677 = vmatpush1.msra.mxu0 0.0
        %3678 = vmatprep.subr.mxu0 0.0
        %3679 = vmatpush1.msra.mxu0 0.0
        %3680 = vmatprep.subr.mxu0 0.0
        %3681 = vmatpush1.msra.mxu0 0.0
        %3682 = vmatprep.subr.mxu0 0.0
        %3683 = vmatpush1.msra.mxu0 0.0
        %3684 = vmatprep.subr.mxu0 0.0
        %3685 = vmatpush1.msra.mxu0 0.0
        %3686 = vmatprep.subr.mxu0 0.0
        %3687 = vmatpush1.msra.mxu0 0.0
        %3688 = vmatprep.subr.mxu0 0.0
        %3689 = vmatpush1.msra.mxu0 0.0
        %3690 = vmatprep.subr.mxu0 0.0
        %3691 = vmatpush1.msra.mxu0 0.0
        %3692 = vmatprep.subr.mxu0 0.0
        %3693 = vmatpush1.msra.mxu0 0.0
        %3694 = vmatprep.subr.mxu0 0.0
        %3695 = vmatpush1.msra.mxu0 0.0
        %3696 = vmatprep.subr.mxu0 0.0
        %3697 = vmatpush1.msra.mxu0 0.0
        %3698 = vmatprep.subr.mxu0 0.0
        %3699 = vmatpush1.msra.mxu0 0.0
        %3700 = vmatprep.mubr.f32.mxu0 0.0
        %3701 = vmatmul.mubr.f32.gmra.mrb[0].mxu0 %v3538
        %v3702 = vpop.f32.mrb[0].mxu0
        %v3703 = vadd.f32 %v3535, %v3702
        %v3704 = vpop.f32.mrb[0].mxu0
        %3705 = vmatprep.mubr.f32.mxu0 0.0
        %3706 = vmatmul.mubr.f32.gmra.mrb[0].mxu0 %v3541
        %v3707 = vpop.f32.mrb[0].mxu0
        %v3708 = vadd.f32 %v3535, %v3707
        %v3709 = vpop.f32.mrb[0].mxu0
        %3710 = vmatprep.mubr.f32.mxu0 0.0
        %3711 = vmatmul.mubr.f32.gmra.mrb[0].mxu0 %v3544
        %v3712 = vpop.f32.mrb[0].mxu0
        %v3713 = vadd.f32 %v3535, %v3712
        %v3714 = vpop.f32.mrb[0].mxu0
        %3715 = vmatprep.mubr.f32.mxu0 0.0
        %3716 = vmatmul.mubr.f32.gmra.mrb[0].mxu0 %v3547
        %v3717 = vpop.f32.mrb[0].mxu0
        %v3718 = vadd.f32 %v3535, %v3717
        %v3719 = vpop.f32.mrb[0].mxu0
        %3720 = vmatprep.mubr.f32.mxu0 0.0
        %3721 = vmatmul.mubr.f32.gmra.mrb[0].mxu0 %v3550
        %v3722 = vpop.f32.mrb[0].mxu0
        %v3723 = vadd.f32 %v3535, %v3722
        %v3724 = vpop.f32.mrb[0].mxu0
        %3725 = vmatprep.mubr.f32.mxu0 0.0
        %3726 = vmatmul.mubr.f32.gmra.mrb[0].mxu0 %v3553
        %v3727 = vpop.f32.mrb[0].mxu0
        %v3728 = vadd.f32 %v3535, %v3727
        %v3729 = vpop.f32.mrb[0].mxu0
        %3730 = vmatprep.mubr.f32.mxu0 0.0
        %3731 = vmatmul.mubr.f32.gmra.mrb[0].mxu0 %v3556
        %v3732 = vpop.f32.mrb[0].mxu0
        %v3733 = vadd.f32 %v3535, %v3732
        %v3734 = vpop.f32.mrb[0].mxu0
        %3735 = vmatprep.mubr.f32.mxu0 0.0
        %3736 = vmatmul.mubr.f32.gmra.mrb[0].mxu0 %v3559
        %v3737 = vpop.f32.mrb[0].mxu0
        %v3738 = vadd.f32 %v3535, %v3737
        %v3739 = vpop.f32.mrb[0].mxu0
        %3740 = vmatprep.mubr.f32.mxu0 0.0
        %3741 = vmatmul.mubr.f32.gmra.mrb[0].mxu0 %v3562
        %v3742 = vpop.f32.mrb[0].mxu0
        %v3743 = vadd.f32 %v3535, %v3742
        %v3744 = vpop.f32.mrb[0].mxu0
        %3745 = vmatprep.mubr.f32.mxu0 0.0
        %3746 = vmatmul.mubr.f32.gmra.mrb[0].mxu0 %v3565
        %v3747 = vpop.f32.mrb[0].mxu0
        %v3748 = vadd.f32 %v3535, %v3747
        %v3749 = vpop.f32.mrb[0].mxu0
        %3750 = vmatprep.mubr.f32.mxu0 0.0
        %3751 = vmatmul.mubr.f32.gmra.mrb[0].mxu0 %v3568
        %v3752 = vpop.f32.mrb[0].mxu0
        %v3753 = vadd.f32 %v3535, %v3752
        %v3754 = vpop.f32.mrb[0].mxu0
        %3755 = vmatprep.mubr.f32.mxu0 0.0
        %3756 = vmatmul.mubr.f32.gmra.mrb[0].mxu0 %v3571
        %v3757 = vpop.f32.mrb[0].mxu0
        %v3758 = vadd.f32 %v3535, %v3757
        %v3759 = vpop.f32.mrb[0].mxu0
        %3760 = vmatprep.mubr.f32.mxu0 0.0
        %3761 = vmatmul.mubr.f32.gmra.mrb[0].mxu0 %v3574
        %v3762 = vpop.f32.mrb[0].mxu0
        %v3763 = vadd.f32 %v3535, %v3762
        %v3764 = vpop.f32.mrb[0].mxu0
        %3765 = vmatprep.mubr.f32.mxu0 0.0
        %3766 = vmatmul.mubr.f32.gmra.mrb[0].mxu0 %v3577
        %v3767 = vpop.f32.mrb[0].mxu0
        %v3768 = vadd.f32 %v3535, %v3767
        %v3769 = vpop.f32.mrb[0].mxu0
        %3770 = vmatprep.mubr.f32.mxu0 0.0
        %3771 = vmatmul.mubr.f32.gmra.mrb[0].mxu0 %v3580
        %v3772 = vpop.f32.mrb[0].mxu0
        %v3773 = vadd.f32 %v3535, %v3772
        %v3774 = vpop.f32.mrb[0].mxu0
        %3775 = vmatprep.mubr.f32.mxu0 0.0
        %3776 = vmatmul.mubr.f32.gmra.mrb[0].mxu0 %v3583
        %v3777 = vpop.f32.mrb[0].mxu0
        %v3778 = vadd.f32 %v3535, %v3777
        %v3779 = vpop.f32.mrb[0].mxu0
        %3780 = vmatprep.mubr.f32.mxu0 0.0
        %3781 = vmatmul.mubr.f32.gmra.mrb[0].mxu0 %v3586
        %v3782 = vpop.f32.mrb[0].mxu0
        %v3783 = vadd.f32 %v3535, %v3782
        %v3784 = vpop.f32.mrb[0].mxu0
        %3785 = vmatprep.mubr.f32.mxu0 0.0
        %3786 = vmatmul.mubr.f32.gmra.mrb[0].mxu0 %v3589
        %v3787 = vpop.f32.mrb[0].mxu0
        %v3788 = vadd.f32 %v3535, %v3787
        %v3789 = vpop.f32.mrb[0].mxu0
        %3790 = vmatprep.mubr.f32.mxu0 0.0
        %3791 = vmatmul.mubr.f32.gmra.mrb[0].mxu0 %v3592
        %v3792 = vpop.f32.mrb[0].mxu0
        %v3793 = vadd.f32 %v3535, %v3792
        %v3794 = vpop.f32.mrb[0].mxu0
        %3795 = vmatprep.mubr.f32.mxu0 0.0
        %3796 = vmatmul.mubr.f32.gmra.mrb[0].mxu0 %v3595
        %v3797 = vpop.f32.mrb[0].mxu0
        %v3798 = vadd.f32 %v3535, %v3797
        %v3799 = vpop.f32.mrb[0].mxu0
        %3800 = vmatprep.mubr.f32.mxu0 0.0
        %3801 = vmatmul.mubr.f32.gmra.mrb[0].mxu0 %v3598
        %v3802 = vpop.f32.mrb[0].mxu0
        %v3803 = vadd.f32 %v3535, %v3802
        %v3804 = vpop.f32.mrb[0].mxu0
        %3805 = vmatprep.mubr.f32.mxu0 0.0
        %3806 = vmatmul.mubr.f32.gmra.mrb[0].mxu0 %v3601
        %v3807 = vpop.f32.mrb[0].mxu0
        %v3808 = vadd.f32 %v3535, %v3807
        %v3809 = vpop.f32.mrb[0].mxu0
        %3810 = vmatprep.mubr.f32.mxu0 0.0
        %3811 = vmatmul.mubr.f32.gmra.mrb[0].mxu0 %v3604
        %v3812 = vpop.f32.mrb[0].mxu0
        %v3813 = vadd.f32 %v3535, %v3812
        %v3814 = vpop.f32.mrb[0].mxu0
        %3815 = vmatprep.mubr.f32.mxu0 0.0
        %3816 = vmatmul.mubr.f32.gmra.mrb[0].mxu0 %v3607
        %v3817 = vpop.f32.mrb[0].mxu0
        %v3818 = vadd.f32 %v3535, %v3817
        %v3819 = vpop.f32.mrb[0].mxu0
        %3820 = vmatprep.mubr.f32.mxu0 0.0
        %3821 = vmatmul.mubr.f32.gmra.mrb[0].mxu0 %v3610
        %v3822 = vpop.f32.mrb[0].mxu0
        %v3823 = vadd.f32 %v3535, %v3822
        %v3824 = vpop.f32.mrb[0].mxu0
        %3825 = vmatprep.mubr.f32.mxu0 0.0
        %3826 = vmatmul.mubr.f32.gmra.mrb[0].mxu0 %v3613
        %v3827 = vpop.f32.mrb[0].mxu0
        %v3828 = vadd.f32 %v3535, %v3827
        %v3829 = vpop.f32.mrb[0].mxu0
        %3830 = vmatprep.mubr.f32.mxu0 0.0
        %3831 = vmatmul.mubr.f32.gmra.mrb[0].mxu0 %v3616
        %v3832 = vpop.f32.mrb[0].mxu0
        %v3833 = vadd.f32 %v3535, %v3832
        %v3834 = vpop.f32.mrb[0].mxu0
        %3835 = vmatprep.mubr.f32.mxu0 0.0
        %3836 = vmatmul.mubr.f32.gmra.mrb[0].mxu0 %v3619
        %v3837 = vpop.f32.mrb[0].mxu0
        %v3838 = vadd.f32 %v3535, %v3837
        %v3839 = vpop.f32.mrb[0].mxu0
        %3840 = vmatprep.mubr.f32.mxu0 0.0
        %3841 = vmatmul.mubr.f32.gmra.mrb[0].mxu0 %v3622
        %v3842 = vpop.f32.mrb[0].mxu0
        %v3843 = vadd.f32 %v3535, %v3842
        %v3844 = vpop.f32.mrb[0].mxu0
        %3845 = vmatprep.mubr.f32.mxu0 0.0
        %3846 = vmatmul.mubr.f32.gmra.mrb[0].mxu0 %v3625
        %v3847 = vpop.f32.mrb[0].mxu0
        %v3848 = vadd.f32 %v3535, %v3847
        %v3849 = vpop.f32.mrb[0].mxu0
        %3850 = vmatprep.mubr.f32.mxu0 0.0
        %3851 = vmatmul.mubr.f32.gmra.mrb[0].mxu0 %v3628
        %v3852 = vpop.f32.mrb[0].mxu0
        %v3853 = vadd.f32 %v3535, %v3852
        %v3854 = vpop.f32.mrb[0].mxu0
        %3855 = vmatprep.mubr.f32.mxu0 0.0
        %3856 = vmatmul.mubr.f32.gmra.mrb[0].mxu0 %v3631
        %v3857 = vpop.f32.mrb[0].mxu0
        %v3858 = vadd.f32 %v3535, %v3857
        %v3859 = vpop.f32.mrb[0].mxu0
        %3860 = vdwg.mxu0
        %v3861 = vmax.f32 %v3703, 0.0
        %v3862 = vmax.f32 %v3708, 0.0
        %v3863 = vmax.f32 %v3713, 0.0
        %v3864 = vmax.f32 %v3718, 0.0
        %v3865 = vmax.f32 %v3723, 0.0
        %v3866 = vmax.f32 %v3728, 0.0
        %v3867 = vmax.f32 %v3733, 0.0
        %v3868 = vmax.f32 %v3738, 0.0
        %v3869 = vmax.f32 %v3743, 0.0
        %v3870 = vmax.f32 %v3748, 0.0
        %v3871 = vmax.f32 %v3753, 0.0
        %v3872 = vmax.f32 %v3758, 0.0
        %v3873 = vmax.f32 %v3763, 0.0
        %v3874 = vmax.f32 %v3768, 0.0
        %v3875 = vmax.f32 %v3773, 0.0
        %v3876 = vmax.f32 %v3778, 0.0
        %v3877 = vmax.f32 %v3783, 0.0
        %v3878 = vmax.f32 %v3788, 0.0
        %v3879 = vmax.f32 %v3793, 0.0
        %v3880 = vmax.f32 %v3798, 0.0
        %v3881 = vmax.f32 %v3803, 0.0
        %v3882 = vmax.f32 %v3808, 0.0
        %v3883 = vmax.f32 %v3813, 0.0
        %v3884 = vmax.f32 %v3818, 0.0
        %v3885 = vmax.f32 %v3823, 0.0
        %v3886 = vmax.f32 %v3828, 0.0
        %v3887 = vmax.f32 %v3833, 0.0
        %v3888 = vmax.f32 %v3838, 0.0
        %v3889 = vmax.f32 %v3843, 0.0
        %v3890 = vmax.f32 %v3848, 0.0
        %v3891 = vmax.f32 %v3853, 0.0
        %v3892 = vmax.f32 %v3858, 0.0
        %v3893 = vld [vmem:[#allocation17] sm:$0xff]
        %v3894 = vld [vmem:[#allocation17 + $0x8] sm:$0xff]
        %v3895 = vld [vmem:[#allocation17 + $0x10] sm:$0xff]
        %v3896 = vld [vmem:[#allocation17 + $0x18] sm:$0xff]
        %v3897 = vld [vmem:[#allocation17 + $0x20] sm:$0xff]
        %v3898 = vld [vmem:[#allocation17 + $0x28] sm:$0xff]
        %v3899 = vld [vmem:[#allocation17 + $0x30] sm:$0xff]
        %v3900 = vld [vmem:[#allocation17 + $0x38] sm:$0xff]
        %v3901 = vld [vmem:[#allocation19] sm:$0x1]
        %v3903 = vlaneseq
        %v3904 = vshrl.u32 %v3903, 7
        %v3905 = vsub.s32 0, %v3904
        %v3906 = vrot.slane %v3901, %v3905
        %v3909 = vsel %vm2807, %v3861, 0
        %v3912 = vsel %vm2807, %v3862, 0
        %v3915 = vsel %vm2807, %v3863, 0
        %v3918 = vsel %vm2807, %v3864, 0
        %v3921 = vsel %vm2807, %v3865, 0
        %v3924 = vsel %vm2807, %v3866, 0
        %v3927 = vsel %vm2807, %v3867, 0
        %v3930 = vsel %vm2807, %v3868, 0
        %v3933 = vsel %vm2807, %v3869, 0
        %v3936 = vsel %vm2807, %v3870, 0
        %v3939 = vsel %vm2807, %v3871, 0
        %v3942 = vsel %vm2807, %v3872, 0
        %v3945 = vsel %vm2807, %v3873, 0
        %v3948 = vsel %vm2807, %v3874, 0
        %v3951 = vsel %vm2807, %v3875, 0
        %v3954 = vsel %vm2807, %v3876, 0
        %v3957 = vsel %vm2807, %v3877, 0
        %v3960 = vsel %vm2807, %v3878, 0
        %v3963 = vsel %vm2807, %v3879, 0
        %v3966 = vsel %vm2807, %v3880, 0
        %v3969 = vsel %vm2807, %v3881, 0
        %v3972 = vsel %vm2807, %v3882, 0
        %v3975 = vsel %vm2807, %v3883, 0
        %v3978 = vsel %vm2807, %v3884, 0
        %v3981 = vsel %vm2807, %v3885, 0
        %v3984 = vsel %vm2807, %v3886, 0
        %v3987 = vsel %vm2807, %v3887, 0
        %v3990 = vsel %vm2807, %v3888, 0
        %v3993 = vsel %vm2807, %v3889, 0
        %v3996 = vsel %vm2807, %v3890, 0
        %v3999 = vsel %vm2807, %v3891, 0
        %v4002 = vsel %vm2807, %v3892, 0
        %4004 = vmatprep.subr.mxu0 0.0
        %4005 = vmatpush1.msra.mxu0 %v3893
        %4006 = vmatprep.subr.mxu0 0.0
        %4007 = vmatpush1.msra.mxu0 %v3894
        %4008 = vmatprep.subr.mxu0 0.0
        %4009 = vmatpush1.msra.mxu0 %v3895
        %4010 = vmatprep.subr.mxu0 0.0
        %4011 = vmatpush1.msra.mxu0 %v3896
        %4012 = vmatprep.subr.mxu0 0.0
        %4013 = vmatpush1.msra.mxu0 %v3897
        %4014 = vmatprep.subr.mxu0 0.0
        %4015 = vmatpush1.msra.mxu0 %v3898
        %4016 = vmatprep.subr.mxu0 0.0
        %4017 = vmatpush1.msra.mxu0 %v3899
        %4018 = vmatprep.subr.mxu0 0.0
        %4019 = vmatpush1.msra.mxu0 %v3900
        %4020 = vmatprep.subr.mxu0 0.0
        %4021 = vmatpush1.msra.mxu0 0.0
        %4022 = vmatprep.subr.mxu0 0.0
        %4023 = vmatpush1.msra.mxu0 0.0
        %4024 = vmatprep.subr.mxu0 0.0
        %4025 = vmatpush1.msra.mxu0 0.0
        %4026 = vmatprep.subr.mxu0 0.0
        %4027 = vmatpush1.msra.mxu0 0.0
        %4028 = vmatprep.subr.mxu0 0.0
        %4029 = vmatpush1.msra.mxu0 0.0
        %4030 = vmatprep.subr.mxu0 0.0
        %4031 = vmatpush1.msra.mxu0 0.0
        %4032 = vmatprep.subr.mxu0 0.0
        %4033 = vmatpush1.msra.mxu0 0.0
        %4034 = vmatprep.subr.mxu0 0.0
        %4035 = vmatpush1.msra.mxu0 0.0
        %4036 = vmatprep.subr.mxu0 0.0
        %4037 = vmatpush1.msra.mxu0 0.0
        %4038 = vmatprep.subr.mxu0 0.0
        %4039 = vmatpush1.msra.mxu0 0.0
        %4040 = vmatprep.subr.mxu0 0.0
        %4041 = vmatpush1.msra.mxu0 0.0
        %4042 = vmatprep.subr.mxu0 0.0
        %4043 = vmatpush1.msra.mxu0 0.0
        %4044 = vmatprep.subr.mxu0 0.0
        %4045 = vmatpush1.msra.mxu0 0.0
        %4046 = vmatprep.subr.mxu0 0.0
        %4047 = vmatpush1.msra.mxu0 0.0
        %4048 = vmatprep.subr.mxu0 0.0
        %4049 = vmatpush1.msra.mxu0 0.0
        %4050 = vmatprep.subr.mxu0 0.0
        %4051 = vmatpush1.msra.mxu0 0.0
        %4052 = vmatprep.subr.mxu0 0.0
        %4053 = vmatpush1.msra.mxu0 0.0
        %4054 = vmatprep.subr.mxu0 0.0
        %4055 = vmatpush1.msra.mxu0 0.0
        %4056 = vmatprep.subr.mxu0 0.0
        %4057 = vmatpush1.msra.mxu0 0.0
        %4058 = vmatprep.subr.mxu0 0.0
        %4059 = vmatpush1.msra.mxu0 0.0
        %4060 = vmatprep.subr.mxu0 0.0
        %4061 = vmatpush1.msra.mxu0 0.0
        %4062 = vmatprep.subr.mxu0 0.0
        %4063 = vmatpush1.msra.mxu0 0.0
        %4064 = vmatprep.subr.mxu0 0.0
        %4065 = vmatpush1.msra.mxu0 0.0
        %4066 = vmatprep.subr.mxu0 0.0
        %4067 = vmatpush1.msra.mxu0 0.0
        %4068 = vmatprep.mubr.f32.mxu0 0.0
        %4069 = vmatmul.mubr.f32.gmra.mrb[0].mxu0 %v3909
        %v4070 = vpop.f32.mrb[0].mxu0
        %v4071 = vadd.f32 %v3906, %v4070
        %v4072 = vpop.f32.mrb[0].mxu0
        %4073 = vmatprep.mubr.f32.mxu0 0.0
        %4074 = vmatmul.mubr.f32.gmra.mrb[0].mxu0 %v3912
        %v4075 = vpop.f32.mrb[0].mxu0
        %v4076 = vadd.f32 %v3906, %v4075
        %v4077 = vpop.f32.mrb[0].mxu0
        %4078 = vmatprep.mubr.f32.mxu0 0.0
        %4079 = vmatmul.mubr.f32.gmra.mrb[0].mxu0 %v3915
        %v4080 = vpop.f32.mrb[0].mxu0
        %v4081 = vadd.f32 %v3906, %v4080
        %v4082 = vpop.f32.mrb[0].mxu0
        %4083 = vmatprep.mubr.f32.mxu0 0.0
        %4084 = vmatmul.mubr.f32.gmra.mrb[0].mxu0 %v3918
        %v4085 = vpop.f32.mrb[0].mxu0
        %v4086 = vadd.f32 %v3906, %v4085
        %v4087 = vpop.f32.mrb[0].mxu0
        %4088 = vmatprep.mubr.f32.mxu0 0.0
        %4089 = vmatmul.mubr.f32.gmra.mrb[0].mxu0 %v3921
        %v4090 = vpop.f32.mrb[0].mxu0
        %v4091 = vadd.f32 %v3906, %v4090
        %v4092 = vpop.f32.mrb[0].mxu0
        %4093 = vmatprep.mubr.f32.mxu0 0.0
        %4094 = vmatmul.mubr.f32.gmra.mrb[0].mxu0 %v3924
        %v4095 = vpop.f32.mrb[0].mxu0
        %v4096 = vadd.f32 %v3906, %v4095
        %v4097 = vpop.f32.mrb[0].mxu0
        %4098 = vmatprep.mubr.f32.mxu0 0.0
        %4099 = vmatmul.mubr.f32.gmra.mrb[0].mxu0 %v3927
        %v4100 = vpop.f32.mrb[0].mxu0
        %v4101 = vadd.f32 %v3906, %v4100
        %v4102 = vpop.f32.mrb[0].mxu0
        %4103 = vmatprep.mubr.f32.mxu0 0.0
        %4104 = vmatmul.mubr.f32.gmra.mrb[0].mxu0 %v3930
        %v4105 = vpop.f32.mrb[0].mxu0
        %v4106 = vadd.f32 %v3906, %v4105
        %v4107 = vpop.f32.mrb[0].mxu0
        %4108 = vmatprep.mubr.f32.mxu0 0.0
        %4109 = vmatmul.mubr.f32.gmra.mrb[0].mxu0 %v3933
        %v4110 = vpop.f32.mrb[0].mxu0
        %v4111 = vadd.f32 %v3906, %v4110
        %v4112 = vpop.f32.mrb[0].mxu0
        %4113 = vmatprep.mubr.f32.mxu0 0.0
        %4114 = vmatmul.mubr.f32.gmra.mrb[0].mxu0 %v3936
        %v4115 = vpop.f32.mrb[0].mxu0
        %v4116 = vadd.f32 %v3906, %v4115
        %v4117 = vpop.f32.mrb[0].mxu0
        %4118 = vmatprep.mubr.f32.mxu0 0.0
        %4119 = vmatmul.mubr.f32.gmra.mrb[0].mxu0 %v3939
        %v4120 = vpop.f32.mrb[0].mxu0
        %v4121 = vadd.f32 %v3906, %v4120
        %v4122 = vpop.f32.mrb[0].mxu0
        %4123 = vmatprep.mubr.f32.mxu0 0.0
        %4124 = vmatmul.mubr.f32.gmra.mrb[0].mxu0 %v3942
        %v4125 = vpop.f32.mrb[0].mxu0
        %v4126 = vadd.f32 %v3906, %v4125
        %v4127 = vpop.f32.mrb[0].mxu0
        %4128 = vmatprep.mubr.f32.mxu0 0.0
        %4129 = vmatmul.mubr.f32.gmra.mrb[0].mxu0 %v3945
        %v4130 = vpop.f32.mrb[0].mxu0
        %v4131 = vadd.f32 %v3906, %v4130
        %v4132 = vpop.f32.mrb[0].mxu0
        %4133 = vmatprep.mubr.f32.mxu0 0.0
        %4134 = vmatmul.mubr.f32.gmra.mrb[0].mxu0 %v3948
        %v4135 = vpop.f32.mrb[0].mxu0
        %v4136 = vadd.f32 %v3906, %v4135
        %v4137 = vpop.f32.mrb[0].mxu0
        %4138 = vmatprep.mubr.f32.mxu0 0.0
        %4139 = vmatmul.mubr.f32.gmra.mrb[0].mxu0 %v3951
        %v4140 = vpop.f32.mrb[0].mxu0
        %v4141 = vadd.f32 %v3906, %v4140
        %v4142 = vpop.f32.mrb[0].mxu0
        %4143 = vmatprep.mubr.f32.mxu0 0.0
        %4144 = vmatmul.mubr.f32.gmra.mrb[0].mxu0 %v3954
        %v4145 = vpop.f32.mrb[0].mxu0
        %v4146 = vadd.f32 %v3906, %v4145
        %v4147 = vpop.f32.mrb[0].mxu0
        %4148 = vmatprep.mubr.f32.mxu0 0.0
        %4149 = vmatmul.mubr.f32.gmra.mrb[0].mxu0 %v3957
        %v4150 = vpop.f32.mrb[0].mxu0
        %v4151 = vadd.f32 %v3906, %v4150
        %v4152 = vpop.f32.mrb[0].mxu0
        %4153 = vmatprep.mubr.f32.mxu0 0.0
        %4154 = vmatmul.mubr.f32.gmra.mrb[0].mxu0 %v3960
        %v4155 = vpop.f32.mrb[0].mxu0
        %v4156 = vadd.f32 %v3906, %v4155
        %v4157 = vpop.f32.mrb[0].mxu0
        %4158 = vmatprep.mubr.f32.mxu0 0.0
        %4159 = vmatmul.mubr.f32.gmra.mrb[0].mxu0 %v3963
        %v4160 = vpop.f32.mrb[0].mxu0
        %v4161 = vadd.f32 %v3906, %v4160
        %v4162 = vpop.f32.mrb[0].mxu0
        %4163 = vmatprep.mubr.f32.mxu0 0.0
        %4164 = vmatmul.mubr.f32.gmra.mrb[0].mxu0 %v3966
        %v4165 = vpop.f32.mrb[0].mxu0
        %v4166 = vadd.f32 %v3906, %v4165
        %v4167 = vpop.f32.mrb[0].mxu0
        %4168 = vmatprep.mubr.f32.mxu0 0.0
        %4169 = vmatmul.mubr.f32.gmra.mrb[0].mxu0 %v3969
        %v4170 = vpop.f32.mrb[0].mxu0
        %v4171 = vadd.f32 %v3906, %v4170
        %v4172 = vpop.f32.mrb[0].mxu0
        %4173 = vmatprep.mubr.f32.mxu0 0.0
        %4174 = vmatmul.mubr.f32.gmra.mrb[0].mxu0 %v3972
        %v4175 = vpop.f32.mrb[0].mxu0
        %v4176 = vadd.f32 %v3906, %v4175
        %v4177 = vpop.f32.mrb[0].mxu0
        %4178 = vmatprep.mubr.f32.mxu0 0.0
        %4179 = vmatmul.mubr.f32.gmra.mrb[0].mxu0 %v3975
        %v4180 = vpop.f32.mrb[0].mxu0
        %v4181 = vadd.f32 %v3906, %v4180
        %v4182 = vpop.f32.mrb[0].mxu0
        %4183 = vmatprep.mubr.f32.mxu0 0.0
        %4184 = vmatmul.mubr.f32.gmra.mrb[0].mxu0 %v3978
        %v4185 = vpop.f32.mrb[0].mxu0
        %v4186 = vadd.f32 %v3906, %v4185
        %v4187 = vpop.f32.mrb[0].mxu0
        %4188 = vmatprep.mubr.f32.mxu0 0.0
        %4189 = vmatmul.mubr.f32.gmra.mrb[0].mxu0 %v3981
        %v4190 = vpop.f32.mrb[0].mxu0
        %v4191 = vadd.f32 %v3906, %v4190
        %v4192 = vpop.f32.mrb[0].mxu0
        %4193 = vmatprep.mubr.f32.mxu0 0.0
        %4194 = vmatmul.mubr.f32.gmra.mrb[0].mxu0 %v3984
        %v4195 = vpop.f32.mrb[0].mxu0
        %v4196 = vadd.f32 %v3906, %v4195
        %v4197 = vpop.f32.mrb[0].mxu0
        %4198 = vmatprep.mubr.f32.mxu0 0.0
        %4199 = vmatmul.mubr.f32.gmra.mrb[0].mxu0 %v3987
        %v4200 = vpop.f32.mrb[0].mxu0
        %v4201 = vadd.f32 %v3906, %v4200
        %v4202 = vpop.f32.mrb[0].mxu0
        %4203 = vmatprep.mubr.f32.mxu0 0.0
        %4204 = vmatmul.mubr.f32.gmra.mrb[0].mxu0 %v3990
        %v4205 = vpop.f32.mrb[0].mxu0
        %v4206 = vadd.f32 %v3906, %v4205
        %v4207 = vpop.f32.mrb[0].mxu0
        %4208 = vmatprep.mubr.f32.mxu0 0.0
        %4209 = vmatmul.mubr.f32.gmra.mrb[0].mxu0 %v3993
        %v4210 = vpop.f32.mrb[0].mxu0
        %v4211 = vadd.f32 %v3906, %v4210
        %v4212 = vpop.f32.mrb[0].mxu0
        %4213 = vmatprep.mubr.f32.mxu0 0.0
        %4214 = vmatmul.mubr.f32.gmra.mrb[0].mxu0 %v3996
        %v4215 = vpop.f32.mrb[0].mxu0
        %v4216 = vadd.f32 %v3906, %v4215
        %v4217 = vpop.f32.mrb[0].mxu0
        %4218 = vmatprep.mubr.f32.mxu0 0.0
        %4219 = vmatmul.mubr.f32.gmra.mrb[0].mxu0 %v3999
        %v4220 = vpop.f32.mrb[0].mxu0
        %v4221 = vadd.f32 %v3906, %v4220
        %v4222 = vpop.f32.mrb[0].mxu0
        %4223 = vmatprep.mubr.f32.mxu0 0.0
        %4224 = vmatmul.mubr.f32.gmra.mrb[0].mxu0 %v4002
        %v4225 = vpop.f32.mrb[0].mxu0
        %v4226 = vadd.f32 %v3906, %v4225
        %v4227 = vpop.f32.mrb[0].mxu0
        %4228 = vdwg.mxu0
        %v4229 = vmax.f32 %v4071, 0.0
        %v4230 = vmax.f32 %v4076, 0.0
        %v4231 = vmax.f32 %v4081, 0.0
        %v4232 = vmax.f32 %v4086, 0.0
        %v4233 = vmax.f32 %v4091, 0.0
        %v4234 = vmax.f32 %v4096, 0.0
        %v4235 = vmax.f32 %v4101, 0.0
        %v4236 = vmax.f32 %v4106, 0.0
        %v4237 = vmax.f32 %v4111, 0.0
        %v4238 = vmax.f32 %v4116, 0.0
        %v4239 = vmax.f32 %v4121, 0.0
        %v4240 = vmax.f32 %v4126, 0.0
        %v4241 = vmax.f32 %v4131, 0.0
        %v4242 = vmax.f32 %v4136, 0.0
        %v4243 = vmax.f32 %v4141, 0.0
        %v4244 = vmax.f32 %v4146, 0.0
        %v4245 = vmax.f32 %v4151, 0.0
        %v4246 = vmax.f32 %v4156, 0.0
        %v4247 = vmax.f32 %v4161, 0.0
        %v4248 = vmax.f32 %v4166, 0.0
        %v4249 = vmax.f32 %v4171, 0.0
        %v4250 = vmax.f32 %v4176, 0.0
        %v4251 = vmax.f32 %v4181, 0.0
        %v4252 = vmax.f32 %v4186, 0.0
        %v4253 = vmax.f32 %v4191, 0.0
        %v4254 = vmax.f32 %v4196, 0.0
        %v4255 = vmax.f32 %v4201, 0.0
        %v4256 = vmax.f32 %v4206, 0.0
        %v4257 = vmax.f32 %v4211, 0.0
        %v4258 = vmax.f32 %v4216, 0.0
        %v4259 = vmax.f32 %v4221, 0.0
        %v4260 = vmax.f32 %v4226, 0.0
        %v4261 = vld [vmem:[#allocation20] sm:$0xff]
        %v4262 = vld [vmem:[#allocation20 + $0x8] sm:$0xff]
        %v4263 = vld [vmem:[#allocation20 + $0x10] sm:$0xff]
        %v4264 = vld [vmem:[#allocation20 + $0x18] sm:$0xf]
        %v4265 = vld [vmem:[#allocation20 + $0x1c] sm:$0xff]
        %v4266 = vld [vmem:[#allocation20 + $0x24] sm:$0xff]
        %v4267 = vld [vmem:[#allocation20 + $0x2c] sm:$0xff]
        %v4268 = vld [vmem:[#allocation20 + $0x34] sm:$0xf]
        %v4269 = vld [vmem:[#allocation20 + $0x38] sm:$0xff]
        %v4270 = vld [vmem:[#allocation20 + $0x40] sm:$0xff]
        %v4271 = vld [vmem:[#allocation20 + $0x48] sm:$0xff]
        %v4272 = vld [vmem:[#allocation20 + $0x50] sm:$0xf]
        %v4273 = vld [vmem:[#allocation20 + $0x54] sm:$0xff]
        %v4274 = vld [vmem:[#allocation20 + $0x5c] sm:$0xff]
        %v4275 = vld [vmem:[#allocation20 + $0x64] sm:$0xff]
        %v4276 = vld [vmem:[#allocation20 + $0x6c] sm:$0xf]
        %v4277 = vld [vmem:[#allocation20 + $0x70] sm:$0xff]
        %v4278 = vld [vmem:[#allocation20 + $0x78] sm:$0xff]
        %v4279 = vld [vmem:[#allocation20 + $0x80] sm:$0xff]
        %v4280 = vld [vmem:[#allocation20 + $0x88] sm:$0xf]
        %v4281 = vld [vmem:[#allocation20 + $0x8c] sm:$0xff]
        %v4282 = vld [vmem:[#allocation20 + $0x94] sm:$0xff]
        %v4283 = vld [vmem:[#allocation20 + $0x9c] sm:$0xff]
        %v4284 = vld [vmem:[#allocation20 + $0xa4] sm:$0xf]
        %v4285 = vld [vmem:[#allocation20 + $0xa8] sm:$0xff]
        %v4286 = vld [vmem:[#allocation20 + $0xb0] sm:$0xff]
        %v4287 = vld [vmem:[#allocation20 + $0xb8] sm:$0xff]
        %v4288 = vld [vmem:[#allocation20 + $0xc0] sm:$0xf]
        %v4289 = vld [vmem:[#allocation20 + $0xc4] sm:$0xff]
        %v4290 = vld [vmem:[#allocation20 + $0xcc] sm:$0xff]
        %v4291 = vld [vmem:[#allocation20 + $0xd4] sm:$0xff]
        %v4292 = vld [vmem:[#allocation20 + $0xdc] sm:$0xf]
        %v4293 = vld [vmem:[#allocation20 + $0xe0] sm:$0xff]
        %v4294 = vld [vmem:[#allocation20 + $0xe8] sm:$0xff]
        %v4295 = vld [vmem:[#allocation20 + $0xf0] sm:$0xff]
        %v4296 = vld [vmem:[#allocation20 + $0xf8] sm:$0xf]
        %v4297 = vld [vmem:[#allocation20 + $0xfc] sm:$0xff]
        %v4298 = vld [vmem:[#allocation20 + $0x104] sm:$0xff]
        %v4299 = vld [vmem:[#allocation20 + $0x10c] sm:$0xff]
        %v4300 = vld [vmem:[#allocation20 + $0x114] sm:$0xf]
        %v4301 = vld [vmem:[#allocation20 + $0x118] sm:$0xff]
        %v4302 = vld [vmem:[#allocation20 + $0x120] sm:$0xff]
        %v4303 = vld [vmem:[#allocation20 + $0x128] sm:$0xff]
        %v4304 = vld [vmem:[#allocation20 + $0x130] sm:$0xf]
        %v4305 = vld [vmem:[#allocation20 + $0x134] sm:$0xff]
        %v4306 = vld [vmem:[#allocation20 + $0x13c] sm:$0xff]
        %v4307 = vld [vmem:[#allocation20 + $0x144] sm:$0xff]
        %v4308 = vld [vmem:[#allocation20 + $0x14c] sm:$0xf]
        %v4309 = vld [vmem:[#allocation20 + $0x150] sm:$0xff]
        %v4310 = vld [vmem:[#allocation20 + $0x158] sm:$0xff]
        %v4311 = vld [vmem:[#allocation20 + $0x160] sm:$0xff]
        %v4312 = vld [vmem:[#allocation20 + $0x168] sm:$0xf]
        %v4313 = vld [vmem:[#allocation20 + $0x16c] sm:$0xff]
        %v4314 = vld [vmem:[#allocation20 + $0x174] sm:$0xff]
        %v4315 = vld [vmem:[#allocation20 + $0x17c] sm:$0xff]
        %v4316 = vld [vmem:[#allocation20 + $0x184] sm:$0xf]
        %v4317 = vld [vmem:[#allocation20 + $0x188] sm:$0xff]
        %v4318 = vld [vmem:[#allocation20 + $0x190] sm:$0xff]
        %v4319 = vld [vmem:[#allocation20 + $0x198] sm:$0xff]
        %v4320 = vld [vmem:[#allocation20 + $0x1a0] sm:$0xf]
        %v4321 = vld [vmem:[#allocation20 + $0x1a4] sm:$0xff]
        %v4322 = vld [vmem:[#allocation20 + $0x1ac] sm:$0xff]
        %v4323 = vld [vmem:[#allocation20 + $0x1b4] sm:$0xff]
        %v4324 = vld [vmem:[#allocation20 + $0x1bc] sm:$0xf]
        %v4325 = vld [vmem:[#allocation22] sm:$0xff]
        %v4326 = vpack.c.bf16 %v4230, %v4229
        %v4327 = vpack.c.bf16 %v4232, %v4231
        %v4328 = vpack.c.bf16 %v4234, %v4233
        %v4329 = vpack.c.bf16 %v4236, %v4235
        %v4330 = vpack.c.bf16 %v4238, %v4237
        %v4331 = vpack.c.bf16 %v4240, %v4239
        %v4332 = vpack.c.bf16 %v4242, %v4241
        %v4333 = vpack.c.bf16 %v4244, %v4243
        %v4334 = vpack.c.bf16 %v4246, %v4245
        %v4335 = vpack.c.bf16 %v4248, %v4247
        %v4336 = vpack.c.bf16 %v4250, %v4249
        %v4337 = vpack.c.bf16 %v4252, %v4251
        %v4338 = vpack.c.bf16 %v4254, %v4253
        %v4339 = vpack.c.bf16 %v4256, %v4255
        %v4340 = vpack.c.bf16 %v4258, %v4257
        %v4341 = vpack.c.bf16 %v4260, %v4259
        %v4343 = vlaneseq
        %v4344 = vshrl.u32 %v4343, 7
        %v4345 = vsub.s32 0, %v4344
        %v4346 = vrot.slane %v4325, %v4345
        %v4347 = vlaneseq
        %v4348 = vshrl.u32 %v4347, 7
        %v4349 = vsub.s32 1, %v4348
        %v4350 = vrot.slane %v4325, %v4349
        %v4351 = vlaneseq
        %v4352 = vshrl.u32 %v4351, 7
        %v4353 = vsub.s32 2, %v4352
        %v4354 = vrot.slane %v4325, %v4353
        %v4355 = vlaneseq
        %v4356 = vshrl.u32 %v4355, 7
        %v4357 = vsub.s32 3, %v4356
        %v4358 = vrot.slane %v4325, %v4357
        %v4359 = vlaneseq
        %v4360 = vshrl.u32 %v4359, 7
        %v4361 = vsub.s32 4, %v4360
        %v4362 = vrot.slane %v4325, %v4361
        %v4363 = vlaneseq
        %v4364 = vshrl.u32 %v4363, 7
        %v4365 = vsub.s32 5, %v4364
        %v4366 = vrot.slane %v4325, %v4365
        %v4367 = vlaneseq
        %v4368 = vshrl.u32 %v4367, 7
        %v4369 = vsub.s32 6, %v4368
        %v4370 = vrot.slane %v4325, %v4369
        %v4442 = vunpack.c.l.b16 %v4261
        %v4443 = vunpack.c.h.b16 %v4261
        %v4444 = vunpack.c.l.b16 %v4262
        %v4445 = vunpack.c.h.b16 %v4262
        %v4446 = vunpack.c.l.b16 %v4263
        %v4447 = vunpack.c.h.b16 %v4263
        %v4448 = vunpack.c.l.b16 %v4264
        %v4449 = vunpack.c.l.b16 %v4265
        %v4450 = vunpack.c.h.b16 %v4265
        %v4451 = vunpack.c.l.b16 %v4266
        %v4452 = vunpack.c.h.b16 %v4266
        %v4453 = vunpack.c.l.b16 %v4267
        %v4454 = vunpack.c.h.b16 %v4267
        %v4455 = vunpack.c.l.b16 %v4268
        %v4456 = vunpack.c.l.b16 %v4269
        %v4457 = vunpack.c.h.b16 %v4269
        %v4458 = vunpack.c.l.b16 %v4270
        %v4459 = vunpack.c.h.b16 %v4270
        %v4460 = vunpack.c.l.b16 %v4271
        %v4461 = vunpack.c.h.b16 %v4271
        %v4462 = vunpack.c.l.b16 %v4272
        %v4463 = vunpack.c.l.b16 %v4273
        %v4464 = vunpack.c.h.b16 %v4273
        %v4465 = vunpack.c.l.b16 %v4274
        %v4466 = vunpack.c.h.b16 %v4274
        %v4467 = vunpack.c.l.b16 %v4275
        %v4468 = vunpack.c.h.b16 %v4275
        %v4469 = vunpack.c.l.b16 %v4276
        %v4470 = vunpack.c.l.b16 %v4277
        %v4471 = vunpack.c.h.b16 %v4277
        %v4472 = vunpack.c.l.b16 %v4278
        %v4473 = vunpack.c.h.b16 %v4278
        %v4474 = vunpack.c.l.b16 %v4279
        %v4475 = vunpack.c.h.b16 %v4279
        %v4476 = vunpack.c.l.b16 %v4280
        %v4477 = vunpack.c.l.b16 %v4281
        %v4478 = vunpack.c.h.b16 %v4281
        %v4479 = vunpack.c.l.b16 %v4282
        %v4480 = vunpack.c.h.b16 %v4282
        %v4481 = vunpack.c.l.b16 %v4283
        %v4482 = vunpack.c.h.b16 %v4283
        %v4483 = vunpack.c.l.b16 %v4284
        %v4484 = vunpack.c.l.b16 %v4285
        %v4485 = vunpack.c.h.b16 %v4285
        %v4486 = vunpack.c.l.b16 %v4286
        %v4487 = vunpack.c.h.b16 %v4286
        %v4488 = vunpack.c.l.b16 %v4287
        %v4489 = vunpack.c.h.b16 %v4287
        %v4490 = vunpack.c.l.b16 %v4288
        %v4491 = vunpack.c.l.b16 %v4289
        %v4492 = vunpack.c.h.b16 %v4289
        %v4493 = vunpack.c.l.b16 %v4290
        %v4494 = vunpack.c.h.b16 %v4290
        %v4495 = vunpack.c.l.b16 %v4291
        %v4496 = vunpack.c.h.b16 %v4291
        %v4497 = vunpack.c.l.b16 %v4292
        %v4498 = vunpack.c.l.b16 %v4293
        %v4499 = vunpack.c.h.b16 %v4293
        %v4500 = vunpack.c.l.b16 %v4294
        %v4501 = vunpack.c.h.b16 %v4294
        %v4502 = vunpack.c.l.b16 %v4295
        %v4503 = vunpack.c.h.b16 %v4295
        %v4504 = vunpack.c.l.b16 %v4296
        %v4505 = vunpack.c.l.b16 %v4297
        %v4506 = vunpack.c.h.b16 %v4297
        %v4507 = vunpack.c.l.b16 %v4298
        %v4508 = vunpack.c.h.b16 %v4298
        %v4509 = vunpack.c.l.b16 %v4299
        %v4510 = vunpack.c.h.b16 %v4299
        %v4511 = vunpack.c.l.b16 %v4300
        %v4512 = vunpack.c.l.b16 %v4301
        %v4513 = vunpack.c.h.b16 %v4301
        %v4514 = vunpack.c.l.b16 %v4302
        %v4515 = vunpack.c.h.b16 %v4302
        %v4516 = vunpack.c.l.b16 %v4303
        %v4517 = vunpack.c.h.b16 %v4303
        %v4518 = vunpack.c.l.b16 %v4304
        %v4519 = vunpack.c.l.b16 %v4305
        %v4520 = vunpack.c.h.b16 %v4305
        %v4521 = vunpack.c.l.b16 %v4306
        %v4522 = vunpack.c.h.b16 %v4306
        %v4523 = vunpack.c.l.b16 %v4307
        %v4524 = vunpack.c.h.b16 %v4307
        %v4525 = vunpack.c.l.b16 %v4308
        %v4526 = vunpack.c.l.b16 %v4309
        %v4527 = vunpack.c.h.b16 %v4309
        %v4528 = vunpack.c.l.b16 %v4310
        %v4529 = vunpack.c.h.b16 %v4310
        %v4530 = vunpack.c.l.b16 %v4311
        %v4531 = vunpack.c.h.b16 %v4311
        %v4532 = vunpack.c.l.b16 %v4312
        %v4533 = vunpack.c.l.b16 %v4313
        %v4534 = vunpack.c.h.b16 %v4313
        %v4535 = vunpack.c.l.b16 %v4314
        %v4536 = vunpack.c.h.b16 %v4314
        %v4537 = vunpack.c.l.b16 %v4315
        %v4538 = vunpack.c.h.b16 %v4315
        %v4539 = vunpack.c.l.b16 %v4316
        %v4540 = vunpack.c.l.b16 %v4317
        %v4541 = vunpack.c.h.b16 %v4317
        %v4542 = vunpack.c.l.b16 %v4318
        %v4543 = vunpack.c.h.b16 %v4318
        %v4544 = vunpack.c.l.b16 %v4319
        %v4545 = vunpack.c.h.b16 %v4319
        %v4546 = vunpack.c.l.b16 %v4320
        %v4547 = vunpack.c.l.b16 %v4321
        %v4548 = vunpack.c.h.b16 %v4321
        %v4549 = vunpack.c.l.b16 %v4322
        %v4550 = vunpack.c.h.b16 %v4322
        %v4551 = vunpack.c.l.b16 %v4323
        %v4552 = vunpack.c.h.b16 %v4323
        %v4553 = vunpack.c.l.b16 %v4324
        %v4554 = vpack.c.b16 %v4449, %v4442
        %v4555 = vpack.c.b16 %v4450, %v4443
        %v4556 = vpack.c.b16 %v4451, %v4444
        %v4557 = vpack.c.b16 %v4452, %v4445
        %v4558 = vpack.c.b16 %v4453, %v4446
        %v4559 = vpack.c.b16 %v4454, %v4447
        %v4560 = vpack.c.b16 %v4455, %v4448
        %v4561 = vpack.c.b16 %v4463, %v4456
        %v4562 = vpack.c.b16 %v4464, %v4457
        %v4563 = vpack.c.b16 %v4465, %v4458
        %v4564 = vpack.c.b16 %v4466, %v4459
        %v4565 = vpack.c.b16 %v4467, %v4460
        %v4566 = vpack.c.b16 %v4468, %v4461
        %v4567 = vpack.c.b16 %v4469, %v4462
        %v4568 = vpack.c.b16 %v4477, %v4470
        %v4569 = vpack.c.b16 %v4478, %v4471
        %v4570 = vpack.c.b16 %v4479, %v4472
        %v4571 = vpack.c.b16 %v4480, %v4473
        %v4572 = vpack.c.b16 %v4481, %v4474
        %v4573 = vpack.c.b16 %v4482, %v4475
        %v4574 = vpack.c.b16 %v4483, %v4476
        %v4575 = vpack.c.b16 %v4491, %v4484
        %v4576 = vpack.c.b16 %v4492, %v4485
        %v4577 = vpack.c.b16 %v4493, %v4486
        %v4578 = vpack.c.b16 %v4494, %v4487
        %v4579 = vpack.c.b16 %v4495, %v4488
        %v4580 = vpack.c.b16 %v4496, %v4489
        %v4581 = vpack.c.b16 %v4497, %v4490
        %v4582 = vpack.c.b16 %v4505, %v4498
        %v4583 = vpack.c.b16 %v4506, %v4499
        %v4584 = vpack.c.b16 %v4507, %v4500
        %v4585 = vpack.c.b16 %v4508, %v4501
        %v4586 = vpack.c.b16 %v4509, %v4502
        %v4587 = vpack.c.b16 %v4510, %v4503
        %v4588 = vpack.c.b16 %v4511, %v4504
        %v4589 = vpack.c.b16 %v4519, %v4512
        %v4590 = vpack.c.b16 %v4520, %v4513
        %v4591 = vpack.c.b16 %v4521, %v4514
        %v4592 = vpack.c.b16 %v4522, %v4515
        %v4593 = vpack.c.b16 %v4523, %v4516
        %v4594 = vpack.c.b16 %v4524, %v4517
        %v4595 = vpack.c.b16 %v4525, %v4518
        %v4596 = vpack.c.b16 %v4533, %v4526
        %v4597 = vpack.c.b16 %v4534, %v4527
        %v4598 = vpack.c.b16 %v4535, %v4528
        %v4599 = vpack.c.b16 %v4536, %v4529
        %v4600 = vpack.c.b16 %v4537, %v4530
        %v4601 = vpack.c.b16 %v4538, %v4531
        %v4602 = vpack.c.b16 %v4539, %v4532
        %v4603 = vpack.c.b16 %v4547, %v4540
        %v4604 = vpack.c.b16 %v4548, %v4541
        %v4605 = vpack.c.b16 %v4549, %v4542
        %v4606 = vpack.c.b16 %v4550, %v4543
        %v4607 = vpack.c.b16 %v4551, %v4544
        %v4608 = vpack.c.b16 %v4552, %v4545
        %v4609 = vpack.c.b16 %v4553, %v4546
        %4666 = vmatprep.subr.bf16.mxu0 %v4555
        %4667 = vmatpush1.bf16.msra.mxu0 %v4554
        %4668 = vmatprep.subr.bf16.mxu0 %v4562
        %4669 = vmatpush1.bf16.msra.mxu0 %v4561
        %4670 = vmatprep.subr.bf16.mxu0 %v4569
        %4671 = vmatpush1.bf16.msra.mxu0 %v4568
        %4672 = vmatprep.subr.bf16.mxu0 %v4576
        %4673 = vmatpush1.bf16.msra.mxu0 %v4575
        %4674 = vmatprep.subr.bf16.mxu0 %v4583
        %4675 = vmatpush1.bf16.msra.mxu0 %v4582
        %4676 = vmatprep.subr.bf16.mxu0 %v4590
        %4677 = vmatpush1.bf16.msra.mxu0 %v4589
        %4678 = vmatprep.subr.bf16.mxu0 %v4597
        %4679 = vmatpush1.bf16.msra.mxu0 %v4596
        %4680 = vmatprep.subr.bf16.mxu0 %v4604
        %4681 = vmatpush1.bf16.msra.mxu0 %v4603
        %4682 = vmatprep.subr.bf16.mxu0 0
        %4683 = vmatpush1.bf16.msra.mxu0 0
        %4684 = vmatprep.subr.bf16.mxu0 0
        %4685 = vmatpush1.bf16.msra.mxu0 0
        %4686 = vmatprep.subr.bf16.mxu0 0
        %4687 = vmatpush1.bf16.msra.mxu0 0
        %4688 = vmatprep.subr.bf16.mxu0 0
        %4689 = vmatpush1.bf16.msra.mxu0 0
        %4690 = vmatprep.subr.bf16.mxu0 0
        %4691 = vmatpush1.bf16.msra.mxu0 0
        %4692 = vmatprep.subr.bf16.mxu0 0
        %4693 = vmatpush1.bf16.msra.mxu0 0
        %4694 = vmatprep.subr.bf16.mxu0 0
        %4695 = vmatpush1.bf16.msra.mxu0 0
        %4696 = vmatprep.subr.bf16.mxu0 0
        %4697 = vmatpush1.bf16.msra.mxu0 0
        %4698 = vmatprep.mubr.bf16.mxu0 0
        %4699 = vmatmul.mubr.bf16.gmra.mrb[0].mxu0 %v4326
        %v4700 = vpop.f32.mrb[0].mxu0
        %v4701 = vadd.f32 %v4346, %v4700
        %v4702 = vpop.f32.mrb[0].mxu0
        %v4703 = vadd.f32 %v4350, %v4702
        %v4704 = vpop.f32.mrb[0].mxu0
        %v4705 = vadd.f32 %v4346, %v4704
        %v4706 = vpop.f32.mrb[0].mxu0
        %v4707 = vadd.f32 %v4350, %v4706
        %4708 = vmatprep.mubr.bf16.mxu0 0
        %4709 = vmatmul.mubr.bf16.gmra.mrb[0].mxu0 %v4327
        %v4710 = vpop.f32.mrb[0].mxu0
        %v4711 = vadd.f32 %v4346, %v4710
        %v4712 = vpop.f32.mrb[0].mxu0
        %v4713 = vadd.f32 %v4350, %v4712
        %v4714 = vpop.f32.mrb[0].mxu0
        %v4715 = vadd.f32 %v4346, %v4714
        %v4716 = vpop.f32.mrb[0].mxu0
        %v4717 = vadd.f32 %v4350, %v4716
        %4718 = vmatprep.mubr.bf16.mxu0 0
        %4719 = vmatmul.mubr.bf16.gmra.mrb[0].mxu0 %v4328
        %v4720 = vpop.f32.mrb[0].mxu0
        %v4721 = vadd.f32 %v4346, %v4720
        %v4722 = vpop.f32.mrb[0].mxu0
        %v4723 = vadd.f32 %v4350, %v4722
        %v4724 = vpop.f32.mrb[0].mxu0
        %v4725 = vadd.f32 %v4346, %v4724
        %v4726 = vpop.f32.mrb[0].mxu0
        %v4727 = vadd.f32 %v4350, %v4726
        %4728 = vmatprep.mubr.bf16.mxu0 0
        %4729 = vmatmul.mubr.bf16.gmra.mrb[0].mxu0 %v4329
        %v4730 = vpop.f32.mrb[0].mxu0
        %v4731 = vadd.f32 %v4346, %v4730
        %v4732 = vpop.f32.mrb[0].mxu0
        %v4733 = vadd.f32 %v4350, %v4732
        %v4734 = vpop.f32.mrb[0].mxu0
        %v4735 = vadd.f32 %v4346, %v4734
        %v4736 = vpop.f32.mrb[0].mxu0
        %v4737 = vadd.f32 %v4350, %v4736
        %4738 = vmatprep.mubr.bf16.mxu0 0
        %4739 = vmatmul.mubr.bf16.gmra.mrb[0].mxu0 %v4330
        %v4740 = vpop.f32.mrb[0].mxu0
        %v4741 = vadd.f32 %v4346, %v4740
        %v4742 = vpop.f32.mrb[0].mxu0
        %v4743 = vadd.f32 %v4350, %v4742
        %v4744 = vpop.f32.mrb[0].mxu0
        %v4745 = vadd.f32 %v4346, %v4744
        %v4746 = vpop.f32.mrb[0].mxu0
        %v4747 = vadd.f32 %v4350, %v4746
        %4748 = vmatprep.mubr.bf16.mxu0 0
        %4749 = vmatmul.mubr.bf16.gmra.mrb[0].mxu0 %v4331
        %v4750 = vpop.f32.mrb[0].mxu0
        %v4751 = vadd.f32 %v4346, %v4750
        %v4752 = vpop.f32.mrb[0].mxu0
        %v4753 = vadd.f32 %v4350, %v4752
        %v4754 = vpop.f32.mrb[0].mxu0
        %v4755 = vadd.f32 %v4346, %v4754
        %v4756 = vpop.f32.mrb[0].mxu0
        %v4757 = vadd.f32 %v4350, %v4756
        %4758 = vmatprep.mubr.bf16.mxu0 0
        %4759 = vmatmul.mubr.bf16.gmra.mrb[0].mxu0 %v4332
        %v4760 = vpop.f32.mrb[0].mxu0
        %v4761 = vadd.f32 %v4346, %v4760
        %v4762 = vpop.f32.mrb[0].mxu0
        %v4763 = vadd.f32 %v4350, %v4762
        %v4764 = vpop.f32.mrb[0].mxu0
        %v4765 = vadd.f32 %v4346, %v4764
        %v4766 = vpop.f32.mrb[0].mxu0
        %v4767 = vadd.f32 %v4350, %v4766
        %4768 = vmatprep.mubr.bf16.mxu0 0
        %4769 = vmatmul.mubr.bf16.gmra.mrb[0].mxu0 %v4333
        %v4770 = vpop.f32.mrb[0].mxu0
        %v4771 = vadd.f32 %v4346, %v4770
        %v4772 = vpop.f32.mrb[0].mxu0
        %v4773 = vadd.f32 %v4350, %v4772
        %v4774 = vpop.f32.mrb[0].mxu0
        %v4775 = vadd.f32 %v4346, %v4774
        %v4776 = vpop.f32.mrb[0].mxu0
        %v4777 = vadd.f32 %v4350, %v4776
        %4778 = vmatprep.mubr.bf16.mxu0 0
        %4779 = vmatmul.mubr.bf16.gmra.mrb[0].mxu0 %v4334
        %v4780 = vpop.f32.mrb[0].mxu0
        %v4781 = vadd.f32 %v4346, %v4780
        %v4782 = vpop.f32.mrb[0].mxu0
        %v4783 = vadd.f32 %v4350, %v4782
        %v4784 = vpop.f32.mrb[0].mxu0
        %v4785 = vadd.f32 %v4346, %v4784
        %v4786 = vpop.f32.mrb[0].mxu0
        %v4787 = vadd.f32 %v4350, %v4786
        %4788 = vmatprep.mubr.bf16.mxu0 0
        %4789 = vmatmul.mubr.bf16.gmra.mrb[0].mxu0 %v4335
        %v4790 = vpop.f32.mrb[0].mxu0
        %v4791 = vadd.f32 %v4346, %v4790
        %v4792 = vpop.f32.mrb[0].mxu0
        %v4793 = vadd.f32 %v4350, %v4792
        %v4794 = vpop.f32.mrb[0].mxu0
        %v4795 = vadd.f32 %v4346, %v4794
        %v4796 = vpop.f32.mrb[0].mxu0
        %v4797 = vadd.f32 %v4350, %v4796
        %4798 = vmatprep.mubr.bf16.mxu0 0
        %4799 = vmatmul.mubr.bf16.gmra.mrb[0].mxu0 %v4336
        %v4800 = vpop.f32.mrb[0].mxu0
        %v4801 = vadd.f32 %v4346, %v4800
        %v4802 = vpop.f32.mrb[0].mxu0
        %v4803 = vadd.f32 %v4350, %v4802
        %v4804 = vpop.f32.mrb[0].mxu0
        %v4805 = vadd.f32 %v4346, %v4804
        %v4806 = vpop.f32.mrb[0].mxu0
        %v4807 = vadd.f32 %v4350, %v4806
        %4808 = vmatprep.mubr.bf16.mxu0 0
        %4809 = vmatmul.mubr.bf16.gmra.mrb[0].mxu0 %v4337
        %v4810 = vpop.f32.mrb[0].mxu0
        %v4811 = vadd.f32 %v4346, %v4810
        %v4812 = vpop.f32.mrb[0].mxu0
        %v4813 = vadd.f32 %v4350, %v4812
        %v4814 = vpop.f32.mrb[0].mxu0
        %v4815 = vadd.f32 %v4346, %v4814
        %v4816 = vpop.f32.mrb[0].mxu0
        %v4817 = vadd.f32 %v4350, %v4816
        %4818 = vmatprep.mubr.bf16.mxu0 0
        %4819 = vmatmul.mubr.bf16.gmra.mrb[0].mxu0 %v4338
        %v4820 = vpop.f32.mrb[0].mxu0
        %v4821 = vadd.f32 %v4346, %v4820
        %v4822 = vpop.f32.mrb[0].mxu0
        %v4823 = vadd.f32 %v4350, %v4822
        %v4824 = vpop.f32.mrb[0].mxu0
        %v4825 = vadd.f32 %v4346, %v4824
        %v4826 = vpop.f32.mrb[0].mxu0
        %v4827 = vadd.f32 %v4350, %v4826
        %4828 = vmatprep.mubr.bf16.mxu0 0
        %4829 = vmatmul.mubr.bf16.gmra.mrb[0].mxu0 %v4339
        %v4830 = vpop.f32.mrb[0].mxu0
        %v4831 = vadd.f32 %v4346, %v4830
        %v4832 = vpop.f32.mrb[0].mxu0
        %v4833 = vadd.f32 %v4350, %v4832
        %v4834 = vpop.f32.mrb[0].mxu0
        %v4835 = vadd.f32 %v4346, %v4834
        %v4836 = vpop.f32.mrb[0].mxu0
        %v4837 = vadd.f32 %v4350, %v4836
        %4838 = vmatprep.mubr.bf16.mxu0 0
        %4839 = vmatmul.mubr.bf16.gmra.mrb[0].mxu0 %v4340
        %v4840 = vpop.f32.mrb[0].mxu0
        %v4841 = vadd.f32 %v4346, %v4840
        %v4842 = vpop.f32.mrb[0].mxu0
        %v4843 = vadd.f32 %v4350, %v4842
        %v4844 = vpop.f32.mrb[0].mxu0
        %v4845 = vadd.f32 %v4346, %v4844
        %v4846 = vpop.f32.mrb[0].mxu0
        %v4847 = vadd.f32 %v4350, %v4846
        %4848 = vmatprep.mubr.bf16.mxu0 0
        %4849 = vmatmul.mubr.bf16.gmra.mrb[0].mxu0 %v4341
        %v4850 = vpop.f32.mrb[0].mxu0
        %v4851 = vadd.f32 %v4346, %v4850
        %v4852 = vpop.f32.mrb[0].mxu0
        %v4853 = vadd.f32 %v4350, %v4852
        %v4854 = vpop.f32.mrb[0].mxu0
        %v4855 = vadd.f32 %v4346, %v4854
        %v4856 = vpop.f32.mrb[0].mxu0
        %v4857 = vadd.f32 %v4350, %v4856
        %4858 = vdwg.mxu0
        %4859 = vmatprep.subr.bf16.mxu0 %v4557
        %4860 = vmatpush1.bf16.msra.mxu0 %v4556
        %4861 = vmatprep.subr.bf16.mxu0 %v4564
        %4862 = vmatpush1.bf16.msra.mxu0 %v4563
        %4863 = vmatprep.subr.bf16.mxu0 %v4571
        %4864 = vmatpush1.bf16.msra.mxu0 %v4570
        %4865 = vmatprep.subr.bf16.mxu0 %v4578
        %4866 = vmatpush1.bf16.msra.mxu0 %v4577
        %4867 = vmatprep.subr.bf16.mxu0 %v4585
        %4868 = vmatpush1.bf16.msra.mxu0 %v4584
        %4869 = vmatprep.subr.bf16.mxu0 %v4592
        %4870 = vmatpush1.bf16.msra.mxu0 %v4591
        %4871 = vmatprep.subr.bf16.mxu0 %v4599
        %4872 = vmatpush1.bf16.msra.mxu0 %v4598
        %4873 = vmatprep.subr.bf16.mxu0 %v4606
        %4874 = vmatpush1.bf16.msra.mxu0 %v4605
        %4875 = vmatprep.subr.bf16.mxu0 0
        %4876 = vmatpush1.bf16.msra.mxu0 0
        %4877 = vmatprep.subr.bf16.mxu0 0
        %4878 = vmatpush1.bf16.msra.mxu0 0
        %4879 = vmatprep.subr.bf16.mxu0 0
        %4880 = vmatpush1.bf16.msra.mxu0 0
        %4881 = vmatprep.subr.bf16.mxu0 0
        %4882 = vmatpush1.bf16.msra.mxu0 0
        %4883 = vmatprep.subr.bf16.mxu0 0
        %4884 = vmatpush1.bf16.msra.mxu0 0
        %4885 = vmatprep.subr.bf16.mxu0 0
        %4886 = vmatpush1.bf16.msra.mxu0 0
        %4887 = vmatprep.subr.bf16.mxu0 0
        %4888 = vmatpush1.bf16.msra.mxu0 0
        %4889 = vmatprep.subr.bf16.mxu0 0
        %4890 = vmatpush1.bf16.msra.mxu0 0
        %4891 = vmatprep.mubr.bf16.mxu0 0
        %4892 = vmatmul.mubr.bf16.gmra.mrb[0].mxu0 %v4326
        %v4893 = vpop.f32.mrb[0].mxu0
        %v4894 = vadd.f32 %v4354, %v4893
        %v4895 = vpop.f32.mrb[0].mxu0
        %v4896 = vadd.f32 %v4358, %v4895
        %v4897 = vpop.f32.mrb[0].mxu0
        %v4898 = vadd.f32 %v4354, %v4897
        %v4899 = vpop.f32.mrb[0].mxu0
        %v4900 = vadd.f32 %v4358, %v4899
        %4901 = vmatprep.mubr.bf16.mxu0 0
        %4902 = vmatmul.mubr.bf16.gmra.mrb[0].mxu0 %v4327
        %v4903 = vpop.f32.mrb[0].mxu0
        %v4904 = vadd.f32 %v4354, %v4903
        %v4905 = vpop.f32.mrb[0].mxu0
        %v4906 = vadd.f32 %v4358, %v4905
        %v4907 = vpop.f32.mrb[0].mxu0
        %v4908 = vadd.f32 %v4354, %v4907
        %v4909 = vpop.f32.mrb[0].mxu0
        %v4910 = vadd.f32 %v4358, %v4909
        %4911 = vmatprep.mubr.bf16.mxu0 0
        %4912 = vmatmul.mubr.bf16.gmra.mrb[0].mxu0 %v4328
        %v4913 = vpop.f32.mrb[0].mxu0
        %v4914 = vadd.f32 %v4354, %v4913
        %v4915 = vpop.f32.mrb[0].mxu0
        %v4916 = vadd.f32 %v4358, %v4915
        %v4917 = vpop.f32.mrb[0].mxu0
        %v4918 = vadd.f32 %v4354, %v4917
        %v4919 = vpop.f32.mrb[0].mxu0
        %v4920 = vadd.f32 %v4358, %v4919
        %4921 = vmatprep.mubr.bf16.mxu0 0
        %4922 = vmatmul.mubr.bf16.gmra.mrb[0].mxu0 %v4329
        %v4923 = vpop.f32.mrb[0].mxu0
        %v4924 = vadd.f32 %v4354, %v4923
        %v4925 = vpop.f32.mrb[0].mxu0
        %v4926 = vadd.f32 %v4358, %v4925
        %v4927 = vpop.f32.mrb[0].mxu0
        %v4928 = vadd.f32 %v4354, %v4927
        %v4929 = vpop.f32.mrb[0].mxu0
        %v4930 = vadd.f32 %v4358, %v4929
        %4931 = vmatprep.mubr.bf16.mxu0 0
        %4932 = vmatmul.mubr.bf16.gmra.mrb[0].mxu0 %v4330
        %v4933 = vpop.f32.mrb[0].mxu0
        %v4934 = vadd.f32 %v4354, %v4933
        %v4935 = vpop.f32.mrb[0].mxu0
        %v4936 = vadd.f32 %v4358, %v4935
        %v4937 = vpop.f32.mrb[0].mxu0
        %v4938 = vadd.f32 %v4354, %v4937
        %v4939 = vpop.f32.mrb[0].mxu0
        %v4940 = vadd.f32 %v4358, %v4939
        %4941 = vmatprep.mubr.bf16.mxu0 0
        %4942 = vmatmul.mubr.bf16.gmra.mrb[0].mxu0 %v4331
        %v4943 = vpop.f32.mrb[0].mxu0
        %v4944 = vadd.f32 %v4354, %v4943
        %v4945 = vpop.f32.mrb[0].mxu0
        %v4946 = vadd.f32 %v4358, %v4945
        %v4947 = vpop.f32.mrb[0].mxu0
        %v4948 = vadd.f32 %v4354, %v4947
        %v4949 = vpop.f32.mrb[0].mxu0
        %v4950 = vadd.f32 %v4358, %v4949
        %4951 = vmatprep.mubr.bf16.mxu0 0
        %4952 = vmatmul.mubr.bf16.gmra.mrb[0].mxu0 %v4332
        %v4953 = vpop.f32.mrb[0].mxu0
        %v4954 = vadd.f32 %v4354, %v4953
        %v4955 = vpop.f32.mrb[0].mxu0
        %v4956 = vadd.f32 %v4358, %v4955
        %v4957 = vpop.f32.mrb[0].mxu0
        %v4958 = vadd.f32 %v4354, %v4957
        %v4959 = vpop.f32.mrb[0].mxu0
        %v4960 = vadd.f32 %v4358, %v4959
        %4961 = vmatprep.mubr.bf16.mxu0 0
        %4962 = vmatmul.mubr.bf16.gmra.mrb[0].mxu0 %v4333
        %v4963 = vpop.f32.mrb[0].mxu0
        %v4964 = vadd.f32 %v4354, %v4963
        %v4965 = vpop.f32.mrb[0].mxu0
        %v4966 = vadd.f32 %v4358, %v4965
        %v4967 = vpop.f32.mrb[0].mxu0
        %v4968 = vadd.f32 %v4354, %v4967
        %v4969 = vpop.f32.mrb[0].mxu0
        %v4970 = vadd.f32 %v4358, %v4969
        %4971 = vmatprep.mubr.bf16.mxu0 0
        %4972 = vmatmul.mubr.bf16.gmra.mrb[0].mxu0 %v4334
        %v4973 = vpop.f32.mrb[0].mxu0
        %v4974 = vadd.f32 %v4354, %v4973
        %v4975 = vpop.f32.mrb[0].mxu0
        %v4976 = vadd.f32 %v4358, %v4975
        %v4977 = vpop.f32.mrb[0].mxu0
        %v4978 = vadd.f32 %v4354, %v4977
        %v4979 = vpop.f32.mrb[0].mxu0
        %v4980 = vadd.f32 %v4358, %v4979
        %4981 = vmatprep.mubr.bf16.mxu0 0
        %4982 = vmatmul.mubr.bf16.gmra.mrb[0].mxu0 %v4335
        %v4983 = vpop.f32.mrb[0].mxu0
        %v4984 = vadd.f32 %v4354, %v4983
        %v4985 = vpop.f32.mrb[0].mxu0
        %v4986 = vadd.f32 %v4358, %v4985
        %v4987 = vpop.f32.mrb[0].mxu0
        %v4988 = vadd.f32 %v4354, %v4987
        %v4989 = vpop.f32.mrb[0].mxu0
        %v4990 = vadd.f32 %v4358, %v4989
        %4991 = vmatprep.mubr.bf16.mxu0 0
        %4992 = vmatmul.mubr.bf16.gmra.mrb[0].mxu0 %v4336
        %v4993 = vpop.f32.mrb[0].mxu0
        %v4994 = vadd.f32 %v4354, %v4993
        %v4995 = vpop.f32.mrb[0].mxu0
        %v4996 = vadd.f32 %v4358, %v4995
        %v4997 = vpop.f32.mrb[0].mxu0
        %v4998 = vadd.f32 %v4354, %v4997
        %v4999 = vpop.f32.mrb[0].mxu0
        %v5000 = vadd.f32 %v4358, %v4999
        %5001 = vmatprep.mubr.bf16.mxu0 0
        %5002 = vmatmul.mubr.bf16.gmra.mrb[0].mxu0 %v4337
        %v5003 = vpop.f32.mrb[0].mxu0
        %v5004 = vadd.f32 %v4354, %v5003
        %v5005 = vpop.f32.mrb[0].mxu0
        %v5006 = vadd.f32 %v4358, %v5005
        %v5007 = vpop.f32.mrb[0].mxu0
        %v5008 = vadd.f32 %v4354, %v5007
        %v5009 = vpop.f32.mrb[0].mxu0
        %v5010 = vadd.f32 %v4358, %v5009
        %5011 = vmatprep.mubr.bf16.mxu0 0
        %5012 = vmatmul.mubr.bf16.gmra.mrb[0].mxu0 %v4338
        %v5013 = vpop.f32.mrb[0].mxu0
        %v5014 = vadd.f32 %v4354, %v5013
        %v5015 = vpop.f32.mrb[0].mxu0
        %v5016 = vadd.f32 %v4358, %v5015
        %v5017 = vpop.f32.mrb[0].mxu0
        %v5018 = vadd.f32 %v4354, %v5017
        %v5019 = vpop.f32.mrb[0].mxu0
        %v5020 = vadd.f32 %v4358, %v5019
        %5021 = vmatprep.mubr.bf16.mxu0 0
        %5022 = vmatmul.mubr.bf16.gmra.mrb[0].mxu0 %v4339
        %v5023 = vpop.f32.mrb[0].mxu0
        %v5024 = vadd.f32 %v4354, %v5023
        %v5025 = vpop.f32.mrb[0].mxu0
        %v5026 = vadd.f32 %v4358, %v5025
        %v5027 = vpop.f32.mrb[0].mxu0
        %v5028 = vadd.f32 %v4354, %v5027
        %v5029 = vpop.f32.mrb[0].mxu0
        %v5030 = vadd.f32 %v4358, %v5029
        %5031 = vmatprep.mubr.bf16.mxu0 0
        %5032 = vmatmul.mubr.bf16.gmra.mrb[0].mxu0 %v4340
        %v5033 = vpop.f32.mrb[0].mxu0
        %v5034 = vadd.f32 %v4354, %v5033
        %v5035 = vpop.f32.mrb[0].mxu0
        %v5036 = vadd.f32 %v4358, %v5035
        %v5037 = vpop.f32.mrb[0].mxu0
        %v5038 = vadd.f32 %v4354, %v5037
        %v5039 = vpop.f32.mrb[0].mxu0
        %v5040 = vadd.f32 %v4358, %v5039
        %5041 = vmatprep.mubr.bf16.mxu0 0
        %5042 = vmatmul.mubr.bf16.gmra.mrb[0].mxu0 %v4341
        %v5043 = vpop.f32.mrb[0].mxu0
        %v5044 = vadd.f32 %v4354, %v5043
        %v5045 = vpop.f32.mrb[0].mxu0
        %v5046 = vadd.f32 %v4358, %v5045
        %v5047 = vpop.f32.mrb[0].mxu0
        %v5048 = vadd.f32 %v4354, %v5047
        %v5049 = vpop.f32.mrb[0].mxu0
        %v5050 = vadd.f32 %v4358, %v5049
        %5051 = vdwg.mxu0
        %5052 = vmatprep.subr.bf16.mxu0 %v4559
        %5053 = vmatpush1.bf16.msra.mxu0 %v4558
        %5054 = vmatprep.subr.bf16.mxu0 %v4566
        %5055 = vmatpush1.bf16.msra.mxu0 %v4565
        %5056 = vmatprep.subr.bf16.mxu0 %v4573
        %5057 = vmatpush1.bf16.msra.mxu0 %v4572
        %5058 = vmatprep.subr.bf16.mxu0 %v4580
        %5059 = vmatpush1.bf16.msra.mxu0 %v4579
        %5060 = vmatprep.subr.bf16.mxu0 %v4587
        %5061 = vmatpush1.bf16.msra.mxu0 %v4586
        %5062 = vmatprep.subr.bf16.mxu0 %v4594
        %5063 = vmatpush1.bf16.msra.mxu0 %v4593
        %5064 = vmatprep.subr.bf16.mxu0 %v4601
        %5065 = vmatpush1.bf16.msra.mxu0 %v4600
        %5066 = vmatprep.subr.bf16.mxu0 %v4608
        %5067 = vmatpush1.bf16.msra.mxu0 %v4607
        %5068 = vmatprep.subr.bf16.mxu0 0
        %5069 = vmatpush1.bf16.msra.mxu0 0
        %5070 = vmatprep.subr.bf16.mxu0 0
        %5071 = vmatpush1.bf16.msra.mxu0 0
        %5072 = vmatprep.subr.bf16.mxu0 0
        %5073 = vmatpush1.bf16.msra.mxu0 0
        %5074 = vmatprep.subr.bf16.mxu0 0
        %5075 = vmatpush1.bf16.msra.mxu0 0
        %5076 = vmatprep.subr.bf16.mxu0 0
        %5077 = vmatpush1.bf16.msra.mxu0 0
        %5078 = vmatprep.subr.bf16.mxu0 0
        %5079 = vmatpush1.bf16.msra.mxu0 0
        %5080 = vmatprep.subr.bf16.mxu0 0
        %5081 = vmatpush1.bf16.msra.mxu0 0
        %5082 = vmatprep.subr.bf16.mxu0 0
        %5083 = vmatpush1.bf16.msra.mxu0 0
        %5084 = vmatprep.mubr.bf16.mxu0 0
        %5085 = vmatmul.mubr.bf16.gmra.mrb[0].mxu0 %v4326
        %v5086 = vpop.f32.mrb[0].mxu0
        %v5087 = vadd.f32 %v4362, %v5086
        %v5088 = vpop.f32.mrb[0].mxu0
        %v5089 = vadd.f32 %v4366, %v5088
        %v5090 = vpop.f32.mrb[0].mxu0
        %v5091 = vadd.f32 %v4362, %v5090
        %v5092 = vpop.f32.mrb[0].mxu0
        %v5093 = vadd.f32 %v4366, %v5092
        %5094 = vmatprep.mubr.bf16.mxu0 0
        %5095 = vmatmul.mubr.bf16.gmra.mrb[0].mxu0 %v4327
        %v5096 = vpop.f32.mrb[0].mxu0
        %v5097 = vadd.f32 %v4362, %v5096
        %v5098 = vpop.f32.mrb[0].mxu0
        %v5099 = vadd.f32 %v4366, %v5098
        %v5100 = vpop.f32.mrb[0].mxu0
        %v5101 = vadd.f32 %v4362, %v5100
        %v5102 = vpop.f32.mrb[0].mxu0
        %v5103 = vadd.f32 %v4366, %v5102
        %5104 = vmatprep.mubr.bf16.mxu0 0
        %5105 = vmatmul.mubr.bf16.gmra.mrb[0].mxu0 %v4328
        %v5106 = vpop.f32.mrb[0].mxu0
        %v5107 = vadd.f32 %v4362, %v5106
        %v5108 = vpop.f32.mrb[0].mxu0
        %v5109 = vadd.f32 %v4366, %v5108
        %v5110 = vpop.f32.mrb[0].mxu0
        %v5111 = vadd.f32 %v4362, %v5110
        %v5112 = vpop.f32.mrb[0].mxu0
        %v5113 = vadd.f32 %v4366, %v5112
        %5114 = vmatprep.mubr.bf16.mxu0 0
        %5115 = vmatmul.mubr.bf16.gmra.mrb[0].mxu0 %v4329
        %v5116 = vpop.f32.mrb[0].mxu0
        %v5117 = vadd.f32 %v4362, %v5116
        %v5118 = vpop.f32.mrb[0].mxu0
        %v5119 = vadd.f32 %v4366, %v5118
        %v5120 = vpop.f32.mrb[0].mxu0
        %v5121 = vadd.f32 %v4362, %v5120
        %v5122 = vpop.f32.mrb[0].mxu0
        %v5123 = vadd.f32 %v4366, %v5122
        %5124 = vmatprep.mubr.bf16.mxu0 0
        %5125 = vmatmul.mubr.bf16.gmra.mrb[0].mxu0 %v4330
        %v5126 = vpop.f32.mrb[0].mxu0
        %v5127 = vadd.f32 %v4362, %v5126
        %v5128 = vpop.f32.mrb[0].mxu0
        %v5129 = vadd.f32 %v4366, %v5128
        %v5130 = vpop.f32.mrb[0].mxu0
        %v5131 = vadd.f32 %v4362, %v5130
        %v5132 = vpop.f32.mrb[0].mxu0
        %v5133 = vadd.f32 %v4366, %v5132
        %5134 = vmatprep.mubr.bf16.mxu0 0
        %5135 = vmatmul.mubr.bf16.gmra.mrb[0].mxu0 %v4331
        %v5136 = vpop.f32.mrb[0].mxu0
        %v5137 = vadd.f32 %v4362, %v5136
        %v5138 = vpop.f32.mrb[0].mxu0
        %v5139 = vadd.f32 %v4366, %v5138
        %v5140 = vpop.f32.mrb[0].mxu0
        %v5141 = vadd.f32 %v4362, %v5140
        %v5142 = vpop.f32.mrb[0].mxu0
        %v5143 = vadd.f32 %v4366, %v5142
        %5144 = vmatprep.mubr.bf16.mxu0 0
        %5145 = vmatmul.mubr.bf16.gmra.mrb[0].mxu0 %v4332
        %v5146 = vpop.f32.mrb[0].mxu0
        %v5147 = vadd.f32 %v4362, %v5146
        %v5148 = vpop.f32.mrb[0].mxu0
        %v5149 = vadd.f32 %v4366, %v5148
        %v5150 = vpop.f32.mrb[0].mxu0
        %v5151 = vadd.f32 %v4362, %v5150
        %v5152 = vpop.f32.mrb[0].mxu0
        %v5153 = vadd.f32 %v4366, %v5152
        %5154 = vmatprep.mubr.bf16.mxu0 0
        %5155 = vmatmul.mubr.bf16.gmra.mrb[0].mxu0 %v4333
        %v5156 = vpop.f32.mrb[0].mxu0
        %v5157 = vadd.f32 %v4362, %v5156
        %v5158 = vpop.f32.mrb[0].mxu0
        %v5159 = vadd.f32 %v4366, %v5158
        %v5160 = vpop.f32.mrb[0].mxu0
        %v5161 = vadd.f32 %v4362, %v5160
        %v5162 = vpop.f32.mrb[0].mxu0
        %v5163 = vadd.f32 %v4366, %v5162
        %5164 = vmatprep.mubr.bf16.mxu0 0
        %5165 = vmatmul.mubr.bf16.gmra.mrb[0].mxu0 %v4334
        %v5166 = vpop.f32.mrb[0].mxu0
        %v5167 = vadd.f32 %v4362, %v5166
        %v5168 = vpop.f32.mrb[0].mxu0
        %v5169 = vadd.f32 %v4366, %v5168
        %v5170 = vpop.f32.mrb[0].mxu0
        %v5171 = vadd.f32 %v4362, %v5170
        %v5172 = vpop.f32.mrb[0].mxu0
        %v5173 = vadd.f32 %v4366, %v5172
        %5174 = vmatprep.mubr.bf16.mxu0 0
        %5175 = vmatmul.mubr.bf16.gmra.mrb[0].mxu0 %v4335
        %v5176 = vpop.f32.mrb[0].mxu0
        %v5177 = vadd.f32 %v4362, %v5176
        %v5178 = vpop.f32.mrb[0].mxu0
        %v5179 = vadd.f32 %v4366, %v5178
        %v5180 = vpop.f32.mrb[0].mxu0
        %v5181 = vadd.f32 %v4362, %v5180
        %v5182 = vpop.f32.mrb[0].mxu0
        %v5183 = vadd.f32 %v4366, %v5182
        %5184 = vmatprep.mubr.bf16.mxu0 0
        %5185 = vmatmul.mubr.bf16.gmra.mrb[0].mxu0 %v4336
        %v5186 = vpop.f32.mrb[0].mxu0
        %v5187 = vadd.f32 %v4362, %v5186
        %v5188 = vpop.f32.mrb[0].mxu0
        %v5189 = vadd.f32 %v4366, %v5188
        %v5190 = vpop.f32.mrb[0].mxu0
        %v5191 = vadd.f32 %v4362, %v5190
        %v5192 = vpop.f32.mrb[0].mxu0
        %v5193 = vadd.f32 %v4366, %v5192
        %5194 = vmatprep.mubr.bf16.mxu0 0
        %5195 = vmatmul.mubr.bf16.gmra.mrb[0].mxu0 %v4337
        %v5196 = vpop.f32.mrb[0].mxu0
        %v5197 = vadd.f32 %v4362, %v5196
        %v5198 = vpop.f32.mrb[0].mxu0
        %v5199 = vadd.f32 %v4366, %v5198
        %v5200 = vpop.f32.mrb[0].mxu0
        %v5201 = vadd.f32 %v4362, %v5200
        %v5202 = vpop.f32.mrb[0].mxu0
        %v5203 = vadd.f32 %v4366, %v5202
        %5204 = vmatprep.mubr.bf16.mxu0 0
        %5205 = vmatmul.mubr.bf16.gmra.mrb[0].mxu0 %v4338
        %v5206 = vpop.f32.mrb[0].mxu0
        %v5207 = vadd.f32 %v4362, %v5206
        %v5208 = vpop.f32.mrb[0].mxu0
        %v5209 = vadd.f32 %v4366, %v5208
        %v5210 = vpop.f32.mrb[0].mxu0
        %v5211 = vadd.f32 %v4362, %v5210
        %v5212 = vpop.f32.mrb[0].mxu0
        %v5213 = vadd.f32 %v4366, %v5212
        %5214 = vmatprep.mubr.bf16.mxu0 0
        %5215 = vmatmul.mubr.bf16.gmra.mrb[0].mxu0 %v4339
        %v5216 = vpop.f32.mrb[0].mxu0
        %v5217 = vadd.f32 %v4362, %v5216
        %v5218 = vpop.f32.mrb[0].mxu0
        %v5219 = vadd.f32 %v4366, %v5218
        %v5220 = vpop.f32.mrb[0].mxu0
        %v5221 = vadd.f32 %v4362, %v5220
        %v5222 = vpop.f32.mrb[0].mxu0
        %v5223 = vadd.f32 %v4366, %v5222
        %5224 = vmatprep.mubr.bf16.mxu0 0
        %5225 = vmatmul.mubr.bf16.gmra.mrb[0].mxu0 %v4340
        %v5226 = vpop.f32.mrb[0].mxu0
        %v5227 = vadd.f32 %v4362, %v5226
        %v5228 = vpop.f32.mrb[0].mxu0
        %v5229 = vadd.f32 %v4366, %v5228
        %v5230 = vpop.f32.mrb[0].mxu0
        %v5231 = vadd.f32 %v4362, %v5230
        %v5232 = vpop.f32.mrb[0].mxu0
        %v5233 = vadd.f32 %v4366, %v5232
        %5234 = vmatprep.mubr.bf16.mxu0 0
        %5235 = vmatmul.mubr.bf16.gmra.mrb[0].mxu0 %v4341
        %v5236 = vpop.f32.mrb[0].mxu0
        %v5237 = vadd.f32 %v4362, %v5236
        %v5238 = vpop.f32.mrb[0].mxu0
        %v5239 = vadd.f32 %v4366, %v5238
        %v5240 = vpop.f32.mrb[0].mxu0
        %v5241 = vadd.f32 %v4362, %v5240
        %v5242 = vpop.f32.mrb[0].mxu0
        %v5243 = vadd.f32 %v4366, %v5242
        %5244 = vdwg.mxu0
        %5245 = vmatprep.subr.bf16.mxu0 0
        %5246 = vmatpush1.bf16.msra.mxu0 %v4560
        %5247 = vmatprep.subr.bf16.mxu0 0
        %5248 = vmatpush1.bf16.msra.mxu0 %v4567
        %5249 = vmatprep.subr.bf16.mxu0 0
        %5250 = vmatpush1.bf16.msra.mxu0 %v4574
        %5251 = vmatprep.subr.bf16.mxu0 0
        %5252 = vmatpush1.bf16.msra.mxu0 %v4581
        %5253 = vmatprep.subr.bf16.mxu0 0
        %5254 = vmatpush1.bf16.msra.mxu0 %v4588
        %5255 = vmatprep.subr.bf16.mxu0 0
        %5256 = vmatpush1.bf16.msra.mxu0 %v4595
        %5257 = vmatprep.subr.bf16.mxu0 0
        %5258 = vmatpush1.bf16.msra.mxu0 %v4602
        %5259 = vmatprep.subr.bf16.mxu0 0
        %5260 = vmatpush1.bf16.msra.mxu0 %v4609
        %5261 = vmatprep.subr.bf16.mxu0 0
        %5262 = vmatpush1.bf16.msra.mxu0 0
        %5263 = vmatprep.subr.bf16.mxu0 0
        %5264 = vmatpush1.bf16.msra.mxu0 0
        %5265 = vmatprep.subr.bf16.mxu0 0
        %5266 = vmatpush1.bf16.msra.mxu0 0
        %5267 = vmatprep.subr.bf16.mxu0 0
        %5268 = vmatpush1.bf16.msra.mxu0 0
        %5269 = vmatprep.subr.bf16.mxu0 0
        %5270 = vmatpush1.bf16.msra.mxu0 0
        %5271 = vmatprep.subr.bf16.mxu0 0
        %5272 = vmatpush1.bf16.msra.mxu0 0
        %5273 = vmatprep.subr.bf16.mxu0 0
        %5274 = vmatpush1.bf16.msra.mxu0 0
        %5275 = vmatprep.subr.bf16.mxu0 0
        %5276 = vmatpush1.bf16.msra.mxu0 0
        %5277 = vmatprep.mubr.bf16.mxu0 0
        %5278 = vmatmul.mubr.bf16.gmra.mrb[0].mxu0 %v4326
        %v5279 = vpop.f32.mrb[0].mxu0
        %v5280 = vadd.f32 %v4370, %v5279
        %v5281 = vpop.f32.mrb[0].mxu0
        %v5282 = vpop.f32.mrb[0].mxu0
        %v5283 = vadd.f32 %v4370, %v5282
        %v5284 = vpop.f32.mrb[0].mxu0
        %5285 = vmatprep.mubr.bf16.mxu0 0
        %5286 = vmatmul.mubr.bf16.gmra.mrb[0].mxu0 %v4327
        %v5287 = vpop.f32.mrb[0].mxu0
        %v5288 = vadd.f32 %v4370, %v5287
        %v5289 = vpop.f32.mrb[0].mxu0
        %v5290 = vpop.f32.mrb[0].mxu0
        %v5291 = vadd.f32 %v4370, %v5290
        %v5292 = vpop.f32.mrb[0].mxu0
        %5293 = vmatprep.mubr.bf16.mxu0 0
        %5294 = vmatmul.mubr.bf16.gmra.mrb[0].mxu0 %v4328
        %v5295 = vpop.f32.mrb[0].mxu0
        %v5296 = vadd.f32 %v4370, %v5295
        %v5297 = vpop.f32.mrb[0].mxu0
        %v5298 = vpop.f32.mrb[0].mxu0
        %v5299 = vadd.f32 %v4370, %v5298
        %v5300 = vpop.f32.mrb[0].mxu0
        %5301 = vmatprep.mubr.bf16.mxu0 0
        %5302 = vmatmul.mubr.bf16.gmra.mrb[0].mxu0 %v4329
        %v5303 = vpop.f32.mrb[0].mxu0
        %v5304 = vadd.f32 %v4370, %v5303
        %v5305 = vpop.f32.mrb[0].mxu0
        %v5306 = vpop.f32.mrb[0].mxu0
        %v5307 = vadd.f32 %v4370, %v5306
        %v5308 = vpop.f32.mrb[0].mxu0
        %5309 = vmatprep.mubr.bf16.mxu0 0
        %5310 = vmatmul.mubr.bf16.gmra.mrb[0].mxu0 %v4330
        %v5311 = vpop.f32.mrb[0].mxu0
        %v5312 = vadd.f32 %v4370, %v5311
        %v5313 = vpop.f32.mrb[0].mxu0
        %v5314 = vpop.f32.mrb[0].mxu0
        %v5315 = vadd.f32 %v4370, %v5314
        %v5316 = vpop.f32.mrb[0].mxu0
        %5317 = vmatprep.mubr.bf16.mxu0 0
        %5318 = vmatmul.mubr.bf16.gmra.mrb[0].mxu0 %v4331
        %v5319 = vpop.f32.mrb[0].mxu0
        %v5320 = vadd.f32 %v4370, %v5319
        %v5321 = vpop.f32.mrb[0].mxu0
        %v5322 = vpop.f32.mrb[0].mxu0
        %v5323 = vadd.f32 %v4370, %v5322
        %v5324 = vpop.f32.mrb[0].mxu0
        %5325 = vmatprep.mubr.bf16.mxu0 0
        %5326 = vmatmul.mubr.bf16.gmra.mrb[0].mxu0 %v4332
        %v5327 = vpop.f32.mrb[0].mxu0
        %v5328 = vadd.f32 %v4370, %v5327
        %v5329 = vpop.f32.mrb[0].mxu0
        %v5330 = vpop.f32.mrb[0].mxu0
        %v5331 = vadd.f32 %v4370, %v5330
        %v5332 = vpop.f32.mrb[0].mxu0
        %5333 = vmatprep.mubr.bf16.mxu0 0
        %5334 = vmatmul.mubr.bf16.gmra.mrb[0].mxu0 %v4333
        %v5335 = vpop.f32.mrb[0].mxu0
        %v5336 = vadd.f32 %v4370, %v5335
        %v5337 = vpop.f32.mrb[0].mxu0
        %v5338 = vpop.f32.mrb[0].mxu0
        %v5339 = vadd.f32 %v4370, %v5338
        %v5340 = vpop.f32.mrb[0].mxu0
        %5341 = vmatprep.mubr.bf16.mxu0 0
        %5342 = vmatmul.mubr.bf16.gmra.mrb[0].mxu0 %v4334
        %v5343 = vpop.f32.mrb[0].mxu0
        %v5344 = vadd.f32 %v4370, %v5343
        %v5345 = vpop.f32.mrb[0].mxu0
        %v5346 = vpop.f32.mrb[0].mxu0
        %v5347 = vadd.f32 %v4370, %v5346
        %v5348 = vpop.f32.mrb[0].mxu0
        %5349 = vmatprep.mubr.bf16.mxu0 0
        %5350 = vmatmul.mubr.bf16.gmra.mrb[0].mxu0 %v4335
        %v5351 = vpop.f32.mrb[0].mxu0
        %v5352 = vadd.f32 %v4370, %v5351
        %v5353 = vpop.f32.mrb[0].mxu0
        %v5354 = vpop.f32.mrb[0].mxu0
        %v5355 = vadd.f32 %v4370, %v5354
        %v5356 = vpop.f32.mrb[0].mxu0
        %5357 = vmatprep.mubr.bf16.mxu0 0
        %5358 = vmatmul.mubr.bf16.gmra.mrb[0].mxu0 %v4336
        %v5359 = vpop.f32.mrb[0].mxu0
        %v5360 = vadd.f32 %v4370, %v5359
        %v5361 = vpop.f32.mrb[0].mxu0
        %v5362 = vpop.f32.mrb[0].mxu0
        %v5363 = vadd.f32 %v4370, %v5362
        %v5364 = vpop.f32.mrb[0].mxu0
        %5365 = vmatprep.mubr.bf16.mxu0 0
        %5366 = vmatmul.mubr.bf16.gmra.mrb[0].mxu0 %v4337
        %v5367 = vpop.f32.mrb[0].mxu0
        %v5368 = vadd.f32 %v4370, %v5367
        %v5369 = vpop.f32.mrb[0].mxu0
        %v5370 = vpop.f32.mrb[0].mxu0
        %v5371 = vadd.f32 %v4370, %v5370
        %v5372 = vpop.f32.mrb[0].mxu0
        %5373 = vmatprep.mubr.bf16.mxu0 0
        %5374 = vmatmul.mubr.bf16.gmra.mrb[0].mxu0 %v4338
        %v5375 = vpop.f32.mrb[0].mxu0
        %v5376 = vadd.f32 %v4370, %v5375
        %v5377 = vpop.f32.mrb[0].mxu0
        %v5378 = vpop.f32.mrb[0].mxu0
        %v5379 = vadd.f32 %v4370, %v5378
        %v5380 = vpop.f32.mrb[0].mxu0
        %5381 = vmatprep.mubr.bf16.mxu0 0
        %5382 = vmatmul.mubr.bf16.gmra.mrb[0].mxu0 %v4339
        %v5383 = vpop.f32.mrb[0].mxu0
        %v5384 = vadd.f32 %v4370, %v5383
        %v5385 = vpop.f32.mrb[0].mxu0
        %v5386 = vpop.f32.mrb[0].mxu0
        %v5387 = vadd.f32 %v4370, %v5386
        %v5388 = vpop.f32.mrb[0].mxu0
        %5389 = vmatprep.mubr.bf16.mxu0 0
        %5390 = vmatmul.mubr.bf16.gmra.mrb[0].mxu0 %v4340
        %v5391 = vpop.f32.mrb[0].mxu0
        %v5392 = vadd.f32 %v4370, %v5391
        %v5393 = vpop.f32.mrb[0].mxu0
        %v5394 = vpop.f32.mrb[0].mxu0
        %v5395 = vadd.f32 %v4370, %v5394
        %v5396 = vpop.f32.mrb[0].mxu0
        %5397 = vmatprep.mubr.bf16.mxu0 0
        %5398 = vmatmul.mubr.bf16.gmra.mrb[0].mxu0 %v4341
        %v5399 = vpop.f32.mrb[0].mxu0
        %v5400 = vadd.f32 %v4370, %v5399
        %v5401 = vpop.f32.mrb[0].mxu0
        %v5402 = vpop.f32.mrb[0].mxu0
        %v5403 = vadd.f32 %v4370, %v5402
        %v5404 = vpop.f32.mrb[0].mxu0
        %5405 = vdwg.mxu0
        %v5406 = vtanh.pop %v4701
        %v5407 = vtanh.pop %v4703
        %v5408 = vtanh.pop %v4894
        %v5409 = vtanh.pop %v4896
        %v5410 = vtanh.pop %v5087
        %v5411 = vtanh.pop %v5089
        %v5412 = vtanh.pop %v5280
        %v5413 = vtanh.pop %v4705
        %v5414 = vtanh.pop %v4707
        %v5415 = vtanh.pop %v4898
        %v5416 = vtanh.pop %v4900
        %v5417 = vtanh.pop %v5091
        %v5418 = vtanh.pop %v5093
        %v5419 = vtanh.pop %v5283
        %v5420 = vtanh.pop %v4711
        %v5421 = vtanh.pop %v4713
        %v5422 = vtanh.pop %v4904
        %v5423 = vtanh.pop %v4906
        %v5424 = vtanh.pop %v5097
        %v5425 = vtanh.pop %v5099
        %v5426 = vtanh.pop %v5288
        %v5427 = vtanh.pop %v4715
        %v5428 = vtanh.pop %v4717
        %v5429 = vtanh.pop %v4908
        %v5430 = vtanh.pop %v4910
        %v5431 = vtanh.pop %v5101
        %v5432 = vtanh.pop %v5103
        %v5433 = vtanh.pop %v5291
        %v5434 = vtanh.pop %v4721
        %v5435 = vtanh.pop %v4723
        %v5436 = vtanh.pop %v4914
        %v5437 = vtanh.pop %v4916
        %v5438 = vtanh.pop %v5107
        %v5439 = vtanh.pop %v5109
        %v5440 = vtanh.pop %v5296
        %v5441 = vtanh.pop %v4725
        %v5442 = vtanh.pop %v4727
        %v5443 = vtanh.pop %v4918
        %v5444 = vtanh.pop %v4920
        %v5445 = vtanh.pop %v5111
        %v5446 = vtanh.pop %v5113
        %v5447 = vtanh.pop %v5299
        %v5448 = vtanh.pop %v4731
        %v5449 = vtanh.pop %v4733
        %v5450 = vtanh.pop %v4924
        %v5451 = vtanh.pop %v4926
        %v5452 = vtanh.pop %v5117
        %v5453 = vtanh.pop %v5119
        %v5454 = vtanh.pop %v5304
        %v5455 = vtanh.pop %v4735
        %v5456 = vtanh.pop %v4737
        %v5457 = vtanh.pop %v4928
        %v5458 = vtanh.pop %v4930
        %v5459 = vtanh.pop %v5121
        %v5460 = vtanh.pop %v5123
        %v5461 = vtanh.pop %v5307
        %v5462 = vtanh.pop %v4741
        %v5463 = vtanh.pop %v4743
        %v5464 = vtanh.pop %v4934
        %v5465 = vtanh.pop %v4936
        %v5466 = vtanh.pop %v5127
        %v5467 = vtanh.pop %v5129
        %v5468 = vtanh.pop %v5312
        %v5469 = vtanh.pop %v4745
        %v5470 = vtanh.pop %v4747
        %v5471 = vtanh.pop %v4938
        %v5472 = vtanh.pop %v4940
        %v5473 = vtanh.pop %v5131
        %v5474 = vtanh.pop %v5133
        %v5475 = vtanh.pop %v5315
        %v5476 = vtanh.pop %v4751
        %v5477 = vtanh.pop %v4753
        %v5478 = vtanh.pop %v4944
        %v5479 = vtanh.pop %v4946
        %v5480 = vtanh.pop %v5137
        %v5481 = vtanh.pop %v5139
        %v5482 = vtanh.pop %v5320
        %v5483 = vtanh.pop %v4755
        %v5484 = vtanh.pop %v4757
        %v5485 = vtanh.pop %v4948
        %v5486 = vtanh.pop %v4950
        %v5487 = vtanh.pop %v5141
        %v5488 = vtanh.pop %v5143
        %v5489 = vtanh.pop %v5323
        %v5490 = vtanh.pop %v4761
        %v5491 = vtanh.pop %v4763
        %v5492 = vtanh.pop %v4954
        %v5493 = vtanh.pop %v4956
        %v5494 = vtanh.pop %v5147
        %v5495 = vtanh.pop %v5149
        %v5496 = vtanh.pop %v5328
        %v5497 = vtanh.pop %v4765
        %v5498 = vtanh.pop %v4767
        %v5499 = vtanh.pop %v4958
        %v5500 = vtanh.pop %v4960
        %v5501 = vtanh.pop %v5151
        %v5502 = vtanh.pop %v5153
        %v5503 = vtanh.pop %v5331
        %v5504 = vtanh.pop %v4771
        %v5505 = vtanh.pop %v4773
        %v5506 = vtanh.pop %v4964
        %v5507 = vtanh.pop %v4966
        %v5508 = vtanh.pop %v5157
        %v5509 = vtanh.pop %v5159
        %v5510 = vtanh.pop %v5336
        %v5511 = vtanh.pop %v4775
        %v5512 = vtanh.pop %v4777
        %v5513 = vtanh.pop %v4968
        %v5514 = vtanh.pop %v4970
        %v5515 = vtanh.pop %v5161
        %v5516 = vtanh.pop %v5163
        %v5517 = vtanh.pop %v5339
        %v5518 = vtanh.pop %v4781
        %v5519 = vtanh.pop %v4783
        %v5520 = vtanh.pop %v4974
        %v5521 = vtanh.pop %v4976
        %v5522 = vtanh.pop %v5167
        %v5523 = vtanh.pop %v5169
        %v5524 = vtanh.pop %v5344
        %v5525 = vtanh.pop %v4785
        %v5526 = vtanh.pop %v4787
        %v5527 = vtanh.pop %v4978
        %v5528 = vtanh.pop %v4980
        %v5529 = vtanh.pop %v5171
        %v5530 = vtanh.pop %v5173
        %v5531 = vtanh.pop %v5347
        %v5532 = vtanh.pop %v4791
        %v5533 = vtanh.pop %v4793
        %v5534 = vtanh.pop %v4984
        %v5535 = vtanh.pop %v4986
        %v5536 = vtanh.pop %v5177
        %v5537 = vtanh.pop %v5179
        %v5538 = vtanh.pop %v5352
        %v5539 = vtanh.pop %v4795
        %v5540 = vtanh.pop %v4797
        %v5541 = vtanh.pop %v4988
        %v5542 = vtanh.pop %v4990
        %v5543 = vtanh.pop %v5181
        %v5544 = vtanh.pop %v5183
        %v5545 = vtanh.pop %v5355
        %v5546 = vtanh.pop %v4801
        %v5547 = vtanh.pop %v4803
        %v5548 = vtanh.pop %v4994
        %v5549 = vtanh.pop %v4996
        %v5550 = vtanh.pop %v5187
        %v5551 = vtanh.pop %v5189
        %v5552 = vtanh.pop %v5360
        %v5553 = vtanh.pop %v4805
        %v5554 = vtanh.pop %v4807
        %v5555 = vtanh.pop %v4998
        %v5556 = vtanh.pop %v5000
        %v5557 = vtanh.pop %v5191
        %v5558 = vtanh.pop %v5193
        %v5559 = vtanh.pop %v5363
        %v5560 = vtanh.pop %v4811
        %v5561 = vtanh.pop %v4813
        %v5562 = vtanh.pop %v5004
        %v5563 = vtanh.pop %v5006
        %v5564 = vtanh.pop %v5197
        %v5565 = vtanh.pop %v5199
        %v5566 = vtanh.pop %v5368
        %v5567 = vtanh.pop %v4815
        %v5568 = vtanh.pop %v4817
        %v5569 = vtanh.pop %v5008
        %v5570 = vtanh.pop %v5010
        %v5571 = vtanh.pop %v5201
        %v5572 = vtanh.pop %v5203
        %v5573 = vtanh.pop %v5371
        %v5574 = vtanh.pop %v4821
        %v5575 = vtanh.pop %v4823
        %v5576 = vtanh.pop %v5014
        %v5577 = vtanh.pop %v5016
        %v5578 = vtanh.pop %v5207
        %v5579 = vtanh.pop %v5209
        %v5580 = vtanh.pop %v5376
        %v5581 = vtanh.pop %v4825
        %v5582 = vtanh.pop %v4827
        %v5583 = vtanh.pop %v5018
        %v5584 = vtanh.pop %v5020
        %v5585 = vtanh.pop %v5211
        %v5586 = vtanh.pop %v5213
        %v5587 = vtanh.pop %v5379
        %v5588 = vtanh.pop %v4831
        %v5589 = vtanh.pop %v4833
        %v5590 = vtanh.pop %v5024
        %v5591 = vtanh.pop %v5026
        %v5592 = vtanh.pop %v5217
        %v5593 = vtanh.pop %v5219
        %v5594 = vtanh.pop %v5384
        %v5595 = vtanh.pop %v4835
        %v5596 = vtanh.pop %v4837
        %v5597 = vtanh.pop %v5028
        %v5598 = vtanh.pop %v5030
        %v5599 = vtanh.pop %v5221
        %v5600 = vtanh.pop %v5223
        %v5601 = vtanh.pop %v5387
        %v5602 = vtanh.pop %v4841
        %v5603 = vtanh.pop %v4843
        %v5604 = vtanh.pop %v5034
        %v5605 = vtanh.pop %v5036
        %v5606 = vtanh.pop %v5227
        %v5607 = vtanh.pop %v5229
        %v5608 = vtanh.pop %v5392
        %v5609 = vtanh.pop %v4845
        %v5610 = vtanh.pop %v4847
        %v5611 = vtanh.pop %v5038
        %v5612 = vtanh.pop %v5040
        %v5613 = vtanh.pop %v5231
        %v5614 = vtanh.pop %v5233
        %v5615 = vtanh.pop %v5395
        %v5616 = vtanh.pop %v4851
        %v5617 = vtanh.pop %v4853
        %v5618 = vtanh.pop %v5044
        %v5619 = vtanh.pop %v5046
        %v5620 = vtanh.pop %v5237
        %v5621 = vtanh.pop %v5239
        %v5622 = vtanh.pop %v5400
        %v5623 = vtanh.pop %v4855
        %v5624 = vtanh.pop %v4857
        %v5625 = vtanh.pop %v5048
        %v5626 = vtanh.pop %v5050
        %v5627 = vtanh.pop %v5241
        %v5628 = vtanh.pop %v5243
        %v5629 = vtanh.pop %v5403
        %5630 = vst [vmem:[%s673] sm:$0xff] %v5406
        %5631 = vst [vmem:[%s673 + $0x8] sm:$0xff] %v5407
        %5632 = vst [vmem:[%s673 + $0x10] sm:$0xff] %v5408
        %5633 = vst [vmem:[%s673 + $0x18] sm:$0xff] %v5409
        %5634 = vst [vmem:[%s673 + $0x20] sm:$0xff] %v5410
        %5635 = vst [vmem:[%s673 + $0x28] sm:$0xff] %v5411
        %5636 = vst [vmem:[%s673 + $0x30] sm:$0xff] %v5412
        %5637 = vst [vmem:[%s673 + $0x38] sm:$0xff] %v5413
        %5638 = vst [vmem:[%s673 + $0x40] sm:$0xff] %v5414
        %5639 = vst [vmem:[%s673 + $0x48] sm:$0xff] %v5415
        %5640 = vst [vmem:[%s673 + $0x50] sm:$0xff] %v5416
        %5641 = vst [vmem:[%s673 + $0x58] sm:$0xff] %v5417
        %5642 = vst [vmem:[%s673 + $0x60] sm:$0xff] %v5418
        %5643 = vst [vmem:[%s673 + $0x68] sm:$0xff] %v5419
        %5644 = vst [vmem:[%s673 + $0x70] sm:$0xff] %v5420
        %5645 = vst [vmem:[%s673 + $0x78] sm:$0xff] %v5421
        %5646 = vst [vmem:[%s673 + $0x80] sm:$0xff] %v5422
        %5647 = vst [vmem:[%s673 + $0x88] sm:$0xff] %v5423
        %5648 = vst [vmem:[%s673 + $0x90] sm:$0xff] %v5424
        %5649 = vst [vmem:[%s673 + $0x98] sm:$0xff] %v5425
        %5650 = vst [vmem:[%s673 + $0xa0] sm:$0xff] %v5426
        %5651 = vst [vmem:[%s673 + $0xa8] sm:$0xff] %v5427
        %5652 = vst [vmem:[%s673 + $0xb0] sm:$0xff] %v5428
        %5653 = vst [vmem:[%s673 + $0xb8] sm:$0xff] %v5429
        %5654 = vst [vmem:[%s673 + $0xc0] sm:$0xff] %v5430
        %5655 = vst [vmem:[%s673 + $0xc8] sm:$0xff] %v5431
        %5656 = vst [vmem:[%s673 + $0xd0] sm:$0xff] %v5432
        %5657 = vst [vmem:[%s673 + $0xd8] sm:$0xff] %v5433
        %5658 = vst [vmem:[%s673 + $0xe0] sm:$0xff] %v5434
        %5659 = vst [vmem:[%s673 + $0xe8] sm:$0xff] %v5435
        %5660 = vst [vmem:[%s673 + $0xf0] sm:$0xff] %v5436
        %5661 = vst [vmem:[%s673 + $0xf8] sm:$0xff] %v5437
        %5662 = vst [vmem:[%s673 + $0x100] sm:$0xff] %v5438
        %5663 = vst [vmem:[%s673 + $0x108] sm:$0xff] %v5439
        %5664 = vst [vmem:[%s673 + $0x110] sm:$0xff] %v5440
        %5665 = vst [vmem:[%s673 + $0x118] sm:$0xff] %v5441
        %5666 = vst [vmem:[%s673 + $0x120] sm:$0xff] %v5442
        %5667 = vst [vmem:[%s673 + $0x128] sm:$0xff] %v5443
        %5668 = vst [vmem:[%s673 + $0x130] sm:$0xff] %v5444
        %5669 = vst [vmem:[%s673 + $0x138] sm:$0xff] %v5445
        %5670 = vst [vmem:[%s673 + $0x140] sm:$0xff] %v5446
        %5671 = vst [vmem:[%s673 + $0x148] sm:$0xff] %v5447
        %5672 = vst [vmem:[%s673 + $0x150] sm:$0xff] %v5448
        %5673 = vst [vmem:[%s673 + $0x158] sm:$0xff] %v5449
        %5674 = vst [vmem:[%s673 + $0x160] sm:$0xff] %v5450
        %5675 = vst [vmem:[%s673 + $0x168] sm:$0xff] %v5451
        %5676 = vst [vmem:[%s673 + $0x170] sm:$0xff] %v5452
        %5677 = vst [vmem:[%s673 + $0x178] sm:$0xff] %v5453
        %5678 = vst [vmem:[%s673 + $0x180] sm:$0xff] %v5454
        %5679 = vst [vmem:[%s673 + $0x188] sm:$0xff] %v5455
        %5680 = vst [vmem:[%s673 + $0x190] sm:$0xff] %v5456
        %5681 = vst [vmem:[%s673 + $0x198] sm:$0xff] %v5457
        %5682 = vst [vmem:[%s673 + $0x1a0] sm:$0xff] %v5458
        %5683 = vst [vmem:[%s673 + $0x1a8] sm:$0xff] %v5459
        %5684 = vst [vmem:[%s673 + $0x1b0] sm:$0xff] %v5460
        %5685 = vst [vmem:[%s673 + $0x1b8] sm:$0xff] %v5461
        %5686 = vst [vmem:[%s673 + $0x1c0] sm:$0xff] %v5462
        %5687 = vst [vmem:[%s673 + $0x1c8] sm:$0xff] %v5463
        %5688 = vst [vmem:[%s673 + $0x1d0] sm:$0xff] %v5464
        %5689 = vst [vmem:[%s673 + $0x1d8] sm:$0xff] %v5465
        %5690 = vst [vmem:[%s673 + $0x1e0] sm:$0xff] %v5466
        %5691 = vst [vmem:[%s673 + $0x1e8] sm:$0xff] %v5467
        %5692 = vst [vmem:[%s673 + $0x1f0] sm:$0xff] %v5468
        %5693 = vst [vmem:[%s673 + $0x1f8] sm:$0xff] %v5469
        %5694 = vst [vmem:[%s673 + $0x200] sm:$0xff] %v5470
        %5695 = vst [vmem:[%s673 + $0x208] sm:$0xff] %v5471
        %5696 = vst [vmem:[%s673 + $0x210] sm:$0xff] %v5472
        %5697 = vst [vmem:[%s673 + $0x218] sm:$0xff] %v5473
        %5698 = vst [vmem:[%s673 + $0x220] sm:$0xff] %v5474
        %5699 = vst [vmem:[%s673 + $0x228] sm:$0xff] %v5475
        %5700 = vst [vmem:[%s673 + $0x230] sm:$0xff] %v5476
        %5701 = vst [vmem:[%s673 + $0x238] sm:$0xff] %v5477
        %5702 = vst [vmem:[%s673 + $0x240] sm:$0xff] %v5478
        %5703 = vst [vmem:[%s673 + $0x248] sm:$0xff] %v5479
        %5704 = vst [vmem:[%s673 + $0x250] sm:$0xff] %v5480
        %5705 = vst [vmem:[%s673 + $0x258] sm:$0xff] %v5481
        %5706 = vst [vmem:[%s673 + $0x260] sm:$0xff] %v5482
        %5707 = vst [vmem:[%s673 + $0x268] sm:$0xff] %v5483
        %5708 = vst [vmem:[%s673 + $0x270] sm:$0xff] %v5484
        %5709 = vst [vmem:[%s673 + $0x278] sm:$0xff] %v5485
        %5710 = vst [vmem:[%s673 + $0x280] sm:$0xff] %v5486
        %5711 = vst [vmem:[%s673 + $0x288] sm:$0xff] %v5487
        %5712 = vst [vmem:[%s673 + $0x290] sm:$0xff] %v5488
        %5713 = vst [vmem:[%s673 + $0x298] sm:$0xff] %v5489
        %5714 = vst [vmem:[%s673 + $0x2a0] sm:$0xff] %v5490
        %5715 = vst [vmem:[%s673 + $0x2a8] sm:$0xff] %v5491
        %5716 = vst [vmem:[%s673 + $0x2b0] sm:$0xff] %v5492
        %5717 = vst [vmem:[%s673 + $0x2b8] sm:$0xff] %v5493
        %5718 = vst [vmem:[%s673 + $0x2c0] sm:$0xff] %v5494
        %5719 = vst [vmem:[%s673 + $0x2c8] sm:$0xff] %v5495
        %5720 = vst [vmem:[%s673 + $0x2d0] sm:$0xff] %v5496
        %5721 = vst [vmem:[%s673 + $0x2d8] sm:$0xff] %v5497
        %5722 = vst [vmem:[%s673 + $0x2e0] sm:$0xff] %v5498
        %5723 = vst [vmem:[%s673 + $0x2e8] sm:$0xff] %v5499
        %5724 = vst [vmem:[%s673 + $0x2f0] sm:$0xff] %v5500
        %5725 = vst [vmem:[%s673 + $0x2f8] sm:$0xff] %v5501
        %5726 = vst [vmem:[%s673 + $0x300] sm:$0xff] %v5502
        %5727 = vst [vmem:[%s673 + $0x308] sm:$0xff] %v5503
        %5728 = vst [vmem:[%s673 + $0x310] sm:$0xff] %v5504
        %5729 = vst [vmem:[%s673 + $0x318] sm:$0xff] %v5505
        %5730 = vst [vmem:[%s673 + $0x320] sm:$0xff] %v5506
        %5731 = vst [vmem:[%s673 + $0x328] sm:$0xff] %v5507
        %5732 = vst [vmem:[%s673 + $0x330] sm:$0xff] %v5508
        %5733 = vst [vmem:[%s673 + $0x338] sm:$0xff] %v5509
        %5734 = vst [vmem:[%s673 + $0x340] sm:$0xff] %v5510
        %5735 = vst [vmem:[%s673 + $0x348] sm:$0xff] %v5511
        %5736 = vst [vmem:[%s673 + $0x350] sm:$0xff] %v5512
        %5737 = vst [vmem:[%s673 + $0x358] sm:$0xff] %v5513
        %5738 = vst [vmem:[%s673 + $0x360] sm:$0xff] %v5514
        %5739 = vst [vmem:[%s673 + $0x368] sm:$0xff] %v5515
        %5740 = vst [vmem:[%s673 + $0x370] sm:$0xff] %v5516
        %5741 = vst [vmem:[%s673 + $0x378] sm:$0xff] %v5517
        %5742 = vst [vmem:[%s673 + $0x380] sm:$0xff] %v5518
        %5743 = vst [vmem:[%s673 + $0x388] sm:$0xff] %v5519
        %5744 = vst [vmem:[%s673 + $0x390] sm:$0xff] %v5520
        %5745 = vst [vmem:[%s673 + $0x398] sm:$0xff] %v5521
        %5746 = vst [vmem:[%s673 + $0x3a0] sm:$0xff] %v5522
        %5747 = vst [vmem:[%s673 + $0x3a8] sm:$0xff] %v5523
        %5748 = vst [vmem:[%s673 + $0x3b0] sm:$0xff] %v5524
        %5749 = vst [vmem:[%s673 + $0x3b8] sm:$0xff] %v5525
        %5750 = vst [vmem:[%s673 + $0x3c0] sm:$0xff] %v5526
        %5751 = vst [vmem:[%s673 + $0x3c8] sm:$0xff] %v5527
        %5752 = vst [vmem:[%s673 + $0x3d0] sm:$0xff] %v5528
        %5753 = vst [vmem:[%s673 + $0x3d8] sm:$0xff] %v5529
        %5754 = vst [vmem:[%s673 + $0x3e0] sm:$0xff] %v5530
        %5755 = vst [vmem:[%s673 + $0x3e8] sm:$0xff] %v5531
        %5756 = vst [vmem:[%s673 + $0x3f0] sm:$0xff] %v5532
        %5757 = vst [vmem:[%s673 + $0x3f8] sm:$0xff] %v5533
        %5758 = vst [vmem:[%s673 + $0x400] sm:$0xff] %v5534
        %5759 = vst [vmem:[%s673 + $0x408] sm:$0xff] %v5535
        %5760 = vst [vmem:[%s673 + $0x410] sm:$0xff] %v5536
        %5761 = vst [vmem:[%s673 + $0x418] sm:$0xff] %v5537
        %5762 = vst [vmem:[%s673 + $0x420] sm:$0xff] %v5538
        %5763 = vst [vmem:[%s673 + $0x428] sm:$0xff] %v5539
        %5764 = vst [vmem:[%s673 + $0x430] sm:$0xff] %v5540
        %5765 = vst [vmem:[%s673 + $0x438] sm:$0xff] %v5541
        %5766 = vst [vmem:[%s673 + $0x440] sm:$0xff] %v5542
        %5767 = vst [vmem:[%s673 + $0x448] sm:$0xff] %v5543
        %5768 = vst [vmem:[%s673 + $0x450] sm:$0xff] %v5544
        %5769 = vst [vmem:[%s673 + $0x458] sm:$0xff] %v5545
        %5770 = vst [vmem:[%s673 + $0x460] sm:$0xff] %v5546
        %5771 = vst [vmem:[%s673 + $0x468] sm:$0xff] %v5547
        %5772 = vst [vmem:[%s673 + $0x470] sm:$0xff] %v5548
        %5773 = vst [vmem:[%s673 + $0x478] sm:$0xff] %v5549
        %5774 = vst [vmem:[%s673 + $0x480] sm:$0xff] %v5550
        %5775 = vst [vmem:[%s673 + $0x488] sm:$0xff] %v5551
        %5776 = vst [vmem:[%s673 + $0x490] sm:$0xff] %v5552
        %5777 = vst [vmem:[%s673 + $0x498] sm:$0xff] %v5553
        %5778 = vst [vmem:[%s673 + $0x4a0] sm:$0xff] %v5554
        %5779 = vst [vmem:[%s673 + $0x4a8] sm:$0xff] %v5555
        %5780 = vst [vmem:[%s673 + $0x4b0] sm:$0xff] %v5556
        %5781 = vst [vmem:[%s673 + $0x4b8] sm:$0xff] %v5557
        %5782 = vst [vmem:[%s673 + $0x4c0] sm:$0xff] %v5558
        %5783 = vst [vmem:[%s673 + $0x4c8] sm:$0xff] %v5559
        %5784 = vst [vmem:[%s673 + $0x4d0] sm:$0xff] %v5560
        %5785 = vst [vmem:[%s673 + $0x4d8] sm:$0xff] %v5561
        %5786 = vst [vmem:[%s673 + $0x4e0] sm:$0xff] %v5562
        %5787 = vst [vmem:[%s673 + $0x4e8] sm:$0xff] %v5563
        %5788 = vst [vmem:[%s673 + $0x4f0] sm:$0xff] %v5564
        %5789 = vst [vmem:[%s673 + $0x4f8] sm:$0xff] %v5565
        %5790 = vst [vmem:[%s673 + $0x500] sm:$0xff] %v5566
        %5791 = vst [vmem:[%s673 + $0x508] sm:$0xff] %v5567
        %5792 = vst [vmem:[%s673 + $0x510] sm:$0xff] %v5568
        %5793 = vst [vmem:[%s673 + $0x518] sm:$0xff] %v5569
        %5794 = vst [vmem:[%s673 + $0x520] sm:$0xff] %v5570
        %5795 = vst [vmem:[%s673 + $0x528] sm:$0xff] %v5571
        %5796 = vst [vmem:[%s673 + $0x530] sm:$0xff] %v5572
        %5797 = vst [vmem:[%s673 + $0x538] sm:$0xff] %v5573
        %5798 = vst [vmem:[%s673 + $0x540] sm:$0xff] %v5574
        %5799 = vst [vmem:[%s673 + $0x548] sm:$0xff] %v5575
        %5800 = vst [vmem:[%s673 + $0x550] sm:$0xff] %v5576
        %5801 = vst [vmem:[%s673 + $0x558] sm:$0xff] %v5577
        %5802 = vst [vmem:[%s673 + $0x560] sm:$0xff] %v5578
        %5803 = vst [vmem:[%s673 + $0x568] sm:$0xff] %v5579
        %5804 = vst [vmem:[%s673 + $0x570] sm:$0xff] %v5580
        %5805 = vst [vmem:[%s673 + $0x578] sm:$0xff] %v5581
        %5806 = vst [vmem:[%s673 + $0x580] sm:$0xff] %v5582
        %5807 = vst [vmem:[%s673 + $0x588] sm:$0xff] %v5583
        %5808 = vst [vmem:[%s673 + $0x590] sm:$0xff] %v5584
        %5809 = vst [vmem:[%s673 + $0x598] sm:$0xff] %v5585
        %5810 = vst [vmem:[%s673 + $0x5a0] sm:$0xff] %v5586
        %5811 = vst [vmem:[%s673 + $0x5a8] sm:$0xff] %v5587
        %5812 = vst [vmem:[%s673 + $0x5b0] sm:$0xff] %v5588
        %5813 = vst [vmem:[%s673 + $0x5b8] sm:$0xff] %v5589
        %5814 = vst [vmem:[%s673 + $0x5c0] sm:$0xff] %v5590
        %5815 = vst [vmem:[%s673 + $0x5c8] sm:$0xff] %v5591
        %5816 = vst [vmem:[%s673 + $0x5d0] sm:$0xff] %v5592
        %5817 = vst [vmem:[%s673 + $0x5d8] sm:$0xff] %v5593
        %5818 = vst [vmem:[%s673 + $0x5e0] sm:$0xff] %v5594
        %5819 = vst [vmem:[%s673 + $0x5e8] sm:$0xff] %v5595
        %5820 = vst [vmem:[%s673 + $0x5f0] sm:$0xff] %v5596
        %5821 = vst [vmem:[%s673 + $0x5f8] sm:$0xff] %v5597
        %5822 = vst [vmem:[%s673 + $0x600] sm:$0xff] %v5598
        %5823 = vst [vmem:[%s673 + $0x608] sm:$0xff] %v5599
        %5824 = vst [vmem:[%s673 + $0x610] sm:$0xff] %v5600
        %5825 = vst [vmem:[%s673 + $0x618] sm:$0xff] %v5601
        %5826 = vst [vmem:[%s673 + $0x620] sm:$0xff] %v5602
        %5827 = vst [vmem:[%s673 + $0x628] sm:$0xff] %v5603
        %5828 = vst [vmem:[%s673 + $0x630] sm:$0xff] %v5604
        %5829 = vst [vmem:[%s673 + $0x638] sm:$0xff] %v5605
        %5830 = vst [vmem:[%s673 + $0x640] sm:$0xff] %v5606
        %5831 = vst [vmem:[%s673 + $0x648] sm:$0xff] %v5607
        %5832 = vst [vmem:[%s673 + $0x650] sm:$0xff] %v5608
        %5833 = vst [vmem:[%s673 + $0x658] sm:$0xff] %v5609
        %5834 = vst [vmem:[%s673 + $0x660] sm:$0xff] %v5610
        %5835 = vst [vmem:[%s673 + $0x668] sm:$0xff] %v5611
        %5836 = vst [vmem:[%s673 + $0x670] sm:$0xff] %v5612
        %5837 = vst [vmem:[%s673 + $0x678] sm:$0xff] %v5613
        %5838 = vst [vmem:[%s673 + $0x680] sm:$0xff] %v5614
        %5839 = vst [vmem:[%s673 + $0x688] sm:$0xff] %v5615
        %5840 = vst [vmem:[%s673 + $0x690] sm:$0xff] %v5616
        %5841 = vst [vmem:[%s673 + $0x698] sm:$0xff] %v5617
        %5842 = vst [vmem:[%s673 + $0x6a0] sm:$0xff] %v5618
        %5843 = vst [vmem:[%s673 + $0x6a8] sm:$0xff] %v5619
        %5844 = vst [vmem:[%s673 + $0x6b0] sm:$0xff] %v5620
        %5845 = vst [vmem:[%s673 + $0x6b8] sm:$0xff] %v5621
        %5846 = vst [vmem:[%s673 + $0x6c0] sm:$0xff] %v5622
        %5847 = vst [vmem:[%s673 + $0x6c8] sm:$0xff] %v5623
        %5848 = vst [vmem:[%s673 + $0x6d0] sm:$0xff] %v5624
        %5849 = vst [vmem:[%s673 + $0x6d8] sm:$0xff] %v5625
        %5850 = vst [vmem:[%s673 + $0x6e0] sm:$0xff] %v5626
        %5851 = vst [vmem:[%s673 + $0x6e8] sm:$0xff] %v5627
        %5852 = vst [vmem:[%s673 + $0x6f0] sm:$0xff] %v5628
        %5853 = vst [vmem:[%s673 + $0x6f8] sm:$0xff] %v5629
        %s5854 = sand.u32 %s366, 1
        %s5855 = scalar_lea.sflag [#allocation4], %s5854
        %s5856 = sand.u32 %s366, 1
        %s5857 = smul.addr %s5856, 1792
        %s5858 = scalar_lea.vmem [#allocation23], %s5857
        // Predicated region
        $region133: #{tpu_custom_call.1} parent=79 // pred_check
          %p5859 = pneg %p376
        $region134: #{tpu_custom_call.1} parent=79 // pred_check_branch
          %5861 = sbr.rel (%p5859) target = $region136
        $region135: #{tpu_custom_call.1} parent=79 // pred_region
          %s5862 = smul.u32 32, %s38
          %s5864 = ssub.s32 28672, 28672
          %5865 = vsyncadd %s5855, %s5864
          %s5866 = smul.addr %s5862, 7
          %s5867 = smul.addr %s5866, 128
          %s5868 = scalar_lea.hbm %s15, %s5867
          %s5869 = sshll.u32 %s5858, 4
          %s5870 = int_to_ptr.vmem [resolvable:$true] %s5869
          %5875 = dma.vmem_to_hbm [thread:$0]  %s5870, 28672, %s5868, %s5855, 896, 896, 56
        $region136: #{tpu_custom_call.1} parent=79 // pred_fallthru
          _
      $region80: #{tpu_custom_call.1} parent=5 // pred_fallthru
        _
      %p5876 = scmp.le.s32.totalorder 2, %s33
      // Predicated region
      $region137: #{tpu_custom_call.1} parent=5 // pred_check
        %p5877 = pneg %p5876
      $region138: #{tpu_custom_call.1} parent=5 // pred_check_branch
        %5879 = sbr.rel (%p5877) target = $region140
      $region139: #{tpu_custom_call.1} parent=5 // pred_region
        %s5880 = ssub.s32 %s33, 2
        // Predicated region
        $region141: #{tpu_custom_call.1} parent=139 // pred_check
          %p5881 = pneg %p382
        $region142: #{tpu_custom_call.1} parent=139 // pred_check_branch
          %5883 = sbr.rel (%p5881) target = $region144
        $region143: #{tpu_custom_call.1} parent=139 // pred_region
          %s5884 = sand.u32 %s367, 1
          %s5885 = scalar_lea.sflag [#allocation4], %s5884
          %s5886 = sand.u32 %s367, 1
          %s5887 = smul.addr %s5886, 1792
          %s5888 = scalar_lea.vmem [#allocation23], %s5887
          %5889 = dma.done %s5885, 28672
        $region144: #{tpu_custom_call.1} parent=139 // pred_fallthru
          _
      $region140: #{tpu_custom_call.1} parent=5 // pred_fallthru
        _
    $region6: #{tpu_custom_call.1} parent=1 // loop_footer
      %s37 = sadd.s32 1, %s33
    $region7: #{tpu_custom_call.1} parent=1 // loop_footer_branch
      %32 = sbr.rel target = $region3
    $region8: #{tpu_custom_call.1} parent=1 // loop_exit
      _
    %5890 = vsyncpa [#allocation3], 1
    %s5891 = scalar_lea.sflag [#allocation3], 1
    %5892 = vsyncpa %s5891, 1
    %5893 = vsyncpa [#allocation6], 1
    %5894 = vsyncpa [#allocation9], 1
    %5895 = vsyncpa [#allocation12], 1
    %5896 = vsyncpa [#allocation15], 1
    %5897 = vsyncpa [#allocation18], 1
    %5898 = vsyncpa [#allocation21], 1
    %5899 = vsyncpa [#allocation4], 1
    %s5900 = scalar_lea.sflag [#allocation4], 1
    %5901 = vsyncpa %s5900, 1

</llo_original>
